<compile_context>
chip_gen: v7x
topology: tpu7x:2x2x1
jax: 0.10.0
libtpu: 0.0.40
codegen_flags: <defaults>
</compile_context>

<pallas_src>
import jax
import jax.numpy as jnp
import numpy as np
from jax import lax
from jax.experimental import pallas as pl
from jax.experimental.pallas import tpu as pltpu

EMB = 32                     # emb_dim
VOCAB = (24, 24, 16)         # (diagnosis, procedure, medication) vocab sizes
FAI = 0.5
LN_EPS = 1e-5
OUT_LANES = 128              # lane-dense packed output width
BATCH_BLOCK = 8              # patients per grid step (fills 8 vreg sublanes)

assert VOCAB[2] + 1 <= OUT_LANES, "logits + ddi-loss lane must fit in OUT_LANES"

E2 = 2 * EMB                 # stacked hidden width [h_gru0 | h_gru1]
SLAB_W = 3 * E2              # 192 lanes (width of the block-diag GRU weights)


def _r8(x):                  # round row offsets up to a sublane (8) boundary
    return (x + 7) // 8 * 8


# --- packed weight-slab row layout (all starts 8-aligned) ---
ROW_WIH = 0
ROW_WHH = _r8(ROW_WIH + E2)
ROW_BIH = _r8(ROW_WHH + E2)
ROW_BHH = _r8(ROW_BIH + 1)
ROW_EMB0 = _r8(ROW_BHH + 1)
ROW_EMB1 = _r8(ROW_EMB0 + VOCAB[0])
ROW_PW1 = _r8(ROW_EMB1 + VOCAB[1])
ROW_QW = _r8(ROW_PW1 + E2)
ROW_CLSW = _r8(ROW_QW + E2)
ROW_DRUG = _r8(ROW_CLSW + E2)
ROW_DRUGT = _r8(ROW_DRUG + VOCAB[2])
ROW_DDI = _r8(ROW_DRUGT + EMB)
ROW_BIAS = _r8(ROW_DDI + VOCAB[2])
SLAB_ROWS = _r8(ROW_BIAS + 8)


# ---------------------------------------------------------------------------
# Fused per-batch-block kernel: embedding-sum -> poly gate -> keep mask ->
# dual GRU -> query -> attention -> LayerNorm -> classification -> DDI penalty.
# ---------------------------------------------------------------------------
def _fused_kernel(cnt0_ref, cnt1_ref, valid_ref, last_ref, slab_ref, out_ref):
    T, BB, V0 = cnt0_ref.shape
    V1 = cnt1_ref.shape[2]
    E, N = EMB, VOCAB[2]

    # ---- unpack the single packed weight slab (static slices; one DMA total) ----
    wih = slab_ref[ROW_WIH:ROW_WIH + E2, :]            # (2E, 6E) block-diag input proj
    whh = slab_ref[ROW_WHH:ROW_WHH + E2, :]            # (2E, 6E) block-diag hidden proj
    bih = slab_ref[ROW_BIH:ROW_BIH + 1, :]             # (1, 6E)
    bhh = slab_ref[ROW_BHH:ROW_BHH + 1, :]             # (1, 6E)
    emb0 = slab_ref[ROW_EMB0:ROW_EMB0 + V0, 0:E]       # (V0, E)
    emb1 = slab_ref[ROW_EMB1:ROW_EMB1 + V1, 0:E]       # (V1, E)
    poly_w1 = slab_ref[ROW_PW1:ROW_PW1 + E2, 0:32]     # (2E, 32)
    q_w = slab_ref[ROW_QW:ROW_QW + E2, 0:E]            # (2E, E)
    cls_wa = slab_ref[ROW_CLSW:ROW_CLSW + E, 0:N]      # (E, N) half for layernorm(q)
    cls_wb = slab_ref[ROW_CLSW + E:ROW_CLSW + E2, 0:N] # (E, N) half for med_result
    drug = slab_ref[ROW_DRUG:ROW_DRUG + N, 0:E]        # (N, E)
    drugT = slab_ref[ROW_DRUGT:ROW_DRUGT + E, 0:N]     # (E, N) pre-transposed drug memory
    ddi = slab_ref[ROW_DDI:ROW_DDI + N, 0:N]           # (N, N)
    bias = slab_ref[ROW_BIAS:ROW_BIAS + 8, :]          # (8, 6E) bias rows
    poly_b1 = bias[0:1, 0:32]
    poly_wg = bias[1:2, 0:32]                          # gate layer weight as a row
    poly_bg = bias[2:3, 0:1]
    q_b = bias[3:4, 0:E]
    ln_g = bias[4:5, 0:E]
    ln_b = bias[5:6, 0:E]
    cls_b = bias[6:7, 0:N]

    valid = valid_ref[...]          # (BB, T) 1 for real visits, 0 for padding
    last = last_ref[...]            # (BB, T) one-hot at each patient's last real visit

    # ---- per-visit embedding sums (multi-hot @ table), poly gate, hoisted GRU input proj ----
    gxs, gates = [], []
    for t in range(T):  # T is tiny & static -> unrolled. TODO(synk): lax.fori_loop for long histories.
        i1 = jnp.dot(cnt0_ref[t], emb0, preferred_element_type=jnp.float32)   # (BB, E)
        i2 = jnp.dot(cnt1_ref[t], emb1, preferred_element_type=jnp.float32)   # (BB, E)
        pr = jnp.concatenate([i1, i2], axis=-1)                               # (BB, 2E)
        ph = jnp.maximum(
            jnp.dot(pr, poly_w1, preferred_element_type=jnp.float32) + poly_b1, 0.0)
        # 1-lane gate "matmul" done on the VPU (multiply + lane reduce), no MXU push
        g = jax.nn.sigmoid(jnp.sum(ph * poly_wg, axis=-1, keepdims=True) + poly_bg)
        gates.append(g)                                                        # (BB, 1)
        gxs.append(jnp.dot(pr, wih, preferred_element_type=jnp.float32) + bih) # (BB, 6E)

    # gate value at each patient's last (current) visit
    cur = gates[0] * last[:, 0:1]
    for t in range(1, T):
        cur = cur + gates[t] * last[:, t:t + 1]                                # (BB, 1)

    # keep mask: history kept iff |gate - cur_gate| <= fai, last always kept, padding never
    keeps = []
    for t in range(T):
        near = (jnp.abs(gates[t] - cur) <= FAI).astype(jnp.float32)
        keeps.append(valid[:, t:t + 1] * jnp.maximum(last[:, t:t + 1], near))  # (BB,1) in {0,1}

    # ---- dual GRU (block-diag weights), vectorized over the batch; keep=0 freezes h ----
    h = jnp.zeros((BB, E2), jnp.float32)                # [h_gru0 | h_gru1]
    for t in range(T):
        hg = jnp.dot(h, whh, preferred_element_type=jnp.float32) + bhh         # (BB, 6E)
        gx = gxs[t]
        r = jax.nn.sigmoid(gx[:, 0:E2] + hg[:, 0:E2])
        z = jax.nn.sigmoid(gx[:, E2:2 * E2] + hg[:, E2:2 * E2])
        n = jnp.tanh(gx[:, 2 * E2:3 * E2] + r * hg[:, 2 * E2:3 * E2])
        h_new = (1.0 - z) * n + z * h
        k = keeps[t]
        h = k * h_new + (1.0 - k) * h

    # ---- query head: Linear(ReLU(o_last)) ----
    q = jnp.dot(jnp.maximum(h, 0.0), q_w, preferred_element_type=jnp.float32) + q_b   # (BB, E)

    # ---- attention over the precomputed drug memory (drugT avoids an XLU transpose) ----
    logits = jnp.dot(q, drugT, preferred_element_type=jnp.float32)                    # (BB, N)
    logits = logits - jnp.max(logits, axis=-1, keepdims=True)
    w = jnp.exp(logits)
    attn = w / jnp.sum(w, axis=-1, keepdims=True)
    med = jnp.dot(attn, drug, preferred_element_type=jnp.float32)                     # (BB, E)

    # ---- LayerNorm(q) ----
    mu = jnp.mean(q, axis=-1, keepdims=True)
    var = jnp.mean((q - mu) ** 2, axis=-1, keepdims=True)
    ln_q = (q - mu) * lax.rsqrt(var + LN_EPS) * ln_g + ln_b

    # ---- classification: Linear(ReLU(concat([ln_q, med]))) ----
    res = (jnp.dot(jnp.maximum(ln_q, 0.0), cls_wa, preferred_element_type=jnp.float32)
           + jnp.dot(jnp.maximum(med, 0.0), cls_wb, preferred_element_type=jnp.float32)
           + cls_b)                                                                    # (BB, N)

    # ---- DDI penalty: 0.0005 * sum_ij sigmoid(res)_i sigmoid(res)_j ddi[i,j] ----
    p = jax.nn.sigmoid(res)
    t1 = jnp.dot(p, ddi, preferred_element_type=jnp.float32)
    neg = 0.0005 * jnp.sum(t1 * p, axis=-1, keepdims=True)                             # (BB, 1)

    # ---- lane-dense packed output: [logits | ddi_loss | zeros] per patient row ----
    packed = jnp.concatenate([res, jnp.zeros((BB, OUT_LANES - N), jnp.float32)], axis=-1)
    lane = lax.broadcasted_iota(jnp.int32, (BB, OUT_LANES), 1)
    out_ref[...] = packed + jnp.where(lane == N, neg, 0.0)


@jax.jit
def _forward_device(slab, cnt0, cnt1, valid, last):
    T, B_pad, V0 = cnt0.shape
    V1 = cnt1.shape[2]
    nb = B_pad // BATCH_BLOCK
    return pl.pallas_call(
        _fused_kernel,
        out_shape=jax.ShapeDtypeStruct((B_pad, OUT_LANES), jnp.float32),
        grid=(nb,),
        in_specs=[
            pl.BlockSpec((T, BATCH_BLOCK, V0), lambda b: (0, b, 0)),
            pl.BlockSpec((T, BATCH_BLOCK, V1), lambda b: (0, b, 0)),
            pl.BlockSpec((BATCH_BLOCK, T), lambda b: (b, 0)),
            pl.BlockSpec((BATCH_BLOCK, T), lambda b: (b, 0)),
            # single packed weight slab: same block every grid step -> DMA'd once, VMEM-resident
            pl.BlockSpec((SLAB_ROWS, SLAB_W), lambda b: (0, 0)),
        ],
        out_specs=pl.BlockSpec((BATCH_BLOCK, OUT_LANES), lambda b: (b, 0)),
        compiler_params=pltpu.CompilerParams(
            dimension_semantics=("parallel",)),   # v7x: the two TensorCores split the batch
    )(cnt0, cnt1, valid, last, slab)


# ---------------------------------------------------------------------------
# Parameters (deterministic, synthetic) and one-time preparation
# ---------------------------------------------------------------------------
def row_normalize(adj):
    mx = adj + jnp.eye(adj.shape[0], dtype=adj.dtype)
    rowsum = mx.sum(1, keepdims=True)
    r_inv = jnp.where(rowsum > 0, 1.0 / rowsum, 0.0)
    return r_inv * mx


def init_params(key):
    N = VOCAB[2]
    keys = iter(jax.random.split(key, 48))
    nrm = lambda shape, s=0.1: (s * jax.random.normal(next(keys), shape)).astype(jnp.float32)
    p = {}
    p["emb0"] = nrm((VOCAB[0], EMB))
    p["emb1"] = nrm((VOCAB[1], EMB))
    p["emb2"] = nrm((N, EMB))                     # med_base = embeddings[2](arange(N))
    for g in ("gru0", "gru1"):                    # gate order [r, z, n], used as x @ W
        p[f"{g}_wih"] = nrm((3, EMB, EMB))
        p[f"{g}_whh"] = nrm((3, EMB, EMB))
        p[f"{g}_bih"] = nrm((3, 1, EMB))
        p[f"{g}_bhh"] = nrm((3, 1, EMB))
    p["q_w"] = nrm((2 * EMB, EMB)); p["q_b"] = nrm((1, EMB))
    p["poly_w1"] = nrm((2 * EMB, 32)); p["poly_b1"] = nrm((1, 32))
    p["poly_wg"] = nrm((32, 1)); p["poly_bg"] = nrm((1, 1))
    p["cls_w"] = nrm((2 * EMB, N)); p["cls_b"] = nrm((1, N))
    p["ln_g"] = jnp.ones((1, EMB), jnp.float32)
    p["ln_b"] = jnp.zeros((1, EMB), jnp.float32)
    for g in ("ehr", "ddi"):
        p[f"{g}_w1"] = nrm((N, EMB)); p[f"{g}_b1"] = nrm((1, EMB))
        p[f"{g}_w2"] = nrm((EMB, EMB)); p[f"{g}_b2"] = nrm((1, EMB))
    ehr_adj = (jax.random.uniform(next(keys), (N, N)) < 0.3).astype(jnp.float32)
    ehr_adj = jnp.maximum(ehr_adj, ehr_adj.T)
    ddi_adj = (jax.random.uniform(next(keys), (N, N)) < 0.2).astype(jnp.float32)
    ddi_adj = jnp.maximum(ddi_adj, ddi_adj.T)
    p["ddi_adj"] = ddi_adj
    p["ehr_adj_n"] = row_normalize(ehr_adj)
    p["ddi_adj_n"] = row_normalize(ddi_adj)
    p["inter1"] = jnp.array([[0.5]], jnp.float32)   # PyTorch leaves this uninitialized
    return p


def _build_gru_blocks(p):
    """Block-diagonal weights so both GRUs run in one matmul per step.

    Column layout of the 6E axis (per gate): [r0 r1 | z0 z1 | n0 n1], each block EMB
    wide; the stacked hidden state is [h_gru0 | h_gru1] (·, 2E).
    """
    E = EMB
    Z = jnp.zeros((E, E), jnp.float32)

    def cat_w(w0, w1):
        cols = []
        for g in range(3):
            top = jnp.concatenate([w0[g], Z], axis=1)    # rows 0:E   -> GRU0 (input i1 / h0)
            bot = jnp.concatenate([Z, w1[g]], axis=1)    # rows E:2E  -> GRU1 (input i2 / h1)
            cols.append(jnp.concatenate([top, bot], axis=0))
        return jnp.concatenate(cols, axis=1)             # (2E, 6E)

    def cat_b(b0, b1):
        return jnp.concatenate([b0[0], b1[0], b0[1], b1[1], b0[2], b1[2]], axis=1)  # (1, 6E)

    wih = cat_w(p["gru0_wih"], p["gru1_wih"])
    whh = cat_w(p["gru0_whh"], p["gru1_whh"])
    bih = cat_b(p["gru0_bih"], p["gru1_bih"])
    bhh = cat_b(p["gru0_bhh"], p["gru1_bhh"])
    return wih, whh, bih, bhh
    # TODO(synk): on v5e, repack columns as [r|z](128 lanes) + [n](64) and issue two dots
    # per recurrent step so the EUP sigmoids hide the second 128-wide MXU push.


def prepare(params):
    """One-time, patient-independent prep: GCN drug memory (plain XLA) + packing of ALL
    weights/biases/tables into one lane-dense f32 slab (a single DMA per kernel launch)."""
    E, N = EMB, VOCAB[2]

    def gcn(adj, w1, b1, w2, b2):   # node features = identity; dropout(p=0.3) -> identity (eval)
        h = jnp.maximum(adj @ w1 + b1, 0.0)
        return adj @ (h @ w2) + b2

    ehr = gcn(params["ehr_adj_n"], params["ehr_w1"], params["ehr_b1"],
              params["ehr_w2"], params["ehr_b2"])
    ddi = gcn(params["ddi_adj_n"], params["ddi_w1"], params["ddi_b1"],
              params["ddi_w2"], params["ddi_b2"])
    drug = ehr - params["inter1"][0, 0] * ddi + params["emb2"]

    wih, whh, bih, bhh = _build_gru_blocks(params)

    slab = jnp.zeros((SLAB_ROWS, SLAB_W), jnp.float32)
    slab = slab.at[ROW_WIH:ROW_WIH + E2, :].set(wih)
    slab = slab.at[ROW_WHH:ROW_WHH + E2, :].set(whh)
    slab = slab.at[ROW_BIH, :].set(bih[0])
    slab = slab.at[ROW_BHH, :].set(bhh[0])
    slab = slab.at[ROW_EMB0:ROW_EMB0 + VOCAB[0], 0:E].set(params["emb0"])
    slab = slab.at[ROW_EMB1:ROW_EMB1 + VOCAB[1], 0:E].set(params["emb1"])
    slab = slab.at[ROW_PW1:ROW_PW1 + E2, 0:32].set(params["poly_w1"])
    slab = slab.at[ROW_QW:ROW_QW + E2, 0:E].set(params["q_w"])
    slab = slab.at[ROW_CLSW:ROW_CLSW + E2, 0:N].set(params["cls_w"])
    slab = slab.at[ROW_DRUG:ROW_DRUG + N, 0:E].set(drug)
    slab = slab.at[ROW_DRUGT:ROW_DRUGT + E, 0:N].set(drug.T)
    slab = slab.at[ROW_DDI:ROW_DDI + N, 0:N].set(params["ddi_adj"])
    slab = slab.at[ROW_BIAS + 0, 0:32].set(params["poly_b1"][0])
    slab = slab.at[ROW_BIAS + 1, 0:32].set(params["poly_wg"][:, 0])
    slab = slab.at[ROW_BIAS + 2, 0:1].set(params["poly_bg"][0])
    slab = slab.at[ROW_BIAS + 3, 0:E].set(params["q_b"][0])
    slab = slab.at[ROW_BIAS + 4, 0:E].set(params["ln_g"][0])
    slab = slab.at[ROW_BIAS + 5, 0:E].set(params["ln_b"][0])
    slab = slab.at[ROW_BIAS + 6, 0:N].set(params["cls_b"][0])
    # TODO(synk): on v6e/v7x a bf16 slab (keeping f32 accumulation in every dot) would halve
    # DMA bytes; kept f32 so the identical code stays optimal on v5e (no bf16 VPU/EUP).
    return {"slab": slab}


# ---------------------------------------------------------------------------
# Host-side packing + forward wrappers
# ---------------------------------------------------------------------------
def pack_patients(patients):
    """Multi-hot code counts (so embedding gather+sum becomes one in-kernel matmul),
    per-visit valid mask, and last-visit one-hot, padded to a batch-block multiple."""
    B = len(patients)
    T = max(len(adms) for adms in patients)
    B_pad = ((max(B, 1) + BATCH_BLOCK - 1) // BATCH_BLOCK) * BATCH_BLOCK
    cnt0 = np.zeros((T, B_pad, VOCAB[0]), np.float32)
    cnt1 = np.zeros((T, B_pad, VOCAB[1]), np.float32)
    valid = np.zeros((B_pad, T), np.float32)
    last = np.zeros((B_pad, T), np.float32)
    for b, adms in enumerate(patients):
        for t, (d, pr) in enumerate(adms):
            for c in np.asarray(d).astype(np.int32):
                cnt0[t, b, c] += 1.0
            for c in np.asarray(pr).astype(np.int32):
                cnt1[t, b, c] += 1.0
            valid[b, t] = 1.0
        last[b, len(adms) - 1] = 1.0
    return (jnp.asarray(cnt0), jnp.asarray(cnt1),
            jnp.asarray(valid), jnp.asarray(last)), B


def forward_batch(derived, patients):
    """Batched serving path: one pallas_call for all patients."""
    (cnt0, cnt1, valid, last), B = pack_patients(patients)
    out = _forward_device(derived["slab"], cnt0, cnt1, valid, last)
    return out[:B, :VOCAB[2]], out[:B, VOCAB[2]]


def forward(derived, admissions):
    """Single-patient interface matching AllRecDrugModel.forward(input)."""
    res, neg = forward_batch(derived, [admissions])
    return res[0:1], neg[0]


# ---------------------------------------------------------------------------
# Pure-JAX reference mirroring the PyTorch control flow (for validation)
# ---------------------------------------------------------------------------
def reference(params, admissions):
    E = EMB
    i1 = jnp.stack([params["emb0"][d].sum(0) for d, _ in admissions])
    i2 = jnp.stack([params["emb1"][pr].sum(0) for _, pr in admissions])
    T = len(admissions)
    if T >= 2:
        pr = jnp.concatenate([i1, i2], axis=-1)
        h = jnp.maximum(pr @ params["poly_w1"] + params["poly_b1"], 0.0)
        gates = jax.nn.sigmoid(h @ params["poly_wg"] + params["poly_bg"])[:, 0]
        cur = float(gates[-1])
        preser = [i for i in range(T - 1) if abs(cur - float(gates[i])) <= FAI]
        idx = (preser + [T - 1]) if preser else [T - 1]
        i1s, i2s = i1[jnp.array(idx)], i2[jnp.array(idx)]
    else:
        i1s, i2s = i1, i2

    def gru(xs, wih, whh, bih, bhh):
        h = jnp.zeros((1, E), jnp.float32)
        for t in range(xs.shape[0]):
            x = xs[t:t + 1]
            r = jax.nn.sigmoid(x @ wih[0] + bih[0] + h @ whh[0] + bhh[0])
            z = jax.nn.sigmoid(x @ wih[1] + bih[1] + h @ whh[1] + bhh[1])
            n = jnp.tanh(x @ wih[2] + bih[2] + r * (h @ whh[2] + bhh[2]))
            h = (1.0 - z) * n + z * h
        return h

    h1 = gru(i1s, params["gru0_wih"], params["gru0_whh"], params["gru0_bih"], params["gru0_bhh"])
    h2 = gru(i2s, params["gru1_wih"], params["gru1_whh"], params["gru1_bih"], params["gru1_bhh"])
    o = jnp.concatenate([h1, h2], axis=-1)
    q = jnp.maximum(o, 0.0) @ params["q_w"] + params["q_b"]

    def gcn(adj, w1, b1, w2, b2):
        hh = jnp.maximum(adj @ w1 + b1, 0.0)
        return adj @ (hh @ w2) + b2

    ehr = gcn(params["ehr_adj_n"], params["ehr_w1"], params["ehr_b1"],
              params["ehr_w2"], params["ehr_b2"])
    ddi = gcn(params["ddi_adj_n"], params["ddi_w1"], params["ddi_b1"],
              params["ddi_w2"], params["ddi_b2"])
    drug = ehr - params["inter1"][0, 0] * ddi + params["emb2"]
    attn = jax.nn.softmax(q @ drug.T, axis=-1)
    med_result = attn @ drug
    mu = q.mean(-1, keepdims=True)
    var = ((q - mu) ** 2).mean(-1, keepdims=True)
    ln_q = (q - mu) / jnp.sqrt(var + LN_EPS) * params["ln_g"] + params["ln_b"]
    final = jnp.concatenate([ln_q, med_result], axis=-1)
    res = jnp.maximum(final, 0.0) @ params["cls_w"] + params["cls_b"]
    p = jax.nn.sigmoid(res)
    batch_neg = 0.0005 * jnp.sum((p.T * p) * params["ddi_adj"])
    return res, batch_neg


if __name__ == "__main__":
    key = jax.random.PRNGKey(0)
    pkey, dkey = jax.random.split(key)
    params = init_params(pkey)
    derived = prepare(params)        # one-time: GCN drug memory + block-diag GRU + slab packing

    ck = jax.random.split(dkey, 12)
    rc = lambda k, n, vmax: jax.random.randint(k, (n,), 0, vmax)
    # three base patients with 3, 2 and 1 admissions (each: diag codes, procedure codes)
    base_patients = [
        [(rc(ck[0], 3, VOCAB[0]), rc(ck[1], 2, VOCAB[1])),
         (rc(ck[2], 2, VOCAB[0]), rc(ck[3], 3, VOCAB[1])),
         (rc(ck[4], 4, VOCAB[0]), rc(ck[5], 2, VOCAB[1]))],
        [(rc(ck[6], 2, VOCAB[0]), rc(ck[7], 2, VOCAB[1])),
         (rc(ck[8], 3, VOCAB[0]), rc(ck[9], 1, VOCAB[1]))],
        [(rc(ck[10], 3, VOCAB[0]), rc(ck[11], 2, VOCAB[1]))],
    ]
    # 10 patients -> B_pad=16 -> grid=(2,) batch blocks of 8; the weight slab stays VMEM-resident
    patients = [base_patients[i % 3] for i in range(10)]

    res, neg = forward_batch(derived, patients)
    res = jax.block_until_ready(res)
    neg = jax.block_until_ready(neg)

    refs = [reference(params, adms) for adms in base_patients]
    for i in range(len(patients)):
        ref_res, ref_neg = refs[i % 3]
        assert jnp.allclose(res[i:i + 1], ref_res, atol=1e-2, rtol=1e-2), (i, res[i], ref_res)
        assert jnp.allclose(neg[i], ref_neg, atol=1e-3, rtol=1e-2), (i, neg[i], ref_neg)

    # single-patient interface matching the original module's forward(input)
    r1, n1 = forward(derived, base_patients[0])
    r1 = jax.block_until_ready(r1)
    assert jnp.allclose(r1, refs[0][0], atol=1e-2, rtol=1e-2), (r1, refs[0][0])

    print("KERNEL_OK")
</pallas_src>

<mosaic_0001>
module attributes {stable_mosaic.version = 11 : i64} {
  func.func @_fused_kernel(%arg0: i32, %arg1: memref<3x8x24xf32, #tpu.memory_space<vmem>>, %arg2: memref<3x8x24xf32, #tpu.memory_space<vmem>>, %arg3: memref<8x3xf32, #tpu.memory_space<vmem>>, %arg4: memref<8x3xf32, #tpu.memory_space<vmem>>, %arg5: memref<456x192xf32, #tpu.memory_space<vmem>>, %arg6: memref<8x128xf32, #tpu.memory_space<vmem>>) attributes {dimension_semantics = [#tpu.dimension_semantics<parallel>], iteration_bounds = array<i64: 2>, scalar_prefetch = 0 : i64, scratch_operands = 0 : i64, tpu.core_type = #tpu.core_type<tc>, window_params = [{transform_indices = @transform_0, window_bounds = array<i64: 3, 8, 24>}, {transform_indices = @transform_1, window_bounds = array<i64: 3, 8, 24>}, {transform_indices = @transform_2, window_bounds = array<i64: 8, 3>}, {transform_indices = @transform_3, window_bounds = array<i64: 8, 3>}, {pipeline_mode = #tpu.pipeline_mode<synchronous>, transform_indices = @transform_4, window_bounds = array<i64: 456, 192>}, {transform_indices = @transform_5, window_bounds = array<i64: 8, 128>}]} {
    %c0 = arith.constant 0 : index
    %c0_0 = arith.constant 0 : index
    %0 = vector.load %arg5[%c0, %c0_0] : memref<456x192xf32, #tpu.memory_space<vmem>>, vector<64x192xf32>
    %c64 = arith.constant 64 : index
    %c0_1 = arith.constant 0 : index
    %1 = vector.load %arg5[%c64, %c0_1] : memref<456x192xf32, #tpu.memory_space<vmem>>, vector<64x192xf32>
    %c128 = arith.constant 128 : index
    %c0_2 = arith.constant 0 : index
    %2 = vector.load %arg5[%c128, %c0_2] : memref<456x192xf32, #tpu.memory_space<vmem>>, vector<1x192xf32>
    %c136 = arith.constant 136 : index
    %c0_3 = arith.constant 0 : index
    %3 = vector.load %arg5[%c136, %c0_3] : memref<456x192xf32, #tpu.memory_space<vmem>>, vector<1x192xf32>
    %c144 = arith.constant 144 : index
    %c0_4 = arith.constant 0 : index
    %4 = vector.load %arg5[%c144, %c0_4] : memref<456x192xf32, #tpu.memory_space<vmem>>, vector<24x32xf32>
    %c168 = arith.constant 168 : index
    %c0_5 = arith.constant 0 : index
    %5 = vector.load %arg5[%c168, %c0_5] : memref<456x192xf32, #tpu.memory_space<vmem>>, vector<24x32xf32>
    %c192 = arith.constant 192 : index
    %c0_6 = arith.constant 0 : index
    %6 = vector.load %arg5[%c192, %c0_6] : memref<456x192xf32, #tpu.memory_space<vmem>>, vector<64x32xf32>
    %c256 = arith.constant 256 : index
    %c0_7 = arith.constant 0 : index
    %7 = vector.load %arg5[%c256, %c0_7] : memref<456x192xf32, #tpu.memory_space<vmem>>, vector<64x32xf32>
    %c320 = arith.constant 320 : index
    %c0_8 = arith.constant 0 : index
    %8 = vector.load %arg5[%c320, %c0_8] : memref<456x192xf32, #tpu.memory_space<vmem>>, vector<32x16xf32>
    %c352 = arith.constant 352 : index
    %c0_9 = arith.constant 0 : index
    %9 = vector.load %arg5[%c352, %c0_9] : memref<456x192xf32, #tpu.memory_space<vmem>>, vector<32x16xf32>
    %c384 = arith.constant 384 : index
    %c0_10 = arith.constant 0 : index
    %10 = vector.load %arg5[%c384, %c0_10] : memref<456x192xf32, #tpu.memory_space<vmem>>, vector<16x32xf32>
    %c400 = arith.constant 400 : index
    %c0_11 = arith.constant 0 : index
    %11 = vector.load %arg5[%c400, %c0_11] : memref<456x192xf32, #tpu.memory_space<vmem>>, vector<32x16xf32>
    %c432 = arith.constant 432 : index
    %c0_12 = arith.constant 0 : index
    %12 = vector.load %arg5[%c432, %c0_12] : memref<456x192xf32, #tpu.memory_space<vmem>>, vector<16x16xf32>
    %c448 = arith.constant 448 : index
    %c0_13 = arith.constant 0 : index
    %13 = vector.load %arg5[%c448, %c0_13] : memref<456x192xf32, #tpu.memory_space<vmem>>, vector<8x192xf32>
    %14 = vector.extract_strided_slice %13 {offsets = [0, 0], sizes = [1, 32], strides = [1, 1]} : vector<8x192xf32> to vector<1x32xf32>
    %15 = vector.extract_strided_slice %13 {offsets = [1, 0], sizes = [1, 32], strides = [1, 1]} : vector<8x192xf32> to vector<1x32xf32>
    %16 = vector.extract_strided_slice %13 {offsets = [2, 0], sizes = [1, 1], strides = [1, 1]} : vector<8x192xf32> to vector<1x1xf32>
    %17 = vector.extract_strided_slice %13 {offsets = [3, 0], sizes = [1, 32], strides = [1, 1]} : vector<8x192xf32> to vector<1x32xf32>
    %18 = vector.extract_strided_slice %13 {offsets = [4, 0], sizes = [1, 32], strides = [1, 1]} : vector<8x192xf32> to vector<1x32xf32>
    %19 = vector.extract_strided_slice %13 {offsets = [5, 0], sizes = [1, 32], strides = [1, 1]} : vector<8x192xf32> to vector<1x32xf32>
    %20 = vector.extract_strided_slice %13 {offsets = [6, 0], sizes = [1, 16], strides = [1, 1]} : vector<8x192xf32> to vector<1x16xf32>
    %c0_14 = arith.constant 0 : index
    %c0_15 = arith.constant 0 : index
    %21 = vector.load %arg3[%c0_14, %c0_15] : memref<8x3xf32, #tpu.memory_space<vmem>>, vector<8x3xf32>
    %c0_16 = arith.constant 0 : index
    %c0_17 = arith.constant 0 : index
    %22 = vector.load %arg4[%c0_16, %c0_17] : memref<8x3xf32, #tpu.memory_space<vmem>>, vector<8x3xf32>
    %c0_18 = arith.constant 0 : index
    %c0_19 = arith.constant 0 : index
    %c0_20 = arith.constant 0 : index
    %23 = vector.load %arg1[%c0_18, %c0_19, %c0_20] : memref<3x8x24xf32, #tpu.memory_space<vmem>>, vector<1x8x24xf32>
    %24 = vector.shape_cast %23 : vector<1x8x24xf32> to vector<8x24xf32>
    %cst = arith.constant dense<0.000000e+00> : vector<8x32xf32>
    %25 = tpu.matmul %24, %4, %cst {dimension_numbers = #tpu.dot_dimension_numbers<[1], [0], [0], [1], [0, 0, 1, 1], [], []>} : vector<8x24xf32>, vector<24x32xf32>, vector<8x32xf32> -> vector<8x32xf32>
    %c0_21 = arith.constant 0 : index
    %c0_22 = arith.constant 0 : index
    %c0_23 = arith.constant 0 : index
    %26 = vector.load %arg2[%c0_21, %c0_22, %c0_23] : memref<3x8x24xf32, #tpu.memory_space<vmem>>, vector<1x8x24xf32>
    %27 = vector.shape_cast %26 : vector<1x8x24xf32> to vector<8x24xf32>
    %cst_24 = arith.constant dense<0.000000e+00> : vector<8x32xf32>
    %28 = tpu.matmul %27, %5, %cst_24 {dimension_numbers = #tpu.dot_dimension_numbers<[1], [0], [0], [1], [0, 0, 1, 1], [], []>} : vector<8x24xf32>, vector<24x32xf32>, vector<8x32xf32> -> vector<8x32xf32>
    %29 = tpu.concatenate %25, %28 in 1 : vector<8x32xf32>, vector<8x32xf32> -> vector<8x64xf32>
    %cst_25 = arith.constant dense<0.000000e+00> : vector<8x32xf32>
    %30 = tpu.matmul %29, %6, %cst_25 {dimension_numbers = #tpu.dot_dimension_numbers<[1], [0], [0], [1], [0, 0, 1, 1], [], []>} : vector<8x64xf32>, vector<64x32xf32>, vector<8x32xf32> -> vector<8x32xf32>
    %31 = vector.broadcast %14 : vector<1x32xf32> to vector<8x32xf32>
    %32 = arith.addf %30, %31 : vector<8x32xf32>
    %cst_26 = arith.constant 0.000000e+00 : f32
    %33 = vector.broadcast %cst_26 : f32 to vector<8x32xf32>
    %34 = arith.maximumf %32, %33 : vector<8x32xf32>
    %35 = vector.broadcast %15 : vector<1x32xf32> to vector<8x32xf32>
    %36 = arith.mulf %34, %35 : vector<8x32xf32>
    %cst_27 = arith.constant dense<0.000000e+00> : vector<8xf32>
    %37 = vector.multi_reduction <add>, %36, %cst_27 [1] : vector<8x32xf32> to vector<8xf32>
    %38 = vector.shape_cast %37 : vector<8xf32> to vector<8x1xf32>
    %39 = vector.broadcast %16 : vector<1x1xf32> to vector<8x1xf32>
    %40 = arith.addf %38, %39 : vector<8x1xf32>
    %41 = arith.negf %40 : vector<8x1xf32>
    %42 = math.exp %41 : vector<8x1xf32>
    %cst_28 = arith.constant 1.000000e+00 : f32
    %43 = vector.broadcast %cst_28 : f32 to vector<8x1xf32>
    %44 = arith.addf %43, %42 : vector<8x1xf32>
    %45 = arith.divf %43, %44 : vector<8x1xf32>
    %cst_29 = arith.constant dense<0.000000e+00> : vector<8x192xf32>
    %46 = tpu.matmul %29, %0, %cst_29 {dimension_numbers = #tpu.dot_dimension_numbers<[1], [0], [0], [1], [0, 0, 1, 1], [], []>} : vector<8x64xf32>, vector<64x192xf32>, vector<8x192xf32> -> vector<8x192xf32>
    %47 = vector.broadcast %2 : vector<1x192xf32> to vector<8x192xf32>
    %48 = arith.addf %46, %47 : vector<8x192xf32>
    %c1 = arith.constant 1 : index
    %c0_30 = arith.constant 0 : index
    %c0_31 = arith.constant 0 : index
    %49 = vector.load %arg1[%c1, %c0_30, %c0_31] : memref<3x8x24xf32, #tpu.memory_space<vmem>>, vector<1x8x24xf32>
    %50 = vector.shape_cast %49 : vector<1x8x24xf32> to vector<8x24xf32>
    %cst_32 = arith.constant dense<0.000000e+00> : vector<8x32xf32>
    %51 = tpu.matmul %50, %4, %cst_32 {dimension_numbers = #tpu.dot_dimension_numbers<[1], [0], [0], [1], [0, 0, 1, 1], [], []>} : vector<8x24xf32>, vector<24x32xf32>, vector<8x32xf32> -> vector<8x32xf32>
    %c1_33 = arith.constant 1 : index
    %c0_34 = arith.constant 0 : index
    %c0_35 = arith.constant 0 : index
    %52 = vector.load %arg2[%c1_33, %c0_34, %c0_35] : memref<3x8x24xf32, #tpu.memory_space<vmem>>, vector<1x8x24xf32>
    %53 = vector.shape_cast %52 : vector<1x8x24xf32> to vector<8x24xf32>
    %cst_36 = arith.constant dense<0.000000e+00> : vector<8x32xf32>
    %54 = tpu.matmul %53, %5, %cst_36 {dimension_numbers = #tpu.dot_dimension_numbers<[1], [0], [0], [1], [0, 0, 1, 1], [], []>} : vector<8x24xf32>, vector<24x32xf32>, vector<8x32xf32> -> vector<8x32xf32>
    %55 = tpu.concatenate %51, %54 in 1 : vector<8x32xf32>, vector<8x32xf32> -> vector<8x64xf32>
    %cst_37 = arith.constant dense<0.000000e+00> : vector<8x32xf32>
    %56 = tpu.matmul %55, %6, %cst_37 {dimension_numbers = #tpu.dot_dimension_numbers<[1], [0], [0], [1], [0, 0, 1, 1], [], []>} : vector<8x64xf32>, vector<64x32xf32>, vector<8x32xf32> -> vector<8x32xf32>
    %57 = vector.broadcast %14 : vector<1x32xf32> to vector<8x32xf32>
    %58 = arith.addf %56, %57 : vector<8x32xf32>
    %cst_38 = arith.constant 0.000000e+00 : f32
    %59 = vector.broadcast %cst_38 : f32 to vector<8x32xf32>
    %60 = arith.maximumf %58, %59 : vector<8x32xf32>
    %61 = vector.broadcast %15 : vector<1x32xf32> to vector<8x32xf32>
    %62 = arith.mulf %60, %61 : vector<8x32xf32>
    %cst_39 = arith.constant dense<0.000000e+00> : vector<8xf32>
    %63 = vector.multi_reduction <add>, %62, %cst_39 [1] : vector<8x32xf32> to vector<8xf32>
    %64 = vector.shape_cast %63 : vector<8xf32> to vector<8x1xf32>
    %65 = vector.broadcast %16 : vector<1x1xf32> to vector<8x1xf32>
    %66 = arith.addf %64, %65 : vector<8x1xf32>
    %67 = arith.negf %66 : vector<8x1xf32>
    %68 = math.exp %67 : vector<8x1xf32>
    %cst_40 = arith.constant 1.000000e+00 : f32
    %69 = vector.broadcast %cst_40 : f32 to vector<8x1xf32>
    %70 = arith.addf %69, %68 : vector<8x1xf32>
    %71 = arith.divf %69, %70 : vector<8x1xf32>
    %cst_41 = arith.constant dense<0.000000e+00> : vector<8x192xf32>
    %72 = tpu.matmul %55, %0, %cst_41 {dimension_numbers = #tpu.dot_dimension_numbers<[1], [0], [0], [1], [0, 0, 1, 1], [], []>} : vector<8x64xf32>, vector<64x192xf32>, vector<8x192xf32> -> vector<8x192xf32>
    %73 = vector.broadcast %2 : vector<1x192xf32> to vector<8x192xf32>
    %74 = arith.addf %72, %73 : vector<8x192xf32>
    %c2 = arith.constant 2 : index
    %c0_42 = arith.constant 0 : index
    %c0_43 = arith.constant 0 : index
    %75 = vector.load %arg1[%c2, %c0_42, %c0_43] : memref<3x8x24xf32, #tpu.memory_space<vmem>>, vector<1x8x24xf32>
    %76 = vector.shape_cast %75 : vector<1x8x24xf32> to vector<8x24xf32>
    %cst_44 = arith.constant dense<0.000000e+00> : vector<8x32xf32>
    %77 = tpu.matmul %76, %4, %cst_44 {dimension_numbers = #tpu.dot_dimension_numbers<[1], [0], [0], [1], [0, 0, 1, 1], [], []>} : vector<8x24xf32>, vector<24x32xf32>, vector<8x32xf32> -> vector<8x32xf32>
    %c2_45 = arith.constant 2 : index
    %c0_46 = arith.constant 0 : index
    %c0_47 = arith.constant 0 : index
    %78 = vector.load %arg2[%c2_45, %c0_46, %c0_47] : memref<3x8x24xf32, #tpu.memory_space<vmem>>, vector<1x8x24xf32>
    %79 = vector.shape_cast %78 : vector<1x8x24xf32> to vector<8x24xf32>
    %cst_48 = arith.constant dense<0.000000e+00> : vector<8x32xf32>
    %80 = tpu.matmul %79, %5, %cst_48 {dimension_numbers = #tpu.dot_dimension_numbers<[1], [0], [0], [1], [0, 0, 1, 1], [], []>} : vector<8x24xf32>, vector<24x32xf32>, vector<8x32xf32> -> vector<8x32xf32>
    %81 = tpu.concatenate %77, %80 in 1 : vector<8x32xf32>, vector<8x32xf32> -> vector<8x64xf32>
    %cst_49 = arith.constant dense<0.000000e+00> : vector<8x32xf32>
    %82 = tpu.matmul %81, %6, %cst_49 {dimension_numbers = #tpu.dot_dimension_numbers<[1], [0], [0], [1], [0, 0, 1, 1], [], []>} : vector<8x64xf32>, vector<64x32xf32>, vector<8x32xf32> -> vector<8x32xf32>
    %83 = vector.broadcast %14 : vector<1x32xf32> to vector<8x32xf32>
    %84 = arith.addf %82, %83 : vector<8x32xf32>
    %cst_50 = arith.constant 0.000000e+00 : f32
    %85 = vector.broadcast %cst_50 : f32 to vector<8x32xf32>
    %86 = arith.maximumf %84, %85 : vector<8x32xf32>
    %87 = vector.broadcast %15 : vector<1x32xf32> to vector<8x32xf32>
    %88 = arith.mulf %86, %87 : vector<8x32xf32>
    %cst_51 = arith.constant dense<0.000000e+00> : vector<8xf32>
    %89 = vector.multi_reduction <add>, %88, %cst_51 [1] : vector<8x32xf32> to vector<8xf32>
    %90 = vector.shape_cast %89 : vector<8xf32> to vector<8x1xf32>
    %91 = vector.broadcast %16 : vector<1x1xf32> to vector<8x1xf32>
    %92 = arith.addf %90, %91 : vector<8x1xf32>
    %93 = arith.negf %92 : vector<8x1xf32>
    %94 = math.exp %93 : vector<8x1xf32>
    %cst_52 = arith.constant 1.000000e+00 : f32
    %95 = vector.broadcast %cst_52 : f32 to vector<8x1xf32>
    %96 = arith.addf %95, %94 : vector<8x1xf32>
    %97 = arith.divf %95, %96 : vector<8x1xf32>
    %cst_53 = arith.constant dense<0.000000e+00> : vector<8x192xf32>
    %98 = tpu.matmul %81, %0, %cst_53 {dimension_numbers = #tpu.dot_dimension_numbers<[1], [0], [0], [1], [0, 0, 1, 1], [], []>} : vector<8x64xf32>, vector<64x192xf32>, vector<8x192xf32> -> vector<8x192xf32>
    %99 = vector.broadcast %2 : vector<1x192xf32> to vector<8x192xf32>
    %100 = arith.addf %98, %99 : vector<8x192xf32>
    %101 = vector.extract_strided_slice %22 {offsets = [0, 0], sizes = [8, 1], strides = [1, 1]} : vector<8x3xf32> to vector<8x1xf32>
    %102 = arith.mulf %45, %101 : vector<8x1xf32>
    %103 = vector.extract_strided_slice %22 {offsets = [0, 1], sizes = [8, 1], strides = [1, 1]} : vector<8x3xf32> to vector<8x1xf32>
    %104 = arith.mulf %71, %103 : vector<8x1xf32>
    %105 = arith.addf %102, %104 : vector<8x1xf32>
    %106 = vector.extract_strided_slice %22 {offsets = [0, 2], sizes = [8, 1], strides = [1, 1]} : vector<8x3xf32> to vector<8x1xf32>
    %107 = arith.mulf %97, %106 : vector<8x1xf32>
    %108 = arith.addf %105, %107 : vector<8x1xf32>
    %109 = arith.subf %45, %108 : vector<8x1xf32>
    %110 = math.absf %109 : vector<8x1xf32>
    %cst_54 = arith.constant 5.000000e-01 : f32
    %111 = vector.broadcast %cst_54 : f32 to vector<8x1xf32>
    %112 = arith.cmpf ole, %110, %111 : vector<8x1xf32>
    %113 = arith.extui %112 : vector<8x1xi1> to vector<8x1xi32>
    %114 = arith.sitofp %113 : vector<8x1xi32> to vector<8x1xf32>
    %115 = vector.extract_strided_slice %21 {offsets = [0, 0], sizes = [8, 1], strides = [1, 1]} : vector<8x3xf32> to vector<8x1xf32>
    %116 = vector.extract_strided_slice %22 {offsets = [0, 0], sizes = [8, 1], strides = [1, 1]} : vector<8x3xf32> to vector<8x1xf32>
    %117 = arith.maximumf %116, %114 : vector<8x1xf32>
    %118 = arith.mulf %115, %117 : vector<8x1xf32>
    %119 = arith.subf %71, %108 : vector<8x1xf32>
    %120 = math.absf %119 : vector<8x1xf32>
    %cst_55 = arith.constant 5.000000e-01 : f32
    %121 = vector.broadcast %cst_55 : f32 to vector<8x1xf32>
    %122 = arith.cmpf ole, %120, %121 : vector<8x1xf32>
    %123 = arith.extui %122 : vector<8x1xi1> to vector<8x1xi32>
    %124 = arith.sitofp %123 : vector<8x1xi32> to vector<8x1xf32>
    %125 = vector.extract_strided_slice %21 {offsets = [0, 1], sizes = [8, 1], strides = [1, 1]} : vector<8x3xf32> to vector<8x1xf32>
    %126 = vector.extract_strided_slice %22 {offsets = [0, 1], sizes = [8, 1], strides = [1, 1]} : vector<8x3xf32> to vector<8x1xf32>
    %127 = arith.maximumf %126, %124 : vector<8x1xf32>
    %128 = arith.mulf %125, %127 : vector<8x1xf32>
    %129 = arith.subf %97, %108 : vector<8x1xf32>
    %130 = math.absf %129 : vector<8x1xf32>
    %cst_56 = arith.constant 5.000000e-01 : f32
    %131 = vector.broadcast %cst_56 : f32 to vector<8x1xf32>
    %132 = arith.cmpf ole, %130, %131 : vector<8x1xf32>
    %133 = arith.extui %132 : vector<8x1xi1> to vector<8x1xi32>
    %134 = arith.sitofp %133 : vector<8x1xi32> to vector<8x1xf32>
    %135 = vector.extract_strided_slice %21 {offsets = [0, 2], sizes = [8, 1], strides = [1, 1]} : vector<8x3xf32> to vector<8x1xf32>
    %136 = vector.extract_strided_slice %22 {offsets = [0, 2], sizes = [8, 1], strides = [1, 1]} : vector<8x3xf32> to vector<8x1xf32>
    %137 = arith.maximumf %136, %134 : vector<8x1xf32>
    %138 = arith.mulf %135, %137 : vector<8x1xf32>
    %cst_57 = arith.constant 0.000000e+00 : f32
    %139 = vector.broadcast %cst_57 : f32 to vector<8x64xf32>
    %cst_58 = arith.constant dense<0.000000e+00> : vector<8x192xf32>
    %140 = tpu.matmul %139, %1, %cst_58 {dimension_numbers = #tpu.dot_dimension_numbers<[1], [0], [0], [1], [0, 0, 1, 1], [], []>} : vector<8x64xf32>, vector<64x192xf32>, vector<8x192xf32> -> vector<8x192xf32>
    %141 = vector.broadcast %3 : vector<1x192xf32> to vector<8x192xf32>
    %142 = arith.addf %140, %141 : vector<8x192xf32>
    %143 = vector.extract_strided_slice %48 {offsets = [0, 0], sizes = [8, 64], strides = [1, 1]} : vector<8x192xf32> to vector<8x64xf32>
    %144 = vector.extract_strided_slice %142 {offsets = [0, 0], sizes = [8, 64], strides = [1, 1]} : vector<8x192xf32> to vector<8x64xf32>
    %145 = arith.addf %143, %144 : vector<8x64xf32>
    %146 = arith.negf %145 : vector<8x64xf32>
    %147 = math.exp %146 : vector<8x64xf32>
    %cst_59 = arith.constant 1.000000e+00 : f32
    %148 = vector.broadcast %cst_59 : f32 to vector<8x64xf32>
    %149 = arith.addf %148, %147 : vector<8x64xf32>
    %150 = arith.divf %148, %149 : vector<8x64xf32>
    %151 = vector.extract_strided_slice %48 {offsets = [0, 64], sizes = [8, 64], strides = [1, 1]} : vector<8x192xf32> to vector<8x64xf32>
    %152 = vector.extract_strided_slice %142 {offsets = [0, 64], sizes = [8, 64], strides = [1, 1]} : vector<8x192xf32> to vector<8x64xf32>
    %153 = arith.addf %151, %152 : vector<8x64xf32>
    %154 = arith.negf %153 : vector<8x64xf32>
    %155 = math.exp %154 : vector<8x64xf32>
    %cst_60 = arith.constant 1.000000e+00 : f32
    %156 = vector.broadcast %cst_60 : f32 to vector<8x64xf32>
    %157 = arith.addf %156, %155 : vector<8x64xf32>
    %158 = arith.divf %156, %157 : vector<8x64xf32>
    %159 = vector.extract_strided_slice %48 {offsets = [0, 128], sizes = [8, 64], strides = [1, 1]} : vector<8x192xf32> to vector<8x64xf32>
    %160 = vector.extract_strided_slice %142 {offsets = [0, 128], sizes = [8, 64], strides = [1, 1]} : vector<8x192xf32> to vector<8x64xf32>
    %161 = arith.mulf %150, %160 : vector<8x64xf32>
    %162 = arith.addf %159, %161 : vector<8x64xf32>
    %163 = math.tanh %162 : vector<8x64xf32>
    %cst_61 = arith.constant 1.000000e+00 : f32
    %164 = vector.broadcast %cst_61 : f32 to vector<8x64xf32>
    %165 = arith.subf %164, %158 : vector<8x64xf32>
    %166 = arith.mulf %165, %163 : vector<8x64xf32>
    %167 = arith.mulf %158, %139 : vector<8x64xf32>
    %168 = arith.addf %166, %167 : vector<8x64xf32>
    %169 = vector.broadcast %118 : vector<8x1xf32> to vector<8x64xf32>
    %170 = arith.mulf %169, %168 : vector<8x64xf32>
    %cst_62 = arith.constant 1.000000e+00 : f32
    %171 = vector.broadcast %cst_62 : f32 to vector<8x1xf32>
    %172 = arith.subf %171, %118 : vector<8x1xf32>
    %173 = vector.broadcast %172 : vector<8x1xf32> to vector<8x64xf32>
    %174 = arith.mulf %173, %139 : vector<8x64xf32>
    %175 = arith.addf %170, %174 : vector<8x64xf32>
    %cst_63 = arith.constant dense<0.000000e+00> : vector<8x192xf32>
    %176 = tpu.matmul %175, %1, %cst_63 {dimension_numbers = #tpu.dot_dimension_numbers<[1], [0], [0], [1], [0, 0, 1, 1], [], []>} : vector<8x64xf32>, vector<64x192xf32>, vector<8x192xf32> -> vector<8x192xf32>
    %177 = vector.broadcast %3 : vector<1x192xf32> to vector<8x192xf32>
    %178 = arith.addf %176, %177 : vector<8x192xf32>
    %179 = vector.extract_strided_slice %74 {offsets = [0, 0], sizes = [8, 64], strides = [1, 1]} : vector<8x192xf32> to vector<8x64xf32>
    %180 = vector.extract_strided_slice %178 {offsets = [0, 0], sizes = [8, 64], strides = [1, 1]} : vector<8x192xf32> to vector<8x64xf32>
    %181 = arith.addf %179, %180 : vector<8x64xf32>
    %182 = arith.negf %181 : vector<8x64xf32>
    %183 = math.exp %182 : vector<8x64xf32>
    %cst_64 = arith.constant 1.000000e+00 : f32
    %184 = vector.broadcast %cst_64 : f32 to vector<8x64xf32>
    %185 = arith.addf %184, %183 : vector<8x64xf32>
    %186 = arith.divf %184, %185 : vector<8x64xf32>
    %187 = vector.extract_strided_slice %74 {offsets = [0, 64], sizes = [8, 64], strides = [1, 1]} : vector<8x192xf32> to vector<8x64xf32>
    %188 = vector.extract_strided_slice %178 {offsets = [0, 64], sizes = [8, 64], strides = [1, 1]} : vector<8x192xf32> to vector<8x64xf32>
    %189 = arith.addf %187, %188 : vector<8x64xf32>
    %190 = arith.negf %189 : vector<8x64xf32>
    %191 = math.exp %190 : vector<8x64xf32>
    %cst_65 = arith.constant 1.000000e+00 : f32
    %192 = vector.broadcast %cst_65 : f32 to vector<8x64xf32>
    %193 = arith.addf %192, %191 : vector<8x64xf32>
    %194 = arith.divf %192, %193 : vector<8x64xf32>
    %195 = vector.extract_strided_slice %74 {offsets = [0, 128], sizes = [8, 64], strides = [1, 1]} : vector<8x192xf32> to vector<8x64xf32>
    %196 = vector.extract_strided_slice %178 {offsets = [0, 128], sizes = [8, 64], strides = [1, 1]} : vector<8x192xf32> to vector<8x64xf32>
    %197 = arith.mulf %186, %196 : vector<8x64xf32>
    %198 = arith.addf %195, %197 : vector<8x64xf32>
    %199 = math.tanh %198 : vector<8x64xf32>
    %cst_66 = arith.constant 1.000000e+00 : f32
    %200 = vector.broadcast %cst_66 : f32 to vector<8x64xf32>
    %201 = arith.subf %200, %194 : vector<8x64xf32>
    %202 = arith.mulf %201, %199 : vector<8x64xf32>
    %203 = arith.mulf %194, %175 : vector<8x64xf32>
    %204 = arith.addf %202, %203 : vector<8x64xf32>
    %205 = vector.broadcast %128 : vector<8x1xf32> to vector<8x64xf32>
    %206 = arith.mulf %205, %204 : vector<8x64xf32>
    %cst_67 = arith.constant 1.000000e+00 : f32
    %207 = vector.broadcast %cst_67 : f32 to vector<8x1xf32>
    %208 = arith.subf %207, %128 : vector<8x1xf32>
    %209 = vector.broadcast %208 : vector<8x1xf32> to vector<8x64xf32>
    %210 = arith.mulf %209, %175 : vector<8x64xf32>
    %211 = arith.addf %206, %210 : vector<8x64xf32>
    %cst_68 = arith.constant dense<0.000000e+00> : vector<8x192xf32>
    %212 = tpu.matmul %211, %1, %cst_68 {dimension_numbers = #tpu.dot_dimension_numbers<[1], [0], [0], [1], [0, 0, 1, 1], [], []>} : vector<8x64xf32>, vector<64x192xf32>, vector<8x192xf32> -> vector<8x192xf32>
    %213 = vector.broadcast %3 : vector<1x192xf32> to vector<8x192xf32>
    %214 = arith.addf %212, %213 : vector<8x192xf32>
    %215 = vector.extract_strided_slice %100 {offsets = [0, 0], sizes = [8, 64], strides = [1, 1]} : vector<8x192xf32> to vector<8x64xf32>
    %216 = vector.extract_strided_slice %214 {offsets = [0, 0], sizes = [8, 64], strides = [1, 1]} : vector<8x192xf32> to vector<8x64xf32>
    %217 = arith.addf %215, %216 : vector<8x64xf32>
    %218 = arith.negf %217 : vector<8x64xf32>
    %219 = math.exp %218 : vector<8x64xf32>
    %cst_69 = arith.constant 1.000000e+00 : f32
    %220 = vector.broadcast %cst_69 : f32 to vector<8x64xf32>
    %221 = arith.addf %220, %219 : vector<8x64xf32>
    %222 = arith.divf %220, %221 : vector<8x64xf32>
    %223 = vector.extract_strided_slice %100 {offsets = [0, 64], sizes = [8, 64], strides = [1, 1]} : vector<8x192xf32> to vector<8x64xf32>
    %224 = vector.extract_strided_slice %214 {offsets = [0, 64], sizes = [8, 64], strides = [1, 1]} : vector<8x192xf32> to vector<8x64xf32>
    %225 = arith.addf %223, %224 : vector<8x64xf32>
    %226 = arith.negf %225 : vector<8x64xf32>
    %227 = math.exp %226 : vector<8x64xf32>
    %cst_70 = arith.constant 1.000000e+00 : f32
    %228 = vector.broadcast %cst_70 : f32 to vector<8x64xf32>
    %229 = arith.addf %228, %227 : vector<8x64xf32>
    %230 = arith.divf %228, %229 : vector<8x64xf32>
    %231 = vector.extract_strided_slice %100 {offsets = [0, 128], sizes = [8, 64], strides = [1, 1]} : vector<8x192xf32> to vector<8x64xf32>
    %232 = vector.extract_strided_slice %214 {offsets = [0, 128], sizes = [8, 64], strides = [1, 1]} : vector<8x192xf32> to vector<8x64xf32>
    %233 = arith.mulf %222, %232 : vector<8x64xf32>
    %234 = arith.addf %231, %233 : vector<8x64xf32>
    %235 = math.tanh %234 : vector<8x64xf32>
    %cst_71 = arith.constant 1.000000e+00 : f32
    %236 = vector.broadcast %cst_71 : f32 to vector<8x64xf32>
    %237 = arith.subf %236, %230 : vector<8x64xf32>
    %238 = arith.mulf %237, %235 : vector<8x64xf32>
    %239 = arith.mulf %230, %211 : vector<8x64xf32>
    %240 = arith.addf %238, %239 : vector<8x64xf32>
    %241 = vector.broadcast %138 : vector<8x1xf32> to vector<8x64xf32>
    %242 = arith.mulf %241, %240 : vector<8x64xf32>
    %cst_72 = arith.constant 1.000000e+00 : f32
    %243 = vector.broadcast %cst_72 : f32 to vector<8x1xf32>
    %244 = arith.subf %243, %138 : vector<8x1xf32>
    %245 = vector.broadcast %244 : vector<8x1xf32> to vector<8x64xf32>
    %246 = arith.mulf %245, %211 : vector<8x64xf32>
    %247 = arith.addf %242, %246 : vector<8x64xf32>
    %cst_73 = arith.constant 0.000000e+00 : f32
    %248 = vector.broadcast %cst_73 : f32 to vector<8x64xf32>
    %249 = arith.maximumf %247, %248 : vector<8x64xf32>
    %cst_74 = arith.constant dense<0.000000e+00> : vector<8x32xf32>
    %250 = tpu.matmul %249, %7, %cst_74 {dimension_numbers = #tpu.dot_dimension_numbers<[1], [0], [0], [1], [0, 0, 1, 1], [], []>} : vector<8x64xf32>, vector<64x32xf32>, vector<8x32xf32> -> vector<8x32xf32>
    %251 = vector.broadcast %17 : vector<1x32xf32> to vector<8x32xf32>
    %252 = arith.addf %250, %251 : vector<8x32xf32>
    %cst_75 = arith.constant dense<0.000000e+00> : vector<8x16xf32>
    %253 = tpu.matmul %252, %11, %cst_75 {dimension_numbers = #tpu.dot_dimension_numbers<[1], [0], [0], [1], [0, 0, 1, 1], [], []>} : vector<8x32xf32>, vector<32x16xf32>, vector<8x16xf32> -> vector<8x16xf32>
    %cst_76 = arith.constant dense<0xFF800000> : vector<8xf32>
    %254 = vector.multi_reduction <maximumf>, %253, %cst_76 [1] : vector<8x16xf32> to vector<8xf32>
    %255 = vector.shape_cast %254 : vector<8xf32> to vector<8x1xf32>
    %256 = vector.broadcast %255 : vector<8x1xf32> to vector<8x16xf32>
    %257 = arith.subf %253, %256 : vector<8x16xf32>
    %258 = math.exp %257 : vector<8x16xf32>
    %cst_77 = arith.constant dense<0.000000e+00> : vector<8xf32>
    %259 = vector.multi_reduction <add>, %258, %cst_77 [1] : vector<8x16xf32> to vector<8xf32>
    %260 = vector.shape_cast %259 : vector<8xf32> to vector<8x1xf32>
    %261 = vector.broadcast %260 : vector<8x1xf32> to vector<8x16xf32>
    %262 = arith.divf %258, %261 : vector<8x16xf32>
    %cst_78 = arith.constant dense<0.000000e+00> : vector<8x32xf32>
    %263 = tpu.matmul %262, %10, %cst_78 {dimension_numbers = #tpu.dot_dimension_numbers<[1], [0], [0], [1], [0, 0, 1, 1], [], []>} : vector<8x16xf32>, vector<16x32xf32>, vector<8x32xf32> -> vector<8x32xf32>
    %cst_79 = arith.constant dense<0.000000e+00> : vector<8xf32>
    %264 = vector.multi_reduction <add>, %252, %cst_79 [1] : vector<8x32xf32> to vector<8xf32>
    %265 = vector.shape_cast %264 : vector<8xf32> to vector<8x1xf32>
    %cst_80 = arith.constant 3.200000e+01 : f32
    %266 = vector.broadcast %cst_80 : f32 to vector<8x1xf32>
    %267 = arith.divf %265, %266 : vector<8x1xf32>
    %268 = vector.broadcast %267 : vector<8x1xf32> to vector<8x32xf32>
    %269 = arith.subf %252, %268 : vector<8x32xf32>
    %270 = arith.mulf %269, %269 : vector<8x32xf32>
    %cst_81 = arith.constant dense<0.000000e+00> : vector<8xf32>
    %271 = vector.multi_reduction <add>, %270, %cst_81 [1] : vector<8x32xf32> to vector<8xf32>
    %272 = vector.shape_cast %271 : vector<8xf32> to vector<8x1xf32>
    %cst_82 = arith.constant 3.200000e+01 : f32
    %273 = vector.broadcast %cst_82 : f32 to vector<8x1xf32>
    %274 = arith.divf %272, %273 : vector<8x1xf32>
    %275 = vector.broadcast %267 : vector<8x1xf32> to vector<8x32xf32>
    %276 = arith.subf %252, %275 : vector<8x32xf32>
    %cst_83 = arith.constant 9.99999974E-6 : f32
    %277 = vector.broadcast %cst_83 : f32 to vector<8x1xf32>
    %278 = arith.addf %274, %277 : vector<8x1xf32>
    %279 = math.rsqrt %278 : vector<8x1xf32>
    %280 = vector.broadcast %279 : vector<8x1xf32> to vector<8x32xf32>
    %281 = arith.mulf %276, %280 : vector<8x32xf32>
    %282 = vector.broadcast %18 : vector<1x32xf32> to vector<8x32xf32>
    %283 = arith.mulf %281, %282 : vector<8x32xf32>
    %284 = vector.broadcast %19 : vector<1x32xf32> to vector<8x32xf32>
    %285 = arith.addf %283, %284 : vector<8x32xf32>
    %cst_84 = arith.constant 0.000000e+00 : f32
    %286 = vector.broadcast %cst_84 : f32 to vector<8x32xf32>
    %287 = arith.maximumf %285, %286 : vector<8x32xf32>
    %cst_85 = arith.constant dense<0.000000e+00> : vector<8x16xf32>
    %288 = tpu.matmul %287, %8, %cst_85 {dimension_numbers = #tpu.dot_dimension_numbers<[1], [0], [0], [1], [0, 0, 1, 1], [], []>} : vector<8x32xf32>, vector<32x16xf32>, vector<8x16xf32> -> vector<8x16xf32>
    %cst_86 = arith.constant 0.000000e+00 : f32
    %289 = vector.broadcast %cst_86 : f32 to vector<8x32xf32>
    %290 = arith.maximumf %263, %289 : vector<8x32xf32>
    %cst_87 = arith.constant dense<0.000000e+00> : vector<8x16xf32>
    %291 = tpu.matmul %290, %9, %cst_87 {dimension_numbers = #tpu.dot_dimension_numbers<[1], [0], [0], [1], [0, 0, 1, 1], [], []>} : vector<8x32xf32>, vector<32x16xf32>, vector<8x16xf32> -> vector<8x16xf32>
    %292 = arith.addf %288, %291 : vector<8x16xf32>
    %293 = vector.broadcast %20 : vector<1x16xf32> to vector<8x16xf32>
    %294 = arith.addf %292, %293 : vector<8x16xf32>
    %295 = arith.negf %294 : vector<8x16xf32>
    %296 = math.exp %295 : vector<8x16xf32>
    %cst_88 = arith.constant 1.000000e+00 : f32
    %297 = vector.broadcast %cst_88 : f32 to vector<8x16xf32>
    %298 = arith.addf %297, %296 : vector<8x16xf32>
    %299 = arith.divf %297, %298 : vector<8x16xf32>
    %cst_89 = arith.constant dense<0.000000e+00> : vector<8x16xf32>
    %300 = tpu.matmul %299, %12, %cst_89 {dimension_numbers = #tpu.dot_dimension_numbers<[1], [0], [0], [1], [0, 0, 1, 1], [], []>} : vector<8x16xf32>, vector<16x16xf32>, vector<8x16xf32> -> vector<8x16xf32>
    %301 = arith.mulf %300, %299 : vector<8x16xf32>
    %cst_90 = arith.constant dense<0.000000e+00> : vector<8xf32>
    %302 = vector.multi_reduction <add>, %301, %cst_90 [1] : vector<8x16xf32> to vector<8xf32>
    %303 = vector.shape_cast %302 : vector<8xf32> to vector<8x1xf32>
    %cst_91 = arith.constant 5.000000e-04 : f32
    %304 = vector.broadcast %cst_91 : f32 to vector<8x1xf32>
    %305 = arith.mulf %304, %303 : vector<8x1xf32>
    %cst_92 = arith.constant 0.000000e+00 : f32
    %306 = vector.broadcast %cst_92 : f32 to vector<8x112xf32>
    %307 = tpu.concatenate %294, %306 in 1 : vector<8x16xf32>, vector<8x112xf32> -> vector<8x128xf32>
    %308 = tpu.iota {dimensions = array<i32: 1>} : vector<8x128xi32>
    %c16_i32 = arith.constant 16 : i32
    %309 = vector.broadcast %c16_i32 : i32 to vector<8x128xi32>
    %310 = arith.cmpi eq, %308, %309 : vector<8x128xi32>
    %cst_93 = arith.constant 0.000000e+00 : f32
    %311 = vector.shape_cast %305 : vector<8x1xf32> to vector<8x1xf32>
    %312 = vector.broadcast %311 : vector<8x1xf32> to vector<8x128xf32>
    %313 = vector.broadcast %cst_93 : f32 to vector<8x128xf32>
    %314 = arith.select %310, %312, %313 : vector<8x128xi1>, vector<8x128xf32>
    %315 = arith.addf %307, %314 : vector<8x128xf32>
    %c0_94 = arith.constant 0 : index
    %c0_95 = arith.constant 0 : index
    %316 = vector.load %arg6[%c0_94, %c0_95] : memref<8x128xf32, #tpu.memory_space<vmem>>, vector<8x128xf32>
    tpu.vector_store %arg6[%c0_94, %c0_95], %315 {strides = array<i32>} : memref<8x128xf32, #tpu.memory_space<vmem>>, vector<8x128xf32>,
    return
  }
  func.func @transform_0(%arg0: i32) -> (i32, i32, i32) {
    %c0_i32 = arith.constant 0 : i32
    %c0_i32_0 = arith.constant 0 : i32
    %c0_i32_1 = arith.constant 0 : i32
    return %c0_i32, %arg0, %c0_i32_0 : i32, i32, i32
  }
  func.func @transform_1(%arg0: i32) -> (i32, i32, i32) {
    %c0_i32 = arith.constant 0 : i32
    %c0_i32_0 = arith.constant 0 : i32
    %c0_i32_1 = arith.constant 0 : i32
    return %c0_i32, %arg0, %c0_i32_0 : i32, i32, i32
  }
  func.func @transform_2(%arg0: i32) -> (i32, i32) {
    %c0_i32 = arith.constant 0 : i32
    %c0_i32_0 = arith.constant 0 : i32
    return %arg0, %c0_i32 : i32, i32
  }
  func.func @transform_3(%arg0: i32) -> (i32, i32) {
    %c0_i32 = arith.constant 0 : i32
    %c0_i32_0 = arith.constant 0 : i32
    return %arg0, %c0_i32 : i32, i32
  }
  func.func @transform_4(%arg0: i32) -> (i32, i32) {
    %c0_i32 = arith.constant 0 : i32
    %c0_i32_0 = arith.constant 0 : i32
    %c0_i32_1 = arith.constant 0 : i32
    return %c0_i32, %c0_i32_0 : i32, i32
  }
  func.func @transform_5(%arg0: i32) -> (i32, i32) {
    %c0_i32 = arith.constant 0 : i32
    %c0_i32_0 = arith.constant 0 : i32
    return %arg0, %c0_i32 : i32, i32
  }
}

</mosaic_0001>

<llo_original>
// kernel: _forward_device.1
$region0: #{_forward_device.1}
  #allocation0 [shape = 'u32[]', space=smem, size = 0x4, offset = 0x4, fixed_abs, tag = 'smem constant byte address 0x4 - core index']
  #allocation1 [shape = 'u32[144,128]{1,0:T(1,128)}', space=vmem, size = 0x12000, scoped, tag = 'internal scratch']
  %s0 = inlined_call_operand.vmem [shape: f32[3,16,24], index: 0, kind: input, shape index: {}]
  %s1 = inlined_call_operand.vmem [shape: f32[3,16,24], index: 1, kind: input, shape index: {}]
  %s2 = inlined_call_operand.vmem [shape: f32[16,3], index: 2, kind: input, shape index: {}]
  %s3 = inlined_call_operand.vmem [shape: f32[16,3], index: 3, kind: input, shape index: {}]
  %s4 = inlined_call_operand.vmem [shape: f32[456,192], index: 4, kind: input, shape index: {}]
  %s5 = inlined_call_operand.hbm [shape: f32[16,128], index: 5, kind: output, shape index: {}]
  %s6 = sld [smem:[#allocation0]]
  $region129: #{_forward_device.1} parent=0
    _
  %s8 = ssub.s32 1, %s6
  %s9 = scalar_select 0, %s8, %s6
  $region1: #{_forward_device.1} parent=0
    #allocation2 [shape = 'u8[24576]{0}', space=vmem, size = 0x6000, scoped, tag = 'input window, operand 0']
    #allocation3 [shape = 'u8[24576]{0}', space=vmem, size = 0x6000, scoped, tag = 'input window, operand 1']
    #allocation4 [shape = 'u8[8192]{0}', space=vmem, size = 0x2000, scoped, tag = 'output window, operand 0']
    #allocation5 [shape = 's32[2]{0}', space=sflag, size = 0x8, scoped, tag = 'scoped memory for _forward_device.1']
    %10 = vsyncpa [#allocation5], 0
    %s11 = scalar_lea.sflag [#allocation5], 1
    %12 = vsyncpa %s11, 0
    loop: start=0, step=1, limit=4
    $region2: #{_forward_device.1} parent=1 // loop_pre_header
      _
    $region3: #{_forward_device.1} parent=1 // loop_header
      %s14 = sphi 0, %s18
      %p15 = scmp.ge.s32.totalorder %s14, 4
      %s24 = sphi 0, %s26
      %s27 = sphi 0, %s24
      %s28 = sphi 0, %s27
      %s44 = sphi 0, %s28
      %s50 = sphi 0, %s52
      %s53 = sphi 0, %s50
      %s54 = sphi 0, %s53
      %s70 = sphi 0, %s54
      %s76 = sphi 0, %s78
      %s79 = sphi 0, %s76
      %s80 = sphi 0, %s79
      %s96 = sphi 0, %s80
      %s102 = sphi 0, %s104
      %s105 = sphi 0, %s102
      %s106 = sphi 0, %s105
      %s122 = sphi 0, %s106
      %s126 = sphi 0, %s126
      %s128 = sphi 0, %s126
      %s129 = sphi 0, %s128
      %s143 = sphi 0, %s129
      %s149 = sphi 0, %s151
      %s152 = sphi 0, %s149
      %s153 = sphi 0, %s152
      %s169 = sphi 0, %s153
    $region4: #{_forward_device.1} parent=1 // loop_header_branch
      %17 = sbr.rel (%p15) target = $region8
    $region5: #{_forward_device.1} parent=1 // loop_body
      %s19 = ssub.s32 %s14, 1
      %s20 = ssub.s32 %s14, 2
      %s21 = sadd.s32 %s14, 1
      %s22 = ssub.s32 %s14, %s21
      %p23 = scmp.eq.s32.totalorder %s22, 0
      %s25 = sadd.s32 %s24, 1
      %s26 = scalar_select %p23, %s24, %s25
      %p29 = pneg %p23
      %p30 = scmp.eq.s32.totalorder %s14, 1
      %p31 = por %p29, %p30
      %p32 = scmp.ne.s32.totalorder %s24, %s27
      %p33 = scmp.eq.s32.totalorder %s14, 0
      %p34 = por %p32, %p33
      %p35 = scmp.ne.s32.totalorder %s24, %s27
      %p36 = scmp.eq.s32.totalorder %s19, 1
      %p37 = por %p35, %p36
      %p38 = scmp.ne.s32.totalorder %s27, %s28
      %p39 = scmp.eq.s32.totalorder %s19, 0
      %p40 = por %p38, %p39
      %p41 = scmp.ne.s32.totalorder %s27, %s28
      %p42 = scmp.eq.s32.totalorder %s20, 1
      %p43 = por %p41, %p42
      %p45 = scmp.ne.s32.totalorder %s28, %s44
      %p46 = scmp.eq.s32.totalorder %s20, 0
      %p47 = por %p45, %p46
      %s48 = ssub.s32 %s14, %s21
      %p49 = scmp.eq.s32.totalorder %s48, 0
      %s51 = sadd.s32 %s50, 1
      %s52 = scalar_select %p49, %s50, %s51
      %p55 = pneg %p49
      %p56 = scmp.eq.s32.totalorder %s14, 1
      %p57 = por %p55, %p56
      %p58 = scmp.ne.s32.totalorder %s50, %s53
      %p59 = scmp.eq.s32.totalorder %s14, 0
      %p60 = por %p58, %p59
      %p61 = scmp.ne.s32.totalorder %s50, %s53
      %p62 = scmp.eq.s32.totalorder %s19, 1
      %p63 = por %p61, %p62
      %p64 = scmp.ne.s32.totalorder %s53, %s54
      %p65 = scmp.eq.s32.totalorder %s19, 0
      %p66 = por %p64, %p65
      %p67 = scmp.ne.s32.totalorder %s53, %s54
      %p68 = scmp.eq.s32.totalorder %s20, 1
      %p69 = por %p67, %p68
      %p71 = scmp.ne.s32.totalorder %s54, %s70
      %p72 = scmp.eq.s32.totalorder %s20, 0
      %p73 = por %p71, %p72
      %s74 = ssub.s32 %s14, %s21
      %p75 = scmp.eq.s32.totalorder %s74, 0
      %s77 = sadd.s32 %s76, 1
      %s78 = scalar_select %p75, %s76, %s77
      %p81 = pneg %p75
      %p82 = scmp.eq.s32.totalorder %s14, 1
      %p83 = por %p81, %p82
      %p84 = scmp.ne.s32.totalorder %s76, %s79
      %p85 = scmp.eq.s32.totalorder %s14, 0
      %p86 = por %p84, %p85
      %p87 = scmp.ne.s32.totalorder %s76, %s79
      %p88 = scmp.eq.s32.totalorder %s19, 1
      %p89 = por %p87, %p88
      %p90 = scmp.ne.s32.totalorder %s79, %s80
      %p91 = scmp.eq.s32.totalorder %s19, 0
      %p92 = por %p90, %p91
      %p93 = scmp.ne.s32.totalorder %s79, %s80
      %p94 = scmp.eq.s32.totalorder %s20, 1
      %p95 = por %p93, %p94
      %p97 = scmp.ne.s32.totalorder %s80, %s96
      %p98 = scmp.eq.s32.totalorder %s20, 0
      %p99 = por %p97, %p98
      %s100 = ssub.s32 %s14, %s21
      %p101 = scmp.eq.s32.totalorder %s100, 0
      %s103 = sadd.s32 %s102, 1
      %s104 = scalar_select %p101, %s102, %s103
      %p107 = pneg %p101
      %p108 = scmp.eq.s32.totalorder %s14, 1
      %p109 = por %p107, %p108
      %p110 = scmp.ne.s32.totalorder %s102, %s105
      %p111 = scmp.eq.s32.totalorder %s14, 0
      %p112 = por %p110, %p111
      %p113 = scmp.ne.s32.totalorder %s102, %s105
      %p114 = scmp.eq.s32.totalorder %s19, 1
      %p115 = por %p113, %p114
      %p116 = scmp.ne.s32.totalorder %s105, %s106
      %p117 = scmp.eq.s32.totalorder %s19, 0
      %p118 = por %p116, %p117
      %p119 = scmp.ne.s32.totalorder %s105, %s106
      %p120 = scmp.eq.s32.totalorder %s20, 1
      %p121 = por %p119, %p120
      %p123 = scmp.ne.s32.totalorder %s106, %s122
      %p124 = scmp.eq.s32.totalorder %s20, 0
      %p125 = por %p123, %p124
      %s127 = sadd.s32 %s126, 1
      %p130 = scmp.eq.s32.totalorder %s14, 1
      %p131 = scmp.ne.s32.totalorder %s126, %s128
      %p132 = scmp.eq.s32.totalorder %s14, 0
      %p133 = por %p131, %p132
      %p134 = scmp.ne.s32.totalorder %s126, %s128
      %p135 = scmp.eq.s32.totalorder %s19, 1
      %p136 = por %p134, %p135
      %p137 = scmp.ne.s32.totalorder %s128, %s129
      %p138 = scmp.eq.s32.totalorder %s19, 0
      %p139 = por %p137, %p138
      %p140 = scmp.ne.s32.totalorder %s128, %s129
      %p141 = scmp.eq.s32.totalorder %s20, 1
      %p142 = por %p140, %p141
      %p144 = scmp.ne.s32.totalorder %s129, %s143
      %p145 = scmp.eq.s32.totalorder %s20, 0
      %p146 = por %p144, %p145
      %s147 = ssub.s32 %s14, %s21
      %p148 = scmp.eq.s32.totalorder %s147, 0
      %s150 = sadd.s32 %s149, 1
      %s151 = scalar_select %p148, %s149, %s150
      %p154 = pneg %p148
      %p155 = scmp.eq.s32.totalorder %s14, 1
      %p156 = por %p154, %p155
      %p157 = scmp.ne.s32.totalorder %s149, %s152
      %p158 = scmp.eq.s32.totalorder %s14, 0
      %p159 = por %p157, %p158
      %p160 = scmp.ne.s32.totalorder %s149, %s152
      %p161 = scmp.eq.s32.totalorder %s19, 1
      %p162 = por %p160, %p161
      %p163 = scmp.ne.s32.totalorder %s152, %s153
      %p164 = scmp.eq.s32.totalorder %s19, 0
      %p165 = por %p163, %p164
      %p166 = scmp.ne.s32.totalorder %s152, %s153
      %p167 = scmp.eq.s32.totalorder %s20, 1
      %p168 = por %p166, %p167
      %p170 = scmp.ne.s32.totalorder %s153, %s169
      %p171 = scmp.eq.s32.totalorder %s20, 0
      %p172 = por %p170, %p171
      %p173 = scmp.le.s32.totalorder 1, %s14
      %p174 = scmp.lt.s32.totalorder %s14, 3
      %p175 = pnand %p173, %p174
      %p176 = pneg %p175
      // Predicated region
      $region9: #{_forward_device.1} parent=5 // pred_check
        _
      $region10: #{_forward_device.1} parent=5 // pred_check_branch
        %178 = sbr.rel (%p175) target = $region12
      $region11: #{_forward_device.1} parent=5 // pred_region
        %s179 = ssub.s32 %s14, 1
        // Predicated region
        $region13: #{_forward_device.1} parent=11 // pred_check
          %p180 = pneg %p139
        $region14: #{_forward_device.1} parent=11 // pred_check_branch
          %182 = sbr.rel (%p180) target = $region16
        $region15: #{_forward_device.1} parent=11 // pred_region
          _
        $region16: #{_forward_device.1} parent=11 // pred_fallthru
          _
      $region12: #{_forward_device.1} parent=5 // pred_fallthru
        _
      %p183 = scmp.lt.s32.totalorder %s14, 2
      // Predicated region
      $region17: #{_forward_device.1} parent=5 // pred_check
        %p184 = pneg %p183
      $region18: #{_forward_device.1} parent=5 // pred_check_branch
        %186 = sbr.rel (%p184) target = $region20
      $region19: #{_forward_device.1} parent=5 // pred_region
        // Predicated region
        $region21: #{_forward_device.1} parent=19 // pred_check
          %p187 = pneg %p34
        $region22: #{_forward_device.1} parent=19 // pred_check_branch
          %189 = sbr.rel (%p187) target = $region24
        $region23: #{_forward_device.1} parent=19 // pred_region
          %s190 = sand.u32 %s24, 1
          %s191 = sand.u32 %s24, 1
          %s192 = smul.addr %s191, 24
          %s193 = scalar_lea.vmem [#allocation2], %s192
          %s194 = smul.addr %s14, 8
          %s195 = scalar_lea.vmem %s0, %s194
          // Predicated region
          $region25: #{_forward_device.1} parent=23 // pred_check
            _
          $region26: #{_forward_device.1} parent=23 // pred_check_branch
            %197 = sbr.rel (0) target = $region28
          $region27: #{_forward_device.1} parent=23 // pred_region
            // Predicated region
            $region29: #{_forward_device.1} parent=27 // pred_check
              _
            $region30: #{_forward_device.1} parent=27 // pred_check_branch
              %199 = sbr.rel (0) target = $region32
            $region31: #{_forward_device.1} parent=27 // pred_region
              // Predicated region
              $region44: #{_forward_device.1} parent=31 // pred_check
                _
              $region45: #{_forward_device.1} parent=31 // pred_check_branch
                %218 = sbr.rel (0) target = $region47
              $region46: #{_forward_device.1} parent=31 // pred_region
                loop: start=0, step=1, limit=1
                $region48: #{_forward_device.1} parent=46 // loop_pre_header
                  _
                $region49: #{_forward_device.1} parent=46 // loop_header
                  %s220 = sphi 0, %s224
                  %p221 = scmp.ge.s32.totalorder %s220, 1
                  %s225 = sphi %s195, %s195
                  %s226 = sphi %s193, %s193
                $region50: #{_forward_device.1} parent=46 // loop_header_branch
                  %223 = sbr.rel (%p221) target = $region54
                $region51: #{_forward_device.1} parent=46 // loop_body
                  %v227 = vld [vmem:[%s225] sm:$0xff]
                  %228 = vst [vmem:[%s226] sm:$0xff] %v227
                  %v229 = vld [vmem:[%s225 + $0x10] sm:$0xff]
                  %230 = vst [vmem:[%s226 + $0x8] sm:$0xff] %v229
                  %v231 = vld [vmem:[%s225 + $0x20] sm:$0xff]
                  %232 = vst [vmem:[%s226 + $0x10] sm:$0xff] %v231
                $region52: #{_forward_device.1} parent=46 // loop_footer
                  %s224 = sadd.s32 1, %s220
                $region53: #{_forward_device.1} parent=46 // loop_footer_branch
                  %219 = sbr.rel target = $region49
                $region54: #{_forward_device.1} parent=46 // loop_exit
                  _
              $region47: #{_forward_device.1} parent=31 // pred_fallthru
                _
              // Predicated region
              $region55: #{_forward_device.1} parent=31 // pred_check
                _
              $region56: #{_forward_device.1} parent=31 // pred_check_branch
                %234 = sbr.rel target = $region58
              $region57: #{_forward_device.1} parent=31 // pred_region
                _
              $region58: #{_forward_device.1} parent=31 // pred_fallthru
                _
            $region32: #{_forward_device.1} parent=27 // pred_fallthru
              _
            // Predicated region
            $region33: #{_forward_device.1} parent=27 // pred_check
              _
            $region34: #{_forward_device.1} parent=27 // pred_check_branch
              %201 = sbr.rel target = $region36
            $region35: #{_forward_device.1} parent=27 // pred_region
              loop: start=0, step=1, limit=1
              $region37: #{_forward_device.1} parent=35 // loop_pre_header
                _
              $region38: #{_forward_device.1} parent=35 // loop_header
                %s204 = sphi 0, %s208
                %p205 = scmp.ge.s32.totalorder %s204, 1
                %s209 = sphi %s195, %s195
                %s210 = sphi %s193, %s193
              $region39: #{_forward_device.1} parent=35 // loop_header_branch
                %207 = sbr.rel (%p205) target = $region43
              $region40: #{_forward_device.1} parent=35 // loop_body
                %v211 = vld [vmem:[%s209] sm:$0xff]
                %212 = vst [vmem:[%s210] sm:$0xff] %v211
                %v213 = vld [vmem:[%s209 + $0x10] sm:$0xff]
                %214 = vst [vmem:[%s210 + $0x8] sm:$0xff] %v213
                %v215 = vld [vmem:[%s209 + $0x20] sm:$0xff]
                %216 = vst [vmem:[%s210 + $0x10] sm:$0xff] %v215
              $region41: #{_forward_device.1} parent=35 // loop_footer
                %s208 = sadd.s32 1, %s204
              $region42: #{_forward_device.1} parent=35 // loop_footer_branch
                %203 = sbr.rel target = $region38
              $region43: #{_forward_device.1} parent=35 // loop_exit
                _
            $region36: #{_forward_device.1} parent=27 // pred_fallthru
              _
          $region28: #{_forward_device.1} parent=23 // pred_fallthru
            _
          %235 = vnop
        $region24: #{_forward_device.1} parent=19 // pred_fallthru
          _
        // Predicated region
        $region59: #{_forward_device.1} parent=19 // pred_check
          %p236 = pneg %p60
        $region60: #{_forward_device.1} parent=19 // pred_check_branch
          %238 = sbr.rel (%p236) target = $region62
        $region61: #{_forward_device.1} parent=19 // pred_region
          %s239 = sand.u32 %s50, 1
          %s240 = sand.u32 %s50, 1
          %s241 = smul.addr %s240, 24
          %s242 = scalar_lea.vmem [#allocation3], %s241
          %s243 = smul.addr %s14, 8
          %s244 = scalar_lea.vmem %s1, %s243
          // Predicated region
          $region63: #{_forward_device.1} parent=61 // pred_check
            _
          $region64: #{_forward_device.1} parent=61 // pred_check_branch
            %246 = sbr.rel (0) target = $region66
          $region65: #{_forward_device.1} parent=61 // pred_region
            // Predicated region
            $region67: #{_forward_device.1} parent=65 // pred_check
              _
            $region68: #{_forward_device.1} parent=65 // pred_check_branch
              %248 = sbr.rel (0) target = $region70
            $region69: #{_forward_device.1} parent=65 // pred_region
              // Predicated region
              $region82: #{_forward_device.1} parent=69 // pred_check
                _
              $region83: #{_forward_device.1} parent=69 // pred_check_branch
                %267 = sbr.rel (0) target = $region85
              $region84: #{_forward_device.1} parent=69 // pred_region
                loop: start=0, step=1, limit=1
                $region86: #{_forward_device.1} parent=84 // loop_pre_header
                  _
                $region87: #{_forward_device.1} parent=84 // loop_header
                  %s269 = sphi 0, %s273
                  %p270 = scmp.ge.s32.totalorder %s269, 1
                  %s274 = sphi %s244, %s244
                  %s275 = sphi %s242, %s242
                $region88: #{_forward_device.1} parent=84 // loop_header_branch
                  %272 = sbr.rel (%p270) target = $region92
                $region89: #{_forward_device.1} parent=84 // loop_body
                  %v276 = vld [vmem:[%s274] sm:$0xff]
                  %277 = vst [vmem:[%s275] sm:$0xff] %v276
                  %v278 = vld [vmem:[%s274 + $0x10] sm:$0xff]
                  %279 = vst [vmem:[%s275 + $0x8] sm:$0xff] %v278
                  %v280 = vld [vmem:[%s274 + $0x20] sm:$0xff]
                  %281 = vst [vmem:[%s275 + $0x10] sm:$0xff] %v280
                $region90: #{_forward_device.1} parent=84 // loop_footer
                  %s273 = sadd.s32 1, %s269
                $region91: #{_forward_device.1} parent=84 // loop_footer_branch
                  %268 = sbr.rel target = $region87
                $region92: #{_forward_device.1} parent=84 // loop_exit
                  _
              $region85: #{_forward_device.1} parent=69 // pred_fallthru
                _
              // Predicated region
              $region93: #{_forward_device.1} parent=69 // pred_check
                _
              $region94: #{_forward_device.1} parent=69 // pred_check_branch
                %283 = sbr.rel target = $region96
              $region95: #{_forward_device.1} parent=69 // pred_region
                _
              $region96: #{_forward_device.1} parent=69 // pred_fallthru
                _
            $region70: #{_forward_device.1} parent=65 // pred_fallthru
              _
            // Predicated region
            $region71: #{_forward_device.1} parent=65 // pred_check
              _
            $region72: #{_forward_device.1} parent=65 // pred_check_branch
              %250 = sbr.rel target = $region74
            $region73: #{_forward_device.1} parent=65 // pred_region
              loop: start=0, step=1, limit=1
              $region75: #{_forward_device.1} parent=73 // loop_pre_header
                _
              $region76: #{_forward_device.1} parent=73 // loop_header
                %s253 = sphi 0, %s257
                %p254 = scmp.ge.s32.totalorder %s253, 1
                %s258 = sphi %s244, %s244
                %s259 = sphi %s242, %s242
              $region77: #{_forward_device.1} parent=73 // loop_header_branch
                %256 = sbr.rel (%p254) target = $region81
              $region78: #{_forward_device.1} parent=73 // loop_body
                %v260 = vld [vmem:[%s258] sm:$0xff]
                %261 = vst [vmem:[%s259] sm:$0xff] %v260
                %v262 = vld [vmem:[%s258 + $0x10] sm:$0xff]
                %263 = vst [vmem:[%s259 + $0x8] sm:$0xff] %v262
                %v264 = vld [vmem:[%s258 + $0x20] sm:$0xff]
                %265 = vst [vmem:[%s259 + $0x10] sm:$0xff] %v264
              $region79: #{_forward_device.1} parent=73 // loop_footer
                %s257 = sadd.s32 1, %s253
              $region80: #{_forward_device.1} parent=73 // loop_footer_branch
                %252 = sbr.rel target = $region76
              $region81: #{_forward_device.1} parent=73 // loop_exit
                _
            $region74: #{_forward_device.1} parent=65 // pred_fallthru
              _
          $region66: #{_forward_device.1} parent=61 // pred_fallthru
            _
          %284 = vnop
        $region62: #{_forward_device.1} parent=19 // pred_fallthru
          _
        // Predicated region
        $region97: #{_forward_device.1} parent=19 // pred_check
          %p285 = pneg %p86
        $region98: #{_forward_device.1} parent=19 // pred_check_branch
          %287 = sbr.rel (%p285) target = $region100
        $region99: #{_forward_device.1} parent=19 // pred_region
          %p288 = scmp.lt.s32.totalorder %s14, 1
          %s289 = scalar_select %p288, %s14, 1
          %s290 = smul.addr %s289, 8
          %s291 = scalar_lea.vmem %s2, %s290
        $region100: #{_forward_device.1} parent=19 // pred_fallthru
          _
        // Predicated region
        $region101: #{_forward_device.1} parent=19 // pred_check
          %p292 = pneg %p112
        $region102: #{_forward_device.1} parent=19 // pred_check_branch
          %294 = sbr.rel (%p292) target = $region104
        $region103: #{_forward_device.1} parent=19 // pred_region
          %p295 = scmp.lt.s32.totalorder %s14, 1
          %s296 = scalar_select %p295, %s14, 1
          %s297 = smul.addr %s296, 8
          %s298 = scalar_lea.vmem %s3, %s297
        $region104: #{_forward_device.1} parent=19 // pred_fallthru
          _
      $region20: #{_forward_device.1} parent=5 // pred_fallthru
        _
      %p299 = scmp.le.s32.totalorder 1, %s14
      %p300 = scmp.lt.s32.totalorder %s14, 3
      %p301 = pnand %p299, %p300
      %p302 = pneg %p301
      // Predicated region
      $region105: #{_forward_device.1} parent=5 // pred_check
        _
      $region106: #{_forward_device.1} parent=5 // pred_check_branch
        %304 = sbr.rel (%p301) target = $region108
      $region107: #{_forward_device.1} parent=5 // pred_region
        %s305 = ssub.s32 %s14, 1
        %s306 = sand.u32 %s27, 1
        %s307 = sand.u32 %s27, 1
        %s308 = smul.addr %s307, 24
        %s309 = scalar_lea.vmem [#allocation2], %s308
        // Predicated region
        $region109: #{_forward_device.1} parent=107 // pred_check
          %p310 = pneg %p40
        $region110: #{_forward_device.1} parent=107 // pred_check_branch
          %312 = sbr.rel (%p310) target = $region112
        $region111: #{_forward_device.1} parent=107 // pred_region
          _
        $region112: #{_forward_device.1} parent=107 // pred_fallthru
          _
        %s313 = sand.u32 %s53, 1
        %s314 = sand.u32 %s53, 1
        %s315 = smul.addr %s314, 24
        %s316 = scalar_lea.vmem [#allocation3], %s315
        // Predicated region
        $region113: #{_forward_device.1} parent=107 // pred_check
          %p317 = pneg %p66
        $region114: #{_forward_device.1} parent=107 // pred_check_branch
          %319 = sbr.rel (%p317) target = $region116
        $region115: #{_forward_device.1} parent=107 // pred_region
          _
        $region116: #{_forward_device.1} parent=107 // pred_fallthru
          _
        %s320 = sand.u32 %s27, 1
        %s321 = sand.u32 %s27, 1
        %s322 = smul.addr %s321, 24
        %s323 = scalar_lea.vmem [#allocation2], %s322
        %p324 = pneg %p40
        %p325 = pneg %p37
        %s326 = sand.u32 %s53, 1
        %s327 = sand.u32 %s53, 1
        %s328 = smul.addr %s327, 24
        %s329 = scalar_lea.vmem [#allocation3], %s328
        %p330 = pneg %p66
        %p331 = pneg %p63
        %p332 = scmp.lt.s32.totalorder %s19, 1
        %s333 = scalar_select %p332, %s19, 1
        %s334 = smul.addr %s333, 8
        %s335 = scalar_lea.vmem %s2, %s334
        %p336 = pneg %p92
        %p337 = pneg %p89
        %p338 = scmp.lt.s32.totalorder %s19, 1
        %s339 = scalar_select %p338, %s19, 1
        %s340 = smul.addr %s339, 8
        %s341 = scalar_lea.vmem %s3, %s340
        %p342 = pneg %p118
        %p343 = pneg %p115
        %p344 = pneg %p139
        %p345 = pneg %p136
        %p346 = pneg %p165
        %p347 = pneg %p162
        %s348 = sand.u32 %s152, 1
        %s349 = scalar_lea.sflag [#allocation5], %s348
        %s350 = sand.u32 %s152, 1
        %s351 = smul.addr %s350, 8
        %s352 = scalar_lea.vmem [#allocation4], %s351
        %p353 = scmp.lt.s32.totalorder %s19, 1
        %s354 = scalar_select %p353, %s19, 1
        %s355 = smul.addr %s354, 8
        %s356 = scalar_lea.vmem %s2, %s355
        %p357 = scmp.lt.s32.totalorder %s19, 1
        %s358 = scalar_select %p357, %s19, 1
        %s359 = smul.addr %s358, 8
        %s360 = scalar_lea.vmem %s3, %s359
        %v361 = vld [vmem:[%s4] sm:$0xff]
        %v362 = vld [vmem:[%s4 + $0x8] sm:$0xff]
        %v363 = vld [vmem:[%s4 + $0x10] sm:$0xff]
        %v364 = vld [vmem:[%s4 + $0x18] sm:$0xff]
        %v365 = vld [vmem:[%s4 + $0x20] sm:$0xff]
        %v366 = vld [vmem:[%s4 + $0x28] sm:$0xff]
        %v367 = vld [vmem:[%s4 + $0x30] sm:$0xff]
        %v368 = vld [vmem:[%s4 + $0x38] sm:$0xff]
        %v369 = vld [vmem:[%s4 + $0x40] sm:$0xff]
        %v370 = vld [vmem:[%s4 + $0x48] sm:$0xff]
        %v371 = vld [vmem:[%s4 + $0x50] sm:$0xff]
        %v372 = vld [vmem:[%s4 + $0x58] sm:$0xff]
        %v373 = vld [vmem:[%s4 + $0x60] sm:$0xff]
        %v374 = vld [vmem:[%s4 + $0x68] sm:$0xff]
        %v375 = vld [vmem:[%s4 + $0x70] sm:$0xff]
        %v376 = vld [vmem:[%s4 + $0x78] sm:$0xff]
        %v377 = vld [vmem:[%s4 + $0x80] sm:$0xff]
        %v378 = vld [vmem:[%s4 + $0x88] sm:$0xff]
        %v379 = vld [vmem:[%s4 + $0x90] sm:$0xff]
        %v380 = vld [vmem:[%s4 + $0x98] sm:$0xff]
        %v381 = vld [vmem:[%s4 + $0xa0] sm:$0xff]
        %v382 = vld [vmem:[%s4 + $0xa8] sm:$0xff]
        %v383 = vld [vmem:[%s4 + $0xb0] sm:$0xff]
        %v384 = vld [vmem:[%s4 + $0xb8] sm:$0xff]
        %v385 = vld [vmem:[%s4 + $0xc0] sm:$0xff]
        %v386 = vld [vmem:[%s4 + $0xc8] sm:$0xff]
        %v387 = vld [vmem:[%s4 + $0xd0] sm:$0xff]
        %v388 = vld [vmem:[%s4 + $0xd8] sm:$0xff]
        %v389 = vld [vmem:[%s4 + $0xe0] sm:$0xff]
        %v390 = vld [vmem:[%s4 + $0xe8] sm:$0xff]
        %v391 = vld [vmem:[%s4 + $0xf0] sm:$0xff]
        %v392 = vld [vmem:[%s4 + $0xf8] sm:$0xff]
        %s393 = scalar_lea.vmem %s4, 256
        %v394 = vld [vmem:[%s393] ss:$8 sm:$0x3]
        %s395 = scalar_lea.vmem %s4, 272
        %v396 = vld [vmem:[%s395] ss:$8 sm:$0x3]
        %v397 = vld [vmem:[%s4 + $0x120] sm:$0xff]
        %v398 = vld [vmem:[%s4 + $0x130] sm:$0xff]
        %v399 = vld [vmem:[%s4 + $0x140] sm:$0xff]
        %v400 = vld [vmem:[%s4 + $0x150] sm:$0xff]
        %v401 = vld [vmem:[%s4 + $0x160] sm:$0xff]
        %v402 = vld [vmem:[%s4 + $0x170] sm:$0xff]
        %v403 = vld [vmem:[%s4 + $0x180] sm:$0xff]
        %v404 = vld [vmem:[%s4 + $0x190] sm:$0xff]
        %v405 = vld [vmem:[%s4 + $0x1a0] sm:$0xff]
        %v406 = vld [vmem:[%s4 + $0x1b0] sm:$0xff]
        %v407 = vld [vmem:[%s4 + $0x1c0] sm:$0xff]
        %v408 = vld [vmem:[%s4 + $0x1d0] sm:$0xff]
        %v409 = vld [vmem:[%s4 + $0x1e0] sm:$0xff]
        %v410 = vld [vmem:[%s4 + $0x1f0] sm:$0xff]
        %v411 = vld [vmem:[%s4 + $0x200] sm:$0xff]
        %v412 = vld [vmem:[%s4 + $0x210] sm:$0xff]
        %v413 = vld [vmem:[%s4 + $0x220] sm:$0xff]
        %v414 = vld [vmem:[%s4 + $0x230] sm:$0xff]
        %v415 = vld [vmem:[%s4 + $0x240] sm:$0xff]
        %v416 = vld [vmem:[%s4 + $0x250] sm:$0xff]
        %v417 = vld [vmem:[%s4 + $0x260] sm:$0xff]
        %v418 = vld [vmem:[%s4 + $0x270] sm:$0xff]
        %v419 = vld [vmem:[%s4 + $0x280] sm:$0xff]
        %v420 = vld [vmem:[%s4 + $0x290] sm:$0xff]
        %v421 = vld [vmem:[%s4 + $0x2a0] sm:$0xff]
        %v422 = vld [vmem:[%s4 + $0x2b0] sm:$0xff]
        %v423 = vld [vmem:[%s4 + $0x2c0] sm:$0xff]
        %v424 = vld [vmem:[%s4 + $0x2d0] sm:$0xff]
        %v425 = vld [vmem:[%s4 + $0x2e0] sm:$0xff]
        %v426 = vld [vmem:[%s4 + $0x2f0] sm:$0xff]
        %v427 = vld [vmem:[%s4 + $0x300] sm:$0xff]
        %v428 = vld [vmem:[%s4 + $0x310] sm:$0xff]
        %v429 = vld [vmem:[%s4 + $0x320] sm:$0xff]
        %v430 = vld [vmem:[%s4 + $0x330] sm:$0xff]
        %v431 = vld [vmem:[%s4 + $0x340] sm:$0xff]
        %v432 = vld [vmem:[%s4 + $0x350] sm:$0xff]
        %v433 = vld [vmem:[%s4 + $0x360] sm:$0xff]
        %v434 = vld [vmem:[%s4 + $0x370] sm:$0xff]
        %v435 = vld [vmem:[%s4 + $0x380] sm:$0xff]
        %v436 = vld [vmem:[%s356] sm:$0xff]
        %v437 = vld [vmem:[%s360] sm:$0xff]
        %v438 = vld [vmem:[%s309] sm:$0xff]
        %vm439 = vcmask 195584
        %v441 = vsel %vm439, %v438, 0
        %443 = vmatprep.subr.mxu0 0.0
        %444 = vmatpush1.msra.mxu0 %v397
        %445 = vmatprep.subr.mxu0 0.0
        %446 = vmatpush1.msra.mxu0 %v398
        %447 = vmatprep.subr.mxu0 0.0
        %448 = vmatpush1.msra.mxu0 %v399
        %449 = vmatprep.subr.mxu0 0.0
        %450 = vmatpush1.msra.mxu0 0.0
        %451 = vmatprep.subr.mxu0 0.0
        %452 = vmatpush1.msra.mxu0 0.0
        %453 = vmatprep.subr.mxu0 0.0
        %454 = vmatpush1.msra.mxu0 0.0
        %455 = vmatprep.subr.mxu0 0.0
        %456 = vmatpush1.msra.mxu0 0.0
        %457 = vmatprep.subr.mxu0 0.0
        %458 = vmatpush1.msra.mxu0 0.0
        %459 = vmatprep.subr.mxu0 0.0
        %460 = vmatpush1.msra.mxu0 0.0
        %461 = vmatprep.subr.mxu0 0.0
        %462 = vmatpush1.msra.mxu0 0.0
        %463 = vmatprep.subr.mxu0 0.0
        %464 = vmatpush1.msra.mxu0 0.0
        %465 = vmatprep.subr.mxu0 0.0
        %466 = vmatpush1.msra.mxu0 0.0
        %467 = vmatprep.subr.mxu0 0.0
        %468 = vmatpush1.msra.mxu0 0.0
        %469 = vmatprep.subr.mxu0 0.0
        %470 = vmatpush1.msra.mxu0 0.0
        %471 = vmatprep.subr.mxu0 0.0
        %472 = vmatpush1.msra.mxu0 0.0
        %473 = vmatprep.subr.mxu0 0.0
        %474 = vmatpush1.msra.mxu0 0.0
        %475 = vmatprep.subr.mxu0 0.0
        %476 = vmatpush1.msra.mxu0 0.0
        %477 = vmatprep.subr.mxu0 0.0
        %478 = vmatpush1.msra.mxu0 0.0
        %479 = vmatprep.subr.mxu0 0.0
        %480 = vmatpush1.msra.mxu0 0.0
        %481 = vmatprep.subr.mxu0 0.0
        %482 = vmatpush1.msra.mxu0 0.0
        %483 = vmatprep.subr.mxu0 0.0
        %484 = vmatpush1.msra.mxu0 0.0
        %485 = vmatprep.subr.mxu0 0.0
        %486 = vmatpush1.msra.mxu0 0.0
        %487 = vmatprep.subr.mxu0 0.0
        %488 = vmatpush1.msra.mxu0 0.0
        %489 = vmatprep.subr.mxu0 0.0
        %490 = vmatpush1.msra.mxu0 0.0
        %491 = vmatprep.subr.mxu0 0.0
        %492 = vmatpush1.msra.mxu0 0.0
        %493 = vmatprep.subr.mxu0 0.0
        %494 = vmatpush1.msra.mxu0 0.0
        %495 = vmatprep.subr.mxu0 0.0
        %496 = vmatpush1.msra.mxu0 0.0
        %497 = vmatprep.subr.mxu0 0.0
        %498 = vmatpush1.msra.mxu0 0.0
        %499 = vmatprep.subr.mxu0 0.0
        %500 = vmatpush1.msra.mxu0 0.0
        %501 = vmatprep.subr.mxu0 0.0
        %502 = vmatpush1.msra.mxu0 0.0
        %503 = vmatprep.subr.mxu0 0.0
        %504 = vmatpush1.msra.mxu0 0.0
        %505 = vmatprep.subr.mxu0 0.0
        %506 = vmatpush1.msra.mxu0 0.0
        %507 = vmatprep.mubr.f32.mxu0 0.0
        %508 = vmatmul.mubr.f32.gmra.mrb[0].mxu0 %v441
        %v509 = vpop.f32.mrb[0].mxu0
        %v510 = vadd.f32 0.0, %v509
        %v511 = vpop.f32.mrb[0].mxu0
        %512 = vdwg.mxu0
        %v513 = vld [vmem:[%s316] sm:$0xff]
        %v515 = vsel %vm439, %v513, 0
        %517 = vmatprep.subr.mxu0 0.0
        %518 = vmatpush1.msra.mxu0 %v400
        %519 = vmatprep.subr.mxu0 0.0
        %520 = vmatpush1.msra.mxu0 %v401
        %521 = vmatprep.subr.mxu0 0.0
        %522 = vmatpush1.msra.mxu0 %v402
        %523 = vmatprep.subr.mxu0 0.0
        %524 = vmatpush1.msra.mxu0 0.0
        %525 = vmatprep.subr.mxu0 0.0
        %526 = vmatpush1.msra.mxu0 0.0
        %527 = vmatprep.subr.mxu0 0.0
        %528 = vmatpush1.msra.mxu0 0.0
        %529 = vmatprep.subr.mxu0 0.0
        %530 = vmatpush1.msra.mxu0 0.0
        %531 = vmatprep.subr.mxu0 0.0
        %532 = vmatpush1.msra.mxu0 0.0
        %533 = vmatprep.subr.mxu0 0.0
        %534 = vmatpush1.msra.mxu0 0.0
        %535 = vmatprep.subr.mxu0 0.0
        %536 = vmatpush1.msra.mxu0 0.0
        %537 = vmatprep.subr.mxu0 0.0
        %538 = vmatpush1.msra.mxu0 0.0
        %539 = vmatprep.subr.mxu0 0.0
        %540 = vmatpush1.msra.mxu0 0.0
        %541 = vmatprep.subr.mxu0 0.0
        %542 = vmatpush1.msra.mxu0 0.0
        %543 = vmatprep.subr.mxu0 0.0
        %544 = vmatpush1.msra.mxu0 0.0
        %545 = vmatprep.subr.mxu0 0.0
        %546 = vmatpush1.msra.mxu0 0.0
        %547 = vmatprep.subr.mxu0 0.0
        %548 = vmatpush1.msra.mxu0 0.0
        %549 = vmatprep.subr.mxu0 0.0
        %550 = vmatpush1.msra.mxu0 0.0
        %551 = vmatprep.subr.mxu0 0.0
        %552 = vmatpush1.msra.mxu0 0.0
        %553 = vmatprep.subr.mxu0 0.0
        %554 = vmatpush1.msra.mxu0 0.0
        %555 = vmatprep.subr.mxu0 0.0
        %556 = vmatpush1.msra.mxu0 0.0
        %557 = vmatprep.subr.mxu0 0.0
        %558 = vmatpush1.msra.mxu0 0.0
        %559 = vmatprep.subr.mxu0 0.0
        %560 = vmatpush1.msra.mxu0 0.0
        %561 = vmatprep.subr.mxu0 0.0
        %562 = vmatpush1.msra.mxu0 0.0
        %563 = vmatprep.subr.mxu0 0.0
        %564 = vmatpush1.msra.mxu0 0.0
        %565 = vmatprep.subr.mxu0 0.0
        %566 = vmatpush1.msra.mxu0 0.0
        %567 = vmatprep.subr.mxu0 0.0
        %568 = vmatpush1.msra.mxu0 0.0
        %569 = vmatprep.subr.mxu0 0.0
        %570 = vmatpush1.msra.mxu0 0.0
        %571 = vmatprep.subr.mxu0 0.0
        %572 = vmatpush1.msra.mxu0 0.0
        %573 = vmatprep.subr.mxu0 0.0
        %574 = vmatpush1.msra.mxu0 0.0
        %575 = vmatprep.subr.mxu0 0.0
        %576 = vmatpush1.msra.mxu0 0.0
        %577 = vmatprep.subr.mxu0 0.0
        %578 = vmatpush1.msra.mxu0 0.0
        %579 = vmatprep.subr.mxu0 0.0
        %580 = vmatpush1.msra.mxu0 0.0
        %581 = vmatprep.mubr.f32.mxu0 0.0
        %582 = vmatmul.mubr.f32.gmra.mrb[0].mxu0 %v515
        %v583 = vpop.f32.mrb[0].mxu0
        %v584 = vadd.f32 0.0, %v583
        %v585 = vpop.f32.mrb[0].mxu0
        %586 = vdwg.mxu0
        %588 = vrot.lane.b32.xlu0 %v584, 32
        %v589 = vpop.permute.xlu0 %588
        %vm591 = vcmask 261120
        %v592 = vsel %vm591, %v510, %v589
        %v593 = vlaneseq
        %v594 = vshrl.u32 %v593, 7
        %v595 = vsub.s32 0, %v594
        %v596 = vrot.slane %v435, %v595
        %vm597 = vcmask 523264
        %v599 = vsel %vm597, %v592, 0
        %601 = vmatprep.subr.mxu0 0.0
        %602 = vmatpush1.msra.mxu0 %v403
        %603 = vmatprep.subr.mxu0 0.0
        %604 = vmatpush1.msra.mxu0 %v404
        %605 = vmatprep.subr.mxu0 0.0
        %606 = vmatpush1.msra.mxu0 %v405
        %607 = vmatprep.subr.mxu0 0.0
        %608 = vmatpush1.msra.mxu0 %v406
        %609 = vmatprep.subr.mxu0 0.0
        %610 = vmatpush1.msra.mxu0 %v407
        %611 = vmatprep.subr.mxu0 0.0
        %612 = vmatpush1.msra.mxu0 %v408
        %613 = vmatprep.subr.mxu0 0.0
        %614 = vmatpush1.msra.mxu0 %v409
        %615 = vmatprep.subr.mxu0 0.0
        %616 = vmatpush1.msra.mxu0 %v410
        %617 = vmatprep.subr.mxu0 0.0
        %618 = vmatpush1.msra.mxu0 0.0
        %619 = vmatprep.subr.mxu0 0.0
        %620 = vmatpush1.msra.mxu0 0.0
        %621 = vmatprep.subr.mxu0 0.0
        %622 = vmatpush1.msra.mxu0 0.0
        %623 = vmatprep.subr.mxu0 0.0
        %624 = vmatpush1.msra.mxu0 0.0
        %625 = vmatprep.subr.mxu0 0.0
        %626 = vmatpush1.msra.mxu0 0.0
        %627 = vmatprep.subr.mxu0 0.0
        %628 = vmatpush1.msra.mxu0 0.0
        %629 = vmatprep.subr.mxu0 0.0
        %630 = vmatpush1.msra.mxu0 0.0
        %631 = vmatprep.subr.mxu0 0.0
        %632 = vmatpush1.msra.mxu0 0.0
        %633 = vmatprep.subr.mxu0 0.0
        %634 = vmatpush1.msra.mxu0 0.0
        %635 = vmatprep.subr.mxu0 0.0
        %636 = vmatpush1.msra.mxu0 0.0
        %637 = vmatprep.subr.mxu0 0.0
        %638 = vmatpush1.msra.mxu0 0.0
        %639 = vmatprep.subr.mxu0 0.0
        %640 = vmatpush1.msra.mxu0 0.0
        %641 = vmatprep.subr.mxu0 0.0
        %642 = vmatpush1.msra.mxu0 0.0
        %643 = vmatprep.subr.mxu0 0.0
        %644 = vmatpush1.msra.mxu0 0.0
        %645 = vmatprep.subr.mxu0 0.0
        %646 = vmatpush1.msra.mxu0 0.0
        %647 = vmatprep.subr.mxu0 0.0
        %648 = vmatpush1.msra.mxu0 0.0
        %649 = vmatprep.subr.mxu0 0.0
        %650 = vmatpush1.msra.mxu0 0.0
        %651 = vmatprep.subr.mxu0 0.0
        %652 = vmatpush1.msra.mxu0 0.0
        %653 = vmatprep.subr.mxu0 0.0
        %654 = vmatpush1.msra.mxu0 0.0
        %655 = vmatprep.subr.mxu0 0.0
        %656 = vmatpush1.msra.mxu0 0.0
        %657 = vmatprep.subr.mxu0 0.0
        %658 = vmatpush1.msra.mxu0 0.0
        %659 = vmatprep.subr.mxu0 0.0
        %660 = vmatpush1.msra.mxu0 0.0
        %661 = vmatprep.subr.mxu0 0.0
        %662 = vmatpush1.msra.mxu0 0.0
        %663 = vmatprep.subr.mxu0 0.0
        %664 = vmatpush1.msra.mxu0 0.0
        %665 = vmatprep.mubr.f32.mxu0 0.0
        %666 = vmatmul.mubr.f32.gmra.mrb[0].mxu0 %v599
        %v667 = vpop.f32.mrb[0].mxu0
        %v668 = vadd.f32 %v596, %v667
        %v669 = vpop.f32.mrb[0].mxu0
        %670 = vdwg.mxu0
        %v671 = vmax.f32 %v668, 0.0
        %v672 = vlaneseq
        %v673 = vshrl.u32 %v672, 7
        %v674 = vsub.s32 1, %v673
        %v675 = vrot.slane %v435, %v674
        %v676 = vmul.f32 %v671, %v675
        %v677 = vsel %vm591, %v676, 0.0
        %678 = vadd.xlane.f32.xlu0 %v677
        %v679 = vpop.xlane.xlu0 %678
        %v680 = vlaneseq
        %v681 = vshrl.u32 %v680, 7
        %v682 = vsub.s32 2, %v681
        %v683 = vrot.slane %v435, %v682
        %v684 = vadd.f32 %v679, %v683
        %v685 = vxor.u32 %v684, 2147483648
        %v686 = vmul.f32 %v685, 1.442695
        %v687 = vpow.pop %v686
        %v688 = vadd.f32 %v687, 1.0
        %v689 = vrcp.pop %v688
        %v690 = vmul.f32 1.0, %v689
        %v692 = vlaneseq
        %v693 = vshrl.u32 %v692, 7
        %v694 = vsub.s32 0, %v693
        %v695 = vrot.slane %v394, %v694
        %v696 = vlaneseq
        %v697 = vshrl.u32 %v696, 7
        %v698 = vsub.s32 1, %v697
        %v699 = vrot.slane %v394, %v698
        %702 = vmatprep.subr.mxu0 %v362
        %703 = vmatpush1.msra.mxu0 %v361
        %704 = vmatprep.subr.mxu0 %v364
        %705 = vmatpush1.msra.mxu0 %v363
        %706 = vmatprep.subr.mxu0 %v366
        %707 = vmatpush1.msra.mxu0 %v365
        %708 = vmatprep.subr.mxu0 %v368
        %709 = vmatpush1.msra.mxu0 %v367
        %710 = vmatprep.subr.mxu0 %v370
        %711 = vmatpush1.msra.mxu0 %v369
        %712 = vmatprep.subr.mxu0 %v372
        %713 = vmatpush1.msra.mxu0 %v371
        %714 = vmatprep.subr.mxu0 %v374
        %715 = vmatpush1.msra.mxu0 %v373
        %716 = vmatprep.subr.mxu0 %v376
        %717 = vmatpush1.msra.mxu0 %v375
        %718 = vmatprep.subr.mxu0 0.0
        %719 = vmatpush1.msra.mxu0 0.0
        %720 = vmatprep.subr.mxu0 0.0
        %721 = vmatpush1.msra.mxu0 0.0
        %722 = vmatprep.subr.mxu0 0.0
        %723 = vmatpush1.msra.mxu0 0.0
        %724 = vmatprep.subr.mxu0 0.0
        %725 = vmatpush1.msra.mxu0 0.0
        %726 = vmatprep.subr.mxu0 0.0
        %727 = vmatpush1.msra.mxu0 0.0
        %728 = vmatprep.subr.mxu0 0.0
        %729 = vmatpush1.msra.mxu0 0.0
        %730 = vmatprep.subr.mxu0 0.0
        %731 = vmatpush1.msra.mxu0 0.0
        %732 = vmatprep.subr.mxu0 0.0
        %733 = vmatpush1.msra.mxu0 0.0
        %734 = vmatprep.subr.mxu0 0.0
        %735 = vmatpush1.msra.mxu0 0.0
        %736 = vmatprep.subr.mxu0 0.0
        %737 = vmatpush1.msra.mxu0 0.0
        %738 = vmatprep.subr.mxu0 0.0
        %739 = vmatpush1.msra.mxu0 0.0
        %740 = vmatprep.subr.mxu0 0.0
        %741 = vmatpush1.msra.mxu0 0.0
        %742 = vmatprep.subr.mxu0 0.0
        %743 = vmatpush1.msra.mxu0 0.0
        %744 = vmatprep.subr.mxu0 0.0
        %745 = vmatpush1.msra.mxu0 0.0
        %746 = vmatprep.subr.mxu0 0.0
        %747 = vmatpush1.msra.mxu0 0.0
        %748 = vmatprep.subr.mxu0 0.0
        %749 = vmatpush1.msra.mxu0 0.0
        %750 = vmatprep.subr.mxu0 0.0
        %751 = vmatpush1.msra.mxu0 0.0
        %752 = vmatprep.subr.mxu0 0.0
        %753 = vmatpush1.msra.mxu0 0.0
        %754 = vmatprep.subr.mxu0 0.0
        %755 = vmatpush1.msra.mxu0 0.0
        %756 = vmatprep.subr.mxu0 0.0
        %757 = vmatpush1.msra.mxu0 0.0
        %758 = vmatprep.subr.mxu0 0.0
        %759 = vmatpush1.msra.mxu0 0.0
        %760 = vmatprep.subr.mxu0 0.0
        %761 = vmatpush1.msra.mxu0 0.0
        %762 = vmatprep.subr.mxu0 0.0
        %763 = vmatpush1.msra.mxu0 0.0
        %764 = vmatprep.subr.mxu0 0.0
        %765 = vmatpush1.msra.mxu0 0.0
        %766 = vmatprep.mubr.f32.mxu0 0.0
        %767 = vmatmul.mubr.f32.gmra.mrb[0].mxu0 %v599
        %v768 = vpop.f32.mrb[0].mxu0
        %v769 = vadd.f32 %v695, %v768
        %v770 = vpop.f32.mrb[0].mxu0
        %v771 = vadd.f32 %v699, %v770
        %772 = vdwg.mxu0
        %s773 = scalar_lea.vmem %s309, 8 [#allocation2]
        %v774 = vld [vmem:[%s773] sm:$0xff]
        %v776 = vsel %vm439, %v774, 0
        %778 = vmatprep.subr.mxu0 0.0
        %779 = vmatpush1.msra.mxu0 %v397
        %780 = vmatprep.subr.mxu0 0.0
        %781 = vmatpush1.msra.mxu0 %v398
        %782 = vmatprep.subr.mxu0 0.0
        %783 = vmatpush1.msra.mxu0 %v399
        %784 = vmatprep.subr.mxu0 0.0
        %785 = vmatpush1.msra.mxu0 0.0
        %786 = vmatprep.subr.mxu0 0.0
        %787 = vmatpush1.msra.mxu0 0.0
        %788 = vmatprep.subr.mxu0 0.0
        %789 = vmatpush1.msra.mxu0 0.0
        %790 = vmatprep.subr.mxu0 0.0
        %791 = vmatpush1.msra.mxu0 0.0
        %792 = vmatprep.subr.mxu0 0.0
        %793 = vmatpush1.msra.mxu0 0.0
        %794 = vmatprep.subr.mxu0 0.0
        %795 = vmatpush1.msra.mxu0 0.0
        %796 = vmatprep.subr.mxu0 0.0
        %797 = vmatpush1.msra.mxu0 0.0
        %798 = vmatprep.subr.mxu0 0.0
        %799 = vmatpush1.msra.mxu0 0.0
        %800 = vmatprep.subr.mxu0 0.0
        %801 = vmatpush1.msra.mxu0 0.0
        %802 = vmatprep.subr.mxu0 0.0
        %803 = vmatpush1.msra.mxu0 0.0
        %804 = vmatprep.subr.mxu0 0.0
        %805 = vmatpush1.msra.mxu0 0.0
        %806 = vmatprep.subr.mxu0 0.0
        %807 = vmatpush1.msra.mxu0 0.0
        %808 = vmatprep.subr.mxu0 0.0
        %809 = vmatpush1.msra.mxu0 0.0
        %810 = vmatprep.subr.mxu0 0.0
        %811 = vmatpush1.msra.mxu0 0.0
        %812 = vmatprep.subr.mxu0 0.0
        %813 = vmatpush1.msra.mxu0 0.0
        %814 = vmatprep.subr.mxu0 0.0
        %815 = vmatpush1.msra.mxu0 0.0
        %816 = vmatprep.subr.mxu0 0.0
        %817 = vmatpush1.msra.mxu0 0.0
        %818 = vmatprep.subr.mxu0 0.0
        %819 = vmatpush1.msra.mxu0 0.0
        %820 = vmatprep.subr.mxu0 0.0
        %821 = vmatpush1.msra.mxu0 0.0
        %822 = vmatprep.subr.mxu0 0.0
        %823 = vmatpush1.msra.mxu0 0.0
        %824 = vmatprep.subr.mxu0 0.0
        %825 = vmatpush1.msra.mxu0 0.0
        %826 = vmatprep.subr.mxu0 0.0
        %827 = vmatpush1.msra.mxu0 0.0
        %828 = vmatprep.subr.mxu0 0.0
        %829 = vmatpush1.msra.mxu0 0.0
        %830 = vmatprep.subr.mxu0 0.0
        %831 = vmatpush1.msra.mxu0 0.0
        %832 = vmatprep.subr.mxu0 0.0
        %833 = vmatpush1.msra.mxu0 0.0
        %834 = vmatprep.subr.mxu0 0.0
        %835 = vmatpush1.msra.mxu0 0.0
        %836 = vmatprep.subr.mxu0 0.0
        %837 = vmatpush1.msra.mxu0 0.0
        %838 = vmatprep.subr.mxu0 0.0
        %839 = vmatpush1.msra.mxu0 0.0
        %840 = vmatprep.subr.mxu0 0.0
        %841 = vmatpush1.msra.mxu0 0.0
        %842 = vmatprep.mubr.f32.mxu0 0.0
        %843 = vmatmul.mubr.f32.gmra.mrb[0].mxu0 %v776
        %v844 = vpop.f32.mrb[0].mxu0
        %v845 = vadd.f32 0.0, %v844
        %v846 = vpop.f32.mrb[0].mxu0
        %847 = vdwg.mxu0
        %s848 = scalar_lea.vmem %s316, 8 [#allocation3]
        %v849 = vld [vmem:[%s848] sm:$0xff]
        %v851 = vsel %vm439, %v849, 0
        %853 = vmatprep.subr.mxu0 0.0
        %854 = vmatpush1.msra.mxu0 %v400
        %855 = vmatprep.subr.mxu0 0.0
        %856 = vmatpush1.msra.mxu0 %v401
        %857 = vmatprep.subr.mxu0 0.0
        %858 = vmatpush1.msra.mxu0 %v402
        %859 = vmatprep.subr.mxu0 0.0
        %860 = vmatpush1.msra.mxu0 0.0
        %861 = vmatprep.subr.mxu0 0.0
        %862 = vmatpush1.msra.mxu0 0.0
        %863 = vmatprep.subr.mxu0 0.0
        %864 = vmatpush1.msra.mxu0 0.0
        %865 = vmatprep.subr.mxu0 0.0
        %866 = vmatpush1.msra.mxu0 0.0
        %867 = vmatprep.subr.mxu0 0.0
        %868 = vmatpush1.msra.mxu0 0.0
        %869 = vmatprep.subr.mxu0 0.0
        %870 = vmatpush1.msra.mxu0 0.0
        %871 = vmatprep.subr.mxu0 0.0
        %872 = vmatpush1.msra.mxu0 0.0
        %873 = vmatprep.subr.mxu0 0.0
        %874 = vmatpush1.msra.mxu0 0.0
        %875 = vmatprep.subr.mxu0 0.0
        %876 = vmatpush1.msra.mxu0 0.0
        %877 = vmatprep.subr.mxu0 0.0
        %878 = vmatpush1.msra.mxu0 0.0
        %879 = vmatprep.subr.mxu0 0.0
        %880 = vmatpush1.msra.mxu0 0.0
        %881 = vmatprep.subr.mxu0 0.0
        %882 = vmatpush1.msra.mxu0 0.0
        %883 = vmatprep.subr.mxu0 0.0
        %884 = vmatpush1.msra.mxu0 0.0
        %885 = vmatprep.subr.mxu0 0.0
        %886 = vmatpush1.msra.mxu0 0.0
        %887 = vmatprep.subr.mxu0 0.0
        %888 = vmatpush1.msra.mxu0 0.0
        %889 = vmatprep.subr.mxu0 0.0
        %890 = vmatpush1.msra.mxu0 0.0
        %891 = vmatprep.subr.mxu0 0.0
        %892 = vmatpush1.msra.mxu0 0.0
        %893 = vmatprep.subr.mxu0 0.0
        %894 = vmatpush1.msra.mxu0 0.0
        %895 = vmatprep.subr.mxu0 0.0
        %896 = vmatpush1.msra.mxu0 0.0
        %897 = vmatprep.subr.mxu0 0.0
        %898 = vmatpush1.msra.mxu0 0.0
        %899 = vmatprep.subr.mxu0 0.0
        %900 = vmatpush1.msra.mxu0 0.0
        %901 = vmatprep.subr.mxu0 0.0
        %902 = vmatpush1.msra.mxu0 0.0
        %903 = vmatprep.subr.mxu0 0.0
        %904 = vmatpush1.msra.mxu0 0.0
        %905 = vmatprep.subr.mxu0 0.0
        %906 = vmatpush1.msra.mxu0 0.0
        %907 = vmatprep.subr.mxu0 0.0
        %908 = vmatpush1.msra.mxu0 0.0
        %909 = vmatprep.subr.mxu0 0.0
        %910 = vmatpush1.msra.mxu0 0.0
        %911 = vmatprep.subr.mxu0 0.0
        %912 = vmatpush1.msra.mxu0 0.0
        %913 = vmatprep.subr.mxu0 0.0
        %914 = vmatpush1.msra.mxu0 0.0
        %915 = vmatprep.subr.mxu0 0.0
        %916 = vmatpush1.msra.mxu0 0.0
        %917 = vmatprep.mubr.f32.mxu0 0.0
        %918 = vmatmul.mubr.f32.gmra.mrb[0].mxu0 %v851
        %v919 = vpop.f32.mrb[0].mxu0
        %v920 = vadd.f32 0.0, %v919
        %v921 = vpop.f32.mrb[0].mxu0
        %922 = vdwg.mxu0
        %924 = vrot.lane.b32.xlu0 %v920, 32
        %v925 = vpop.permute.xlu0 %924
        %v927 = vsel %vm591, %v845, %v925
        %v929 = vsel %vm597, %v927, 0
        %931 = vmatprep.subr.mxu0 0.0
        %932 = vmatpush1.msra.mxu0 %v403
        %933 = vmatprep.subr.mxu0 0.0
        %934 = vmatpush1.msra.mxu0 %v404
        %935 = vmatprep.subr.mxu0 0.0
        %936 = vmatpush1.msra.mxu0 %v405
        %937 = vmatprep.subr.mxu0 0.0
        %938 = vmatpush1.msra.mxu0 %v406
        %939 = vmatprep.subr.mxu0 0.0
        %940 = vmatpush1.msra.mxu0 %v407
        %941 = vmatprep.subr.mxu0 0.0
        %942 = vmatpush1.msra.mxu0 %v408
        %943 = vmatprep.subr.mxu0 0.0
        %944 = vmatpush1.msra.mxu0 %v409
        %945 = vmatprep.subr.mxu0 0.0
        %946 = vmatpush1.msra.mxu0 %v410
        %947 = vmatprep.subr.mxu0 0.0
        %948 = vmatpush1.msra.mxu0 0.0
        %949 = vmatprep.subr.mxu0 0.0
        %950 = vmatpush1.msra.mxu0 0.0
        %951 = vmatprep.subr.mxu0 0.0
        %952 = vmatpush1.msra.mxu0 0.0
        %953 = vmatprep.subr.mxu0 0.0
        %954 = vmatpush1.msra.mxu0 0.0
        %955 = vmatprep.subr.mxu0 0.0
        %956 = vmatpush1.msra.mxu0 0.0
        %957 = vmatprep.subr.mxu0 0.0
        %958 = vmatpush1.msra.mxu0 0.0
        %959 = vmatprep.subr.mxu0 0.0
        %960 = vmatpush1.msra.mxu0 0.0
        %961 = vmatprep.subr.mxu0 0.0
        %962 = vmatpush1.msra.mxu0 0.0
        %963 = vmatprep.subr.mxu0 0.0
        %964 = vmatpush1.msra.mxu0 0.0
        %965 = vmatprep.subr.mxu0 0.0
        %966 = vmatpush1.msra.mxu0 0.0
        %967 = vmatprep.subr.mxu0 0.0
        %968 = vmatpush1.msra.mxu0 0.0
        %969 = vmatprep.subr.mxu0 0.0
        %970 = vmatpush1.msra.mxu0 0.0
        %971 = vmatprep.subr.mxu0 0.0
        %972 = vmatpush1.msra.mxu0 0.0
        %973 = vmatprep.subr.mxu0 0.0
        %974 = vmatpush1.msra.mxu0 0.0
        %975 = vmatprep.subr.mxu0 0.0
        %976 = vmatpush1.msra.mxu0 0.0
        %977 = vmatprep.subr.mxu0 0.0
        %978 = vmatpush1.msra.mxu0 0.0
        %979 = vmatprep.subr.mxu0 0.0
        %980 = vmatpush1.msra.mxu0 0.0
        %981 = vmatprep.subr.mxu0 0.0
        %982 = vmatpush1.msra.mxu0 0.0
        %983 = vmatprep.subr.mxu0 0.0
        %984 = vmatpush1.msra.mxu0 0.0
        %985 = vmatprep.subr.mxu0 0.0
        %986 = vmatpush1.msra.mxu0 0.0
        %987 = vmatprep.subr.mxu0 0.0
        %988 = vmatpush1.msra.mxu0 0.0
        %989 = vmatprep.subr.mxu0 0.0
        %990 = vmatpush1.msra.mxu0 0.0
        %991 = vmatprep.subr.mxu0 0.0
        %992 = vmatpush1.msra.mxu0 0.0
        %993 = vmatprep.subr.mxu0 0.0
        %994 = vmatpush1.msra.mxu0 0.0
        %995 = vmatprep.mubr.f32.mxu0 0.0
        %996 = vmatmul.mubr.f32.gmra.mrb[0].mxu0 %v929
        %v997 = vpop.f32.mrb[0].mxu0
        %v998 = vadd.f32 %v596, %v997
        %v999 = vpop.f32.mrb[0].mxu0
        %1000 = vdwg.mxu0
        %v1001 = vmax.f32 %v998, 0.0
        %v1002 = vmul.f32 %v1001, %v675
        %v1003 = vsel %vm591, %v1002, 0.0
        %1004 = vadd.xlane.f32.xlu0 %v1003
        %v1005 = vpop.xlane.xlu0 %1004
        %v1006 = vadd.f32 %v1005, %v683
        %v1007 = vxor.u32 %v1006, 2147483648
        %v1008 = vmul.f32 %v1007, 1.442695
        %v1009 = vpow.pop %v1008
        %v1010 = vadd.f32 %v1009, 1.0
        %v1011 = vrcp.pop %v1010
        %v1012 = vmul.f32 1.0, %v1011
        %1013 = vmatprep.subr.mxu0 %v362
        %1014 = vmatpush1.msra.mxu0 %v361
        %1015 = vmatprep.subr.mxu0 %v364
        %1016 = vmatpush1.msra.mxu0 %v363
        %1017 = vmatprep.subr.mxu0 %v366
        %1018 = vmatpush1.msra.mxu0 %v365
        %1019 = vmatprep.subr.mxu0 %v368
        %1020 = vmatpush1.msra.mxu0 %v367
        %1021 = vmatprep.subr.mxu0 %v370
        %1022 = vmatpush1.msra.mxu0 %v369
        %1023 = vmatprep.subr.mxu0 %v372
        %1024 = vmatpush1.msra.mxu0 %v371
        %1025 = vmatprep.subr.mxu0 %v374
        %1026 = vmatpush1.msra.mxu0 %v373
        %1027 = vmatprep.subr.mxu0 %v376
        %1028 = vmatpush1.msra.mxu0 %v375
        %1029 = vmatprep.subr.mxu0 0.0
        %1030 = vmatpush1.msra.mxu0 0.0
        %1031 = vmatprep.subr.mxu0 0.0
        %1032 = vmatpush1.msra.mxu0 0.0
        %1033 = vmatprep.subr.mxu0 0.0
        %1034 = vmatpush1.msra.mxu0 0.0
        %1035 = vmatprep.subr.mxu0 0.0
        %1036 = vmatpush1.msra.mxu0 0.0
        %1037 = vmatprep.subr.mxu0 0.0
        %1038 = vmatpush1.msra.mxu0 0.0
        %1039 = vmatprep.subr.mxu0 0.0
        %1040 = vmatpush1.msra.mxu0 0.0
        %1041 = vmatprep.subr.mxu0 0.0
        %1042 = vmatpush1.msra.mxu0 0.0
        %1043 = vmatprep.subr.mxu0 0.0
        %1044 = vmatpush1.msra.mxu0 0.0
        %1045 = vmatprep.subr.mxu0 0.0
        %1046 = vmatpush1.msra.mxu0 0.0
        %1047 = vmatprep.subr.mxu0 0.0
        %1048 = vmatpush1.msra.mxu0 0.0
        %1049 = vmatprep.subr.mxu0 0.0
        %1050 = vmatpush1.msra.mxu0 0.0
        %1051 = vmatprep.subr.mxu0 0.0
        %1052 = vmatpush1.msra.mxu0 0.0
        %1053 = vmatprep.subr.mxu0 0.0
        %1054 = vmatpush1.msra.mxu0 0.0
        %1055 = vmatprep.subr.mxu0 0.0
        %1056 = vmatpush1.msra.mxu0 0.0
        %1057 = vmatprep.subr.mxu0 0.0
        %1058 = vmatpush1.msra.mxu0 0.0
        %1059 = vmatprep.subr.mxu0 0.0
        %1060 = vmatpush1.msra.mxu0 0.0
        %1061 = vmatprep.subr.mxu0 0.0
        %1062 = vmatpush1.msra.mxu0 0.0
        %1063 = vmatprep.subr.mxu0 0.0
        %1064 = vmatpush1.msra.mxu0 0.0
        %1065 = vmatprep.subr.mxu0 0.0
        %1066 = vmatpush1.msra.mxu0 0.0
        %1067 = vmatprep.subr.mxu0 0.0
        %1068 = vmatpush1.msra.mxu0 0.0
        %1069 = vmatprep.subr.mxu0 0.0
        %1070 = vmatpush1.msra.mxu0 0.0
        %1071 = vmatprep.subr.mxu0 0.0
        %1072 = vmatpush1.msra.mxu0 0.0
        %1073 = vmatprep.subr.mxu0 0.0
        %1074 = vmatpush1.msra.mxu0 0.0
        %1075 = vmatprep.subr.mxu0 0.0
        %1076 = vmatpush1.msra.mxu0 0.0
        %1077 = vmatprep.mubr.f32.mxu0 0.0
        %1078 = vmatmul.mubr.f32.gmra.mrb[0].mxu0 %v929
        %v1079 = vpop.f32.mrb[0].mxu0
        %v1080 = vadd.f32 %v695, %v1079
        %v1081 = vpop.f32.mrb[0].mxu0
        %v1082 = vadd.f32 %v699, %v1081
        %1083 = vdwg.mxu0
        %s1084 = scalar_lea.vmem %s309, 16 [#allocation2]
        %v1085 = vld [vmem:[%s1084] sm:$0xff]
        %v1087 = vsel %vm439, %v1085, 0
        %1089 = vmatprep.subr.mxu0 0.0
        %1090 = vmatpush1.msra.mxu0 %v397
        %1091 = vmatprep.subr.mxu0 0.0
        %1092 = vmatpush1.msra.mxu0 %v398
        %1093 = vmatprep.subr.mxu0 0.0
        %1094 = vmatpush1.msra.mxu0 %v399
        %1095 = vmatprep.subr.mxu0 0.0
        %1096 = vmatpush1.msra.mxu0 0.0
        %1097 = vmatprep.subr.mxu0 0.0
        %1098 = vmatpush1.msra.mxu0 0.0
        %1099 = vmatprep.subr.mxu0 0.0
        %1100 = vmatpush1.msra.mxu0 0.0
        %1101 = vmatprep.subr.mxu0 0.0
        %1102 = vmatpush1.msra.mxu0 0.0
        %1103 = vmatprep.subr.mxu0 0.0
        %1104 = vmatpush1.msra.mxu0 0.0
        %1105 = vmatprep.subr.mxu0 0.0
        %1106 = vmatpush1.msra.mxu0 0.0
        %1107 = vmatprep.subr.mxu0 0.0
        %1108 = vmatpush1.msra.mxu0 0.0
        %1109 = vmatprep.subr.mxu0 0.0
        %1110 = vmatpush1.msra.mxu0 0.0
        %1111 = vmatprep.subr.mxu0 0.0
        %1112 = vmatpush1.msra.mxu0 0.0
        %1113 = vmatprep.subr.mxu0 0.0
        %1114 = vmatpush1.msra.mxu0 0.0
        %1115 = vmatprep.subr.mxu0 0.0
        %1116 = vmatpush1.msra.mxu0 0.0
        %1117 = vmatprep.subr.mxu0 0.0
        %1118 = vmatpush1.msra.mxu0 0.0
        %1119 = vmatprep.subr.mxu0 0.0
        %1120 = vmatpush1.msra.mxu0 0.0
        %1121 = vmatprep.subr.mxu0 0.0
        %1122 = vmatpush1.msra.mxu0 0.0
        %1123 = vmatprep.subr.mxu0 0.0
        %1124 = vmatpush1.msra.mxu0 0.0
        %1125 = vmatprep.subr.mxu0 0.0
        %1126 = vmatpush1.msra.mxu0 0.0
        %1127 = vmatprep.subr.mxu0 0.0
        %1128 = vmatpush1.msra.mxu0 0.0
        %1129 = vmatprep.subr.mxu0 0.0
        %1130 = vmatpush1.msra.mxu0 0.0
        %1131 = vmatprep.subr.mxu0 0.0
        %1132 = vmatpush1.msra.mxu0 0.0
        %1133 = vmatprep.subr.mxu0 0.0
        %1134 = vmatpush1.msra.mxu0 0.0
        %1135 = vmatprep.subr.mxu0 0.0
        %1136 = vmatpush1.msra.mxu0 0.0
        %1137 = vmatprep.subr.mxu0 0.0
        %1138 = vmatpush1.msra.mxu0 0.0
        %1139 = vmatprep.subr.mxu0 0.0
        %1140 = vmatpush1.msra.mxu0 0.0
        %1141 = vmatprep.subr.mxu0 0.0
        %1142 = vmatpush1.msra.mxu0 0.0
        %1143 = vmatprep.subr.mxu0 0.0
        %1144 = vmatpush1.msra.mxu0 0.0
        %1145 = vmatprep.subr.mxu0 0.0
        %1146 = vmatpush1.msra.mxu0 0.0
        %1147 = vmatprep.subr.mxu0 0.0
        %1148 = vmatpush1.msra.mxu0 0.0
        %1149 = vmatprep.subr.mxu0 0.0
        %1150 = vmatpush1.msra.mxu0 0.0
        %1151 = vmatprep.subr.mxu0 0.0
        %1152 = vmatpush1.msra.mxu0 0.0
        %1153 = vmatprep.mubr.f32.mxu0 0.0
        %1154 = vmatmul.mubr.f32.gmra.mrb[0].mxu0 %v1087
        %v1155 = vpop.f32.mrb[0].mxu0
        %v1156 = vadd.f32 0.0, %v1155
        %v1157 = vpop.f32.mrb[0].mxu0
        %1158 = vdwg.mxu0
        %s1159 = scalar_lea.vmem %s316, 16 [#allocation3]
        %v1160 = vld [vmem:[%s1159] sm:$0xff]
        %v1162 = vsel %vm439, %v1160, 0
        %1164 = vmatprep.subr.mxu0 0.0
        %1165 = vmatpush1.msra.mxu0 %v400
        %1166 = vmatprep.subr.mxu0 0.0
        %1167 = vmatpush1.msra.mxu0 %v401
        %1168 = vmatprep.subr.mxu0 0.0
        %1169 = vmatpush1.msra.mxu0 %v402
        %1170 = vmatprep.subr.mxu0 0.0
        %1171 = vmatpush1.msra.mxu0 0.0
        %1172 = vmatprep.subr.mxu0 0.0
        %1173 = vmatpush1.msra.mxu0 0.0
        %1174 = vmatprep.subr.mxu0 0.0
        %1175 = vmatpush1.msra.mxu0 0.0
        %1176 = vmatprep.subr.mxu0 0.0
        %1177 = vmatpush1.msra.mxu0 0.0
        %1178 = vmatprep.subr.mxu0 0.0
        %1179 = vmatpush1.msra.mxu0 0.0
        %1180 = vmatprep.subr.mxu0 0.0
        %1181 = vmatpush1.msra.mxu0 0.0
        %1182 = vmatprep.subr.mxu0 0.0
        %1183 = vmatpush1.msra.mxu0 0.0
        %1184 = vmatprep.subr.mxu0 0.0
        %1185 = vmatpush1.msra.mxu0 0.0
        %1186 = vmatprep.subr.mxu0 0.0
        %1187 = vmatpush1.msra.mxu0 0.0
        %1188 = vmatprep.subr.mxu0 0.0
        %1189 = vmatpush1.msra.mxu0 0.0
        %1190 = vmatprep.subr.mxu0 0.0
        %1191 = vmatpush1.msra.mxu0 0.0
        %1192 = vmatprep.subr.mxu0 0.0
        %1193 = vmatpush1.msra.mxu0 0.0
        %1194 = vmatprep.subr.mxu0 0.0
        %1195 = vmatpush1.msra.mxu0 0.0
        %1196 = vmatprep.subr.mxu0 0.0
        %1197 = vmatpush1.msra.mxu0 0.0
        %1198 = vmatprep.subr.mxu0 0.0
        %1199 = vmatpush1.msra.mxu0 0.0
        %1200 = vmatprep.subr.mxu0 0.0
        %1201 = vmatpush1.msra.mxu0 0.0
        %1202 = vmatprep.subr.mxu0 0.0
        %1203 = vmatpush1.msra.mxu0 0.0
        %1204 = vmatprep.subr.mxu0 0.0
        %1205 = vmatpush1.msra.mxu0 0.0
        %1206 = vmatprep.subr.mxu0 0.0
        %1207 = vmatpush1.msra.mxu0 0.0
        %1208 = vmatprep.subr.mxu0 0.0
        %1209 = vmatpush1.msra.mxu0 0.0
        %1210 = vmatprep.subr.mxu0 0.0
        %1211 = vmatpush1.msra.mxu0 0.0
        %1212 = vmatprep.subr.mxu0 0.0
        %1213 = vmatpush1.msra.mxu0 0.0
        %1214 = vmatprep.subr.mxu0 0.0
        %1215 = vmatpush1.msra.mxu0 0.0
        %1216 = vmatprep.subr.mxu0 0.0
        %1217 = vmatpush1.msra.mxu0 0.0
        %1218 = vmatprep.subr.mxu0 0.0
        %1219 = vmatpush1.msra.mxu0 0.0
        %1220 = vmatprep.subr.mxu0 0.0
        %1221 = vmatpush1.msra.mxu0 0.0
        %1222 = vmatprep.subr.mxu0 0.0
        %1223 = vmatpush1.msra.mxu0 0.0
        %1224 = vmatprep.subr.mxu0 0.0
        %1225 = vmatpush1.msra.mxu0 0.0
        %1226 = vmatprep.subr.mxu0 0.0
        %1227 = vmatpush1.msra.mxu0 0.0
        %1228 = vmatprep.mubr.f32.mxu0 0.0
        %1229 = vmatmul.mubr.f32.gmra.mrb[0].mxu0 %v1162
        %v1230 = vpop.f32.mrb[0].mxu0
        %v1231 = vadd.f32 0.0, %v1230
        %v1232 = vpop.f32.mrb[0].mxu0
        %1233 = vdwg.mxu0
        %1235 = vrot.lane.b32.xlu0 %v1231, 32
        %v1236 = vpop.permute.xlu0 %1235
        %v1238 = vsel %vm591, %v1156, %v1236
        %v1240 = vsel %vm597, %v1238, 0
        %1242 = vmatprep.subr.mxu0 0.0
        %1243 = vmatpush1.msra.mxu0 %v403
        %1244 = vmatprep.subr.mxu0 0.0
        %1245 = vmatpush1.msra.mxu0 %v404
        %1246 = vmatprep.subr.mxu0 0.0
        %1247 = vmatpush1.msra.mxu0 %v405
        %1248 = vmatprep.subr.mxu0 0.0
        %1249 = vmatpush1.msra.mxu0 %v406
        %1250 = vmatprep.subr.mxu0 0.0
        %1251 = vmatpush1.msra.mxu0 %v407
        %1252 = vmatprep.subr.mxu0 0.0
        %1253 = vmatpush1.msra.mxu0 %v408
        %1254 = vmatprep.subr.mxu0 0.0
        %1255 = vmatpush1.msra.mxu0 %v409
        %1256 = vmatprep.subr.mxu0 0.0
        %1257 = vmatpush1.msra.mxu0 %v410
        %1258 = vmatprep.subr.mxu0 0.0
        %1259 = vmatpush1.msra.mxu0 0.0
        %1260 = vmatprep.subr.mxu0 0.0
        %1261 = vmatpush1.msra.mxu0 0.0
        %1262 = vmatprep.subr.mxu0 0.0
        %1263 = vmatpush1.msra.mxu0 0.0
        %1264 = vmatprep.subr.mxu0 0.0
        %1265 = vmatpush1.msra.mxu0 0.0
        %1266 = vmatprep.subr.mxu0 0.0
        %1267 = vmatpush1.msra.mxu0 0.0
        %1268 = vmatprep.subr.mxu0 0.0
        %1269 = vmatpush1.msra.mxu0 0.0
        %1270 = vmatprep.subr.mxu0 0.0
        %1271 = vmatpush1.msra.mxu0 0.0
        %1272 = vmatprep.subr.mxu0 0.0
        %1273 = vmatpush1.msra.mxu0 0.0
        %1274 = vmatprep.subr.mxu0 0.0
        %1275 = vmatpush1.msra.mxu0 0.0
        %1276 = vmatprep.subr.mxu0 0.0
        %1277 = vmatpush1.msra.mxu0 0.0
        %1278 = vmatprep.subr.mxu0 0.0
        %1279 = vmatpush1.msra.mxu0 0.0
        %1280 = vmatprep.subr.mxu0 0.0
        %1281 = vmatpush1.msra.mxu0 0.0
        %1282 = vmatprep.subr.mxu0 0.0
        %1283 = vmatpush1.msra.mxu0 0.0
        %1284 = vmatprep.subr.mxu0 0.0
        %1285 = vmatpush1.msra.mxu0 0.0
        %1286 = vmatprep.subr.mxu0 0.0
        %1287 = vmatpush1.msra.mxu0 0.0
        %1288 = vmatprep.subr.mxu0 0.0
        %1289 = vmatpush1.msra.mxu0 0.0
        %1290 = vmatprep.subr.mxu0 0.0
        %1291 = vmatpush1.msra.mxu0 0.0
        %1292 = vmatprep.subr.mxu0 0.0
        %1293 = vmatpush1.msra.mxu0 0.0
        %1294 = vmatprep.subr.mxu0 0.0
        %1295 = vmatpush1.msra.mxu0 0.0
        %1296 = vmatprep.subr.mxu0 0.0
        %1297 = vmatpush1.msra.mxu0 0.0
        %1298 = vmatprep.subr.mxu0 0.0
        %1299 = vmatpush1.msra.mxu0 0.0
        %1300 = vmatprep.subr.mxu0 0.0
        %1301 = vmatpush1.msra.mxu0 0.0
        %1302 = vmatprep.subr.mxu0 0.0
        %1303 = vmatpush1.msra.mxu0 0.0
        %1304 = vmatprep.subr.mxu0 0.0
        %1305 = vmatpush1.msra.mxu0 0.0
        %1306 = vmatprep.mubr.f32.mxu0 0.0
        %1307 = vmatmul.mubr.f32.gmra.mrb[0].mxu0 %v1240
        %v1308 = vpop.f32.mrb[0].mxu0
        %v1309 = vadd.f32 %v596, %v1308
        %v1310 = vpop.f32.mrb[0].mxu0
        %1311 = vdwg.mxu0
        %v1312 = vmax.f32 %v1309, 0.0
        %v1313 = vmul.f32 %v1312, %v675
        %v1314 = vsel %vm591, %v1313, 0.0
        %1315 = vadd.xlane.f32.xlu0 %v1314
        %v1316 = vpop.xlane.xlu0 %1315
        %v1317 = vadd.f32 %v1316, %v683
        %v1318 = vxor.u32 %v1317, 2147483648
        %v1319 = vmul.f32 %v1318, 1.442695
        %v1320 = vpow.pop %v1319
        %v1321 = vadd.f32 %v1320, 1.0
        %v1322 = vrcp.pop %v1321
        %v1323 = vmul.f32 1.0, %v1322
        %1324 = vmatprep.subr.mxu0 %v362
        %1325 = vmatpush1.msra.mxu0 %v361
        %1326 = vmatprep.subr.mxu0 %v364
        %1327 = vmatpush1.msra.mxu0 %v363
        %1328 = vmatprep.subr.mxu0 %v366
        %1329 = vmatpush1.msra.mxu0 %v365
        %1330 = vmatprep.subr.mxu0 %v368
        %1331 = vmatpush1.msra.mxu0 %v367
        %1332 = vmatprep.subr.mxu0 %v370
        %1333 = vmatpush1.msra.mxu0 %v369
        %1334 = vmatprep.subr.mxu0 %v372
        %1335 = vmatpush1.msra.mxu0 %v371
        %1336 = vmatprep.subr.mxu0 %v374
        %1337 = vmatpush1.msra.mxu0 %v373
        %1338 = vmatprep.subr.mxu0 %v376
        %1339 = vmatpush1.msra.mxu0 %v375
        %1340 = vmatprep.subr.mxu0 0.0
        %1341 = vmatpush1.msra.mxu0 0.0
        %1342 = vmatprep.subr.mxu0 0.0
        %1343 = vmatpush1.msra.mxu0 0.0
        %1344 = vmatprep.subr.mxu0 0.0
        %1345 = vmatpush1.msra.mxu0 0.0
        %1346 = vmatprep.subr.mxu0 0.0
        %1347 = vmatpush1.msra.mxu0 0.0
        %1348 = vmatprep.subr.mxu0 0.0
        %1349 = vmatpush1.msra.mxu0 0.0
        %1350 = vmatprep.subr.mxu0 0.0
        %1351 = vmatpush1.msra.mxu0 0.0
        %1352 = vmatprep.subr.mxu0 0.0
        %1353 = vmatpush1.msra.mxu0 0.0
        %1354 = vmatprep.subr.mxu0 0.0
        %1355 = vmatpush1.msra.mxu0 0.0
        %1356 = vmatprep.subr.mxu0 0.0
        %1357 = vmatpush1.msra.mxu0 0.0
        %1358 = vmatprep.subr.mxu0 0.0
        %1359 = vmatpush1.msra.mxu0 0.0
        %1360 = vmatprep.subr.mxu0 0.0
        %1361 = vmatpush1.msra.mxu0 0.0
        %1362 = vmatprep.subr.mxu0 0.0
        %1363 = vmatpush1.msra.mxu0 0.0
        %1364 = vmatprep.subr.mxu0 0.0
        %1365 = vmatpush1.msra.mxu0 0.0
        %1366 = vmatprep.subr.mxu0 0.0
        %1367 = vmatpush1.msra.mxu0 0.0
        %1368 = vmatprep.subr.mxu0 0.0
        %1369 = vmatpush1.msra.mxu0 0.0
        %1370 = vmatprep.subr.mxu0 0.0
        %1371 = vmatpush1.msra.mxu0 0.0
        %1372 = vmatprep.subr.mxu0 0.0
        %1373 = vmatpush1.msra.mxu0 0.0
        %1374 = vmatprep.subr.mxu0 0.0
        %1375 = vmatpush1.msra.mxu0 0.0
        %1376 = vmatprep.subr.mxu0 0.0
        %1377 = vmatpush1.msra.mxu0 0.0
        %1378 = vmatprep.subr.mxu0 0.0
        %1379 = vmatpush1.msra.mxu0 0.0
        %1380 = vmatprep.subr.mxu0 0.0
        %1381 = vmatpush1.msra.mxu0 0.0
        %1382 = vmatprep.subr.mxu0 0.0
        %1383 = vmatpush1.msra.mxu0 0.0
        %1384 = vmatprep.subr.mxu0 0.0
        %1385 = vmatpush1.msra.mxu0 0.0
        %1386 = vmatprep.subr.mxu0 0.0
        %1387 = vmatpush1.msra.mxu0 0.0
        %1388 = vmatprep.mubr.f32.mxu0 0.0
        %1389 = vmatmul.mubr.f32.gmra.mrb[0].mxu0 %v1240
        %v1390 = vpop.f32.mrb[0].mxu0
        %v1391 = vadd.f32 %v695, %v1390
        %v1392 = vpop.f32.mrb[0].mxu0
        %v1393 = vadd.f32 %v699, %v1392
        %1394 = vdwg.mxu0
        %v1395 = vmul.f32 %v690, %v437
        %1397 = vrot.lane.b32.xlu0 %v437, 127
        %v1398 = vpop.permute.xlu0 %1397
        %v1400 = vmul.f32 %v1012, %v1398
        %v1401 = vadd.f32 %v1395, %v1400
        %1402 = vrot.lane.b32.xlu0 %v437, 126
        %v1403 = vpop.permute.xlu0 %1402
        %v1405 = vmul.f32 %v1323, %v1403
        %v1406 = vadd.f32 %v1401, %v1405
        %v1407 = vsub.f32 %v690, %v1406
        %v1408 = vand.u32 2147483647, %v1407
        %vm1409 = vcmp.le.f32.partialorder %v1408, 0.5
        %v1410 = vsel %vm1409, 1, 0
        %v1411 = vcvt.s32.f32 %v1410
        %v1412 = vmax.f32 %v437, %v1411
        %v1413 = vmul.f32 %v436, %v1412
        %v1414 = vsub.f32 %v1012, %v1406
        %v1415 = vand.u32 2147483647, %v1414
        %vm1416 = vcmp.le.f32.partialorder %v1415, 0.5
        %v1417 = vsel %vm1416, 1, 0
        %v1418 = vcvt.s32.f32 %v1417
        %1420 = vrot.lane.b32.xlu0 %v1418, 1
        %v1421 = vpop.permute.xlu0 %1420
        %v1423 = vmax.f32 %v437, %v1421
        %v1424 = vmul.f32 %v436, %v1423
        %v1425 = vsub.f32 %v1323, %v1406
        %v1426 = vand.u32 2147483647, %v1425
        %vm1427 = vcmp.le.f32.partialorder %v1426, 0.5
        %v1428 = vsel %vm1427, 1, 0
        %v1429 = vcvt.s32.f32 %v1428
        %1431 = vrot.lane.b32.xlu0 %v1429, 2
        %v1432 = vpop.permute.xlu0 %1431
        %v1434 = vmax.f32 %v437, %v1432
        %v1435 = vmul.f32 %v436, %v1434
        %v1437 = vlaneseq
        %v1438 = vshrl.u32 %v1437, 7
        %v1439 = vsub.s32 0, %v1438
        %v1440 = vrot.slane %v396, %v1439
        %v1441 = vlaneseq
        %v1442 = vshrl.u32 %v1441, 7
        %v1443 = vsub.s32 1, %v1442
        %v1444 = vrot.slane %v396, %v1443
        %v1448 = vsel %vm597, 0.0, 0
        %1450 = vmatprep.subr.mxu0 %v378
        %1451 = vmatpush1.msra.mxu0 %v377
        %1452 = vmatprep.subr.mxu0 %v380
        %1453 = vmatpush1.msra.mxu0 %v379
        %1454 = vmatprep.subr.mxu0 %v382
        %1455 = vmatpush1.msra.mxu0 %v381
        %1456 = vmatprep.subr.mxu0 %v384
        %1457 = vmatpush1.msra.mxu0 %v383
        %1458 = vmatprep.subr.mxu0 %v386
        %1459 = vmatpush1.msra.mxu0 %v385
        %1460 = vmatprep.subr.mxu0 %v388
        %1461 = vmatpush1.msra.mxu0 %v387
        %1462 = vmatprep.subr.mxu0 %v390
        %1463 = vmatpush1.msra.mxu0 %v389
        %1464 = vmatprep.subr.mxu0 %v392
        %1465 = vmatpush1.msra.mxu0 %v391
        %1466 = vmatprep.subr.mxu0 0.0
        %1467 = vmatpush1.msra.mxu0 0.0
        %1468 = vmatprep.subr.mxu0 0.0
        %1469 = vmatpush1.msra.mxu0 0.0
        %1470 = vmatprep.subr.mxu0 0.0
        %1471 = vmatpush1.msra.mxu0 0.0
        %1472 = vmatprep.subr.mxu0 0.0
        %1473 = vmatpush1.msra.mxu0 0.0
        %1474 = vmatprep.subr.mxu0 0.0
        %1475 = vmatpush1.msra.mxu0 0.0
        %1476 = vmatprep.subr.mxu0 0.0
        %1477 = vmatpush1.msra.mxu0 0.0
        %1478 = vmatprep.subr.mxu0 0.0
        %1479 = vmatpush1.msra.mxu0 0.0
        %1480 = vmatprep.subr.mxu0 0.0
        %1481 = vmatpush1.msra.mxu0 0.0
        %1482 = vmatprep.subr.mxu0 0.0
        %1483 = vmatpush1.msra.mxu0 0.0
        %1484 = vmatprep.subr.mxu0 0.0
        %1485 = vmatpush1.msra.mxu0 0.0
        %1486 = vmatprep.subr.mxu0 0.0
        %1487 = vmatpush1.msra.mxu0 0.0
        %1488 = vmatprep.subr.mxu0 0.0
        %1489 = vmatpush1.msra.mxu0 0.0
        %1490 = vmatprep.subr.mxu0 0.0
        %1491 = vmatpush1.msra.mxu0 0.0
        %1492 = vmatprep.subr.mxu0 0.0
        %1493 = vmatpush1.msra.mxu0 0.0
        %1494 = vmatprep.subr.mxu0 0.0
        %1495 = vmatpush1.msra.mxu0 0.0
        %1496 = vmatprep.subr.mxu0 0.0
        %1497 = vmatpush1.msra.mxu0 0.0
        %1498 = vmatprep.subr.mxu0 0.0
        %1499 = vmatpush1.msra.mxu0 0.0
        %1500 = vmatprep.subr.mxu0 0.0
        %1501 = vmatpush1.msra.mxu0 0.0
        %1502 = vmatprep.subr.mxu0 0.0
        %1503 = vmatpush1.msra.mxu0 0.0
        %1504 = vmatprep.subr.mxu0 0.0
        %1505 = vmatpush1.msra.mxu0 0.0
        %1506 = vmatprep.subr.mxu0 0.0
        %1507 = vmatpush1.msra.mxu0 0.0
        %1508 = vmatprep.subr.mxu0 0.0
        %1509 = vmatpush1.msra.mxu0 0.0
        %1510 = vmatprep.subr.mxu0 0.0
        %1511 = vmatpush1.msra.mxu0 0.0
        %1512 = vmatprep.subr.mxu0 0.0
        %1513 = vmatpush1.msra.mxu0 0.0
        %1514 = vmatprep.mubr.f32.mxu0 0.0
        %1515 = vmatmul.mubr.f32.gmra.mrb[0].mxu0 %v1448
        %v1516 = vpop.f32.mrb[0].mxu0
        %v1517 = vadd.f32 %v1440, %v1516
        %v1518 = vpop.f32.mrb[0].mxu0
        %v1519 = vadd.f32 %v1444, %v1518
        %1520 = vdwg.mxu0
        %v1521 = vadd.f32 %v769, %v1517
        %v1522 = vxor.u32 %v1521, 2147483648
        %v1523 = vmul.f32 %v1522, 1.442695
        %v1524 = vpow.pop %v1523
        %v1525 = vadd.f32 %v1524, 1.0
        %v1526 = vrcp.pop %v1525
        %v1527 = vmul.f32 1.0, %v1526
        %v1528 = vmul.f32 %v1527, %v1519
        %v1529 = vadd.f32 %v771, %v1528
        %v1530 = vtanh.pop %v1529
        %v1531 = vsub.f32 1.0, %v1527
        %1533 = vrot.lane.b32.xlu0 %v1530, 64
        %v1534 = vpop.permute.xlu0 %1533
        %v1536 = vmul.f32 %v1531, %v1534
        %v1537 = vmul.f32 %v1527, 0.0
        %v1538 = vadd.f32 %v1536, %v1537
        %1540 = vset.pattern.permute.xlu0 0
        %1541 = vperm.xlu0 %1540, %v1413
        %v1542 = vpop.permute.xlu0 %1541
        %v1544 = vmul.f32 %v1542, %v1538
        %v1545 = vsub.f32 1.0, %v1413
        %1547 = vset.pattern.permute.xlu0 0
        %1548 = vperm.xlu0 %1547, %v1545
        %v1549 = vpop.permute.xlu0 %1548
        %v1551 = vmul.f32 %v1549, 0.0
        %v1552 = vadd.f32 %v1544, %v1551
        %1554 = vrot.lane.b32.xlu0 %v1552, 64
        %v1555 = vpop.permute.xlu0 %1554
        %v1556 = vsel %vm597, %v1555, 0
        %1558 = vmatprep.subr.mxu0 %v378
        %1559 = vmatpush1.msra.mxu0 %v377
        %1560 = vmatprep.subr.mxu0 %v380
        %1561 = vmatpush1.msra.mxu0 %v379
        %1562 = vmatprep.subr.mxu0 %v382
        %1563 = vmatpush1.msra.mxu0 %v381
        %1564 = vmatprep.subr.mxu0 %v384
        %1565 = vmatpush1.msra.mxu0 %v383
        %1566 = vmatprep.subr.mxu0 %v386
        %1567 = vmatpush1.msra.mxu0 %v385
        %1568 = vmatprep.subr.mxu0 %v388
        %1569 = vmatpush1.msra.mxu0 %v387
        %1570 = vmatprep.subr.mxu0 %v390
        %1571 = vmatpush1.msra.mxu0 %v389
        %1572 = vmatprep.subr.mxu0 %v392
        %1573 = vmatpush1.msra.mxu0 %v391
        %1574 = vmatprep.subr.mxu0 0.0
        %1575 = vmatpush1.msra.mxu0 0.0
        %1576 = vmatprep.subr.mxu0 0.0
        %1577 = vmatpush1.msra.mxu0 0.0
        %1578 = vmatprep.subr.mxu0 0.0
        %1579 = vmatpush1.msra.mxu0 0.0
        %1580 = vmatprep.subr.mxu0 0.0
        %1581 = vmatpush1.msra.mxu0 0.0
        %1582 = vmatprep.subr.mxu0 0.0
        %1583 = vmatpush1.msra.mxu0 0.0
        %1584 = vmatprep.subr.mxu0 0.0
        %1585 = vmatpush1.msra.mxu0 0.0
        %1586 = vmatprep.subr.mxu0 0.0
        %1587 = vmatpush1.msra.mxu0 0.0
        %1588 = vmatprep.subr.mxu0 0.0
        %1589 = vmatpush1.msra.mxu0 0.0
        %1590 = vmatprep.subr.mxu0 0.0
        %1591 = vmatpush1.msra.mxu0 0.0
        %1592 = vmatprep.subr.mxu0 0.0
        %1593 = vmatpush1.msra.mxu0 0.0
        %1594 = vmatprep.subr.mxu0 0.0
        %1595 = vmatpush1.msra.mxu0 0.0
        %1596 = vmatprep.subr.mxu0 0.0
        %1597 = vmatpush1.msra.mxu0 0.0
        %1598 = vmatprep.subr.mxu0 0.0
        %1599 = vmatpush1.msra.mxu0 0.0
        %1600 = vmatprep.subr.mxu0 0.0
        %1601 = vmatpush1.msra.mxu0 0.0
        %1602 = vmatprep.subr.mxu0 0.0
        %1603 = vmatpush1.msra.mxu0 0.0
        %1604 = vmatprep.subr.mxu0 0.0
        %1605 = vmatpush1.msra.mxu0 0.0
        %1606 = vmatprep.subr.mxu0 0.0
        %1607 = vmatpush1.msra.mxu0 0.0
        %1608 = vmatprep.subr.mxu0 0.0
        %1609 = vmatpush1.msra.mxu0 0.0
        %1610 = vmatprep.subr.mxu0 0.0
        %1611 = vmatpush1.msra.mxu0 0.0
        %1612 = vmatprep.subr.mxu0 0.0
        %1613 = vmatpush1.msra.mxu0 0.0
        %1614 = vmatprep.subr.mxu0 0.0
        %1615 = vmatpush1.msra.mxu0 0.0
        %1616 = vmatprep.subr.mxu0 0.0
        %1617 = vmatpush1.msra.mxu0 0.0
        %1618 = vmatprep.subr.mxu0 0.0
        %1619 = vmatpush1.msra.mxu0 0.0
        %1620 = vmatprep.subr.mxu0 0.0
        %1621 = vmatpush1.msra.mxu0 0.0
        %1622 = vmatprep.mubr.f32.mxu0 0.0
        %1623 = vmatmul.mubr.f32.gmra.mrb[0].mxu0 %v1556
        %v1624 = vpop.f32.mrb[0].mxu0
        %v1625 = vadd.f32 %v1440, %v1624
        %v1626 = vpop.f32.mrb[0].mxu0
        %v1627 = vadd.f32 %v1444, %v1626
        %1628 = vdwg.mxu0
        %v1629 = vadd.f32 %v1080, %v1625
        %v1630 = vxor.u32 %v1629, 2147483648
        %v1631 = vmul.f32 %v1630, 1.442695
        %v1632 = vpow.pop %v1631
        %v1633 = vadd.f32 %v1632, 1.0
        %v1634 = vrcp.pop %v1633
        %v1635 = vmul.f32 1.0, %v1634
        %v1636 = vmul.f32 %v1635, %v1627
        %v1637 = vadd.f32 %v1082, %v1636
        %v1638 = vtanh.pop %v1637
        %v1639 = vsub.f32 1.0, %v1635
        %1641 = vrot.lane.b32.xlu0 %v1638, 64
        %v1642 = vpop.permute.xlu0 %1641
        %v1644 = vmul.f32 %v1639, %v1642
        %v1645 = vmul.f32 %v1635, %v1552
        %v1646 = vadd.f32 %v1644, %v1645
        %1648 = vset.pattern.permute.xlu0 1
        %1649 = vperm.xlu0 %1648, %v1424
        %v1650 = vpop.permute.xlu0 %1649
        %v1652 = vmul.f32 %v1650, %v1646
        %v1653 = vsub.f32 1.0, %v1424
        %1655 = vset.pattern.permute.xlu0 1
        %1656 = vperm.xlu0 %1655, %v1653
        %v1657 = vpop.permute.xlu0 %1656
        %v1659 = vmul.f32 %v1657, %v1552
        %v1660 = vadd.f32 %v1652, %v1659
        %1662 = vrot.lane.b32.xlu0 %v1660, 64
        %v1663 = vpop.permute.xlu0 %1662
        %v1664 = vsel %vm597, %v1663, 0
        %1666 = vmatprep.subr.mxu0 %v378
        %1667 = vmatpush1.msra.mxu0 %v377
        %1668 = vmatprep.subr.mxu0 %v380
        %1669 = vmatpush1.msra.mxu0 %v379
        %1670 = vmatprep.subr.mxu0 %v382
        %1671 = vmatpush1.msra.mxu0 %v381
        %1672 = vmatprep.subr.mxu0 %v384
        %1673 = vmatpush1.msra.mxu0 %v383
        %1674 = vmatprep.subr.mxu0 %v386
        %1675 = vmatpush1.msra.mxu0 %v385
        %1676 = vmatprep.subr.mxu0 %v388
        %1677 = vmatpush1.msra.mxu0 %v387
        %1678 = vmatprep.subr.mxu0 %v390
        %1679 = vmatpush1.msra.mxu0 %v389
        %1680 = vmatprep.subr.mxu0 %v392
        %1681 = vmatpush1.msra.mxu0 %v391
        %1682 = vmatprep.subr.mxu0 0.0
        %1683 = vmatpush1.msra.mxu0 0.0
        %1684 = vmatprep.subr.mxu0 0.0
        %1685 = vmatpush1.msra.mxu0 0.0
        %1686 = vmatprep.subr.mxu0 0.0
        %1687 = vmatpush1.msra.mxu0 0.0
        %1688 = vmatprep.subr.mxu0 0.0
        %1689 = vmatpush1.msra.mxu0 0.0
        %1690 = vmatprep.subr.mxu0 0.0
        %1691 = vmatpush1.msra.mxu0 0.0
        %1692 = vmatprep.subr.mxu0 0.0
        %1693 = vmatpush1.msra.mxu0 0.0
        %1694 = vmatprep.subr.mxu0 0.0
        %1695 = vmatpush1.msra.mxu0 0.0
        %1696 = vmatprep.subr.mxu0 0.0
        %1697 = vmatpush1.msra.mxu0 0.0
        %1698 = vmatprep.subr.mxu0 0.0
        %1699 = vmatpush1.msra.mxu0 0.0
        %1700 = vmatprep.subr.mxu0 0.0
        %1701 = vmatpush1.msra.mxu0 0.0
        %1702 = vmatprep.subr.mxu0 0.0
        %1703 = vmatpush1.msra.mxu0 0.0
        %1704 = vmatprep.subr.mxu0 0.0
        %1705 = vmatpush1.msra.mxu0 0.0
        %1706 = vmatprep.subr.mxu0 0.0
        %1707 = vmatpush1.msra.mxu0 0.0
        %1708 = vmatprep.subr.mxu0 0.0
        %1709 = vmatpush1.msra.mxu0 0.0
        %1710 = vmatprep.subr.mxu0 0.0
        %1711 = vmatpush1.msra.mxu0 0.0
        %1712 = vmatprep.subr.mxu0 0.0
        %1713 = vmatpush1.msra.mxu0 0.0
        %1714 = vmatprep.subr.mxu0 0.0
        %1715 = vmatpush1.msra.mxu0 0.0
        %1716 = vmatprep.subr.mxu0 0.0
        %1717 = vmatpush1.msra.mxu0 0.0
        %1718 = vmatprep.subr.mxu0 0.0
        %1719 = vmatpush1.msra.mxu0 0.0
        %1720 = vmatprep.subr.mxu0 0.0
        %1721 = vmatpush1.msra.mxu0 0.0
        %1722 = vmatprep.subr.mxu0 0.0
        %1723 = vmatpush1.msra.mxu0 0.0
        %1724 = vmatprep.subr.mxu0 0.0
        %1725 = vmatpush1.msra.mxu0 0.0
        %1726 = vmatprep.subr.mxu0 0.0
        %1727 = vmatpush1.msra.mxu0 0.0
        %1728 = vmatprep.subr.mxu0 0.0
        %1729 = vmatpush1.msra.mxu0 0.0
        %1730 = vmatprep.mubr.f32.mxu0 0.0
        %1731 = vmatmul.mubr.f32.gmra.mrb[0].mxu0 %v1664
        %v1732 = vpop.f32.mrb[0].mxu0
        %v1733 = vadd.f32 %v1440, %v1732
        %v1734 = vpop.f32.mrb[0].mxu0
        %v1735 = vadd.f32 %v1444, %v1734
        %1736 = vdwg.mxu0
        %v1737 = vadd.f32 %v1391, %v1733
        %v1738 = vxor.u32 %v1737, 2147483648
        %v1739 = vmul.f32 %v1738, 1.442695
        %v1740 = vpow.pop %v1739
        %v1741 = vadd.f32 %v1740, 1.0
        %v1742 = vrcp.pop %v1741
        %v1743 = vmul.f32 1.0, %v1742
        %v1744 = vmul.f32 %v1743, %v1735
        %v1745 = vadd.f32 %v1393, %v1744
        %v1746 = vtanh.pop %v1745
        %v1747 = vsub.f32 1.0, %v1743
        %1749 = vrot.lane.b32.xlu0 %v1746, 64
        %v1750 = vpop.permute.xlu0 %1749
        %v1752 = vmul.f32 %v1747, %v1750
        %v1753 = vmul.f32 %v1743, %v1660
        %v1754 = vadd.f32 %v1752, %v1753
        %1756 = vset.pattern.permute.xlu0 2
        %1757 = vperm.xlu0 %1756, %v1435
        %v1758 = vpop.permute.xlu0 %1757
        %v1760 = vmul.f32 %v1758, %v1754
        %v1761 = vsub.f32 1.0, %v1435
        %1763 = vset.pattern.permute.xlu0 2
        %1764 = vperm.xlu0 %1763, %v1761
        %v1765 = vpop.permute.xlu0 %1764
        %v1767 = vmul.f32 %v1765, %v1660
        %v1768 = vadd.f32 %v1760, %v1767
        %v1769 = vmax.f32 %v1768, 0.0
        %v1770 = vlaneseq
        %v1771 = vshrl.u32 %v1770, 7
        %v1772 = vsub.s32 3, %v1771
        %v1773 = vrot.slane %v435, %v1772
        %1775 = vrot.lane.b32.xlu0 %v1769, 64
        %v1776 = vpop.permute.xlu0 %1775
        %v1777 = vsel %vm597, %v1776, 0
        %1779 = vmatprep.subr.mxu0 0.0
        %1780 = vmatpush1.msra.mxu0 %v411
        %1781 = vmatprep.subr.mxu0 0.0
        %1782 = vmatpush1.msra.mxu0 %v412
        %1783 = vmatprep.subr.mxu0 0.0
        %1784 = vmatpush1.msra.mxu0 %v413
        %1785 = vmatprep.subr.mxu0 0.0
        %1786 = vmatpush1.msra.mxu0 %v414
        %1787 = vmatprep.subr.mxu0 0.0
        %1788 = vmatpush1.msra.mxu0 %v415
        %1789 = vmatprep.subr.mxu0 0.0
        %1790 = vmatpush1.msra.mxu0 %v416
        %1791 = vmatprep.subr.mxu0 0.0
        %1792 = vmatpush1.msra.mxu0 %v417
        %1793 = vmatprep.subr.mxu0 0.0
        %1794 = vmatpush1.msra.mxu0 %v418
        %1795 = vmatprep.subr.mxu0 0.0
        %1796 = vmatpush1.msra.mxu0 0.0
        %1797 = vmatprep.subr.mxu0 0.0
        %1798 = vmatpush1.msra.mxu0 0.0
        %1799 = vmatprep.subr.mxu0 0.0
        %1800 = vmatpush1.msra.mxu0 0.0
        %1801 = vmatprep.subr.mxu0 0.0
        %1802 = vmatpush1.msra.mxu0 0.0
        %1803 = vmatprep.subr.mxu0 0.0
        %1804 = vmatpush1.msra.mxu0 0.0
        %1805 = vmatprep.subr.mxu0 0.0
        %1806 = vmatpush1.msra.mxu0 0.0
        %1807 = vmatprep.subr.mxu0 0.0
        %1808 = vmatpush1.msra.mxu0 0.0
        %1809 = vmatprep.subr.mxu0 0.0
        %1810 = vmatpush1.msra.mxu0 0.0
        %1811 = vmatprep.subr.mxu0 0.0
        %1812 = vmatpush1.msra.mxu0 0.0
        %1813 = vmatprep.subr.mxu0 0.0
        %1814 = vmatpush1.msra.mxu0 0.0
        %1815 = vmatprep.subr.mxu0 0.0
        %1816 = vmatpush1.msra.mxu0 0.0
        %1817 = vmatprep.subr.mxu0 0.0
        %1818 = vmatpush1.msra.mxu0 0.0
        %1819 = vmatprep.subr.mxu0 0.0
        %1820 = vmatpush1.msra.mxu0 0.0
        %1821 = vmatprep.subr.mxu0 0.0
        %1822 = vmatpush1.msra.mxu0 0.0
        %1823 = vmatprep.subr.mxu0 0.0
        %1824 = vmatpush1.msra.mxu0 0.0
        %1825 = vmatprep.subr.mxu0 0.0
        %1826 = vmatpush1.msra.mxu0 0.0
        %1827 = vmatprep.subr.mxu0 0.0
        %1828 = vmatpush1.msra.mxu0 0.0
        %1829 = vmatprep.subr.mxu0 0.0
        %1830 = vmatpush1.msra.mxu0 0.0
        %1831 = vmatprep.subr.mxu0 0.0
        %1832 = vmatpush1.msra.mxu0 0.0
        %1833 = vmatprep.subr.mxu0 0.0
        %1834 = vmatpush1.msra.mxu0 0.0
        %1835 = vmatprep.subr.mxu0 0.0
        %1836 = vmatpush1.msra.mxu0 0.0
        %1837 = vmatprep.subr.mxu0 0.0
        %1838 = vmatpush1.msra.mxu0 0.0
        %1839 = vmatprep.subr.mxu0 0.0
        %1840 = vmatpush1.msra.mxu0 0.0
        %1841 = vmatprep.subr.mxu0 0.0
        %1842 = vmatpush1.msra.mxu0 0.0
        %1843 = vmatprep.mubr.f32.mxu0 0.0
        %1844 = vmatmul.mubr.f32.gmra.mrb[0].mxu0 %v1777
        %v1845 = vpop.f32.mrb[0].mxu0
        %v1846 = vadd.f32 %v1773, %v1845
        %v1847 = vpop.f32.mrb[0].mxu0
        %1848 = vdwg.mxu0
        %v1850 = vsel %vm591, %v1846, 0
        %1852 = vmatprep.subr.mxu0 0.0
        %1853 = vmatpush1.msra.mxu0 %v429
        %1854 = vmatprep.subr.mxu0 0.0
        %1855 = vmatpush1.msra.mxu0 %v430
        %1856 = vmatprep.subr.mxu0 0.0
        %1857 = vmatpush1.msra.mxu0 %v431
        %1858 = vmatprep.subr.mxu0 0.0
        %1859 = vmatpush1.msra.mxu0 %v432
        %1860 = vmatprep.subr.mxu0 0.0
        %1861 = vmatpush1.msra.mxu0 0.0
        %1862 = vmatprep.subr.mxu0 0.0
        %1863 = vmatpush1.msra.mxu0 0.0
        %1864 = vmatprep.subr.mxu0 0.0
        %1865 = vmatpush1.msra.mxu0 0.0
        %1866 = vmatprep.subr.mxu0 0.0
        %1867 = vmatpush1.msra.mxu0 0.0
        %1868 = vmatprep.subr.mxu0 0.0
        %1869 = vmatpush1.msra.mxu0 0.0
        %1870 = vmatprep.subr.mxu0 0.0
        %1871 = vmatpush1.msra.mxu0 0.0
        %1872 = vmatprep.subr.mxu0 0.0
        %1873 = vmatpush1.msra.mxu0 0.0
        %1874 = vmatprep.subr.mxu0 0.0
        %1875 = vmatpush1.msra.mxu0 0.0
        %1876 = vmatprep.subr.mxu0 0.0
        %1877 = vmatpush1.msra.mxu0 0.0
        %1878 = vmatprep.subr.mxu0 0.0
        %1879 = vmatpush1.msra.mxu0 0.0
        %1880 = vmatprep.subr.mxu0 0.0
        %1881 = vmatpush1.msra.mxu0 0.0
        %1882 = vmatprep.subr.mxu0 0.0
        %1883 = vmatpush1.msra.mxu0 0.0
        %1884 = vmatprep.subr.mxu0 0.0
        %1885 = vmatpush1.msra.mxu0 0.0
        %1886 = vmatprep.subr.mxu0 0.0
        %1887 = vmatpush1.msra.mxu0 0.0
        %1888 = vmatprep.subr.mxu0 0.0
        %1889 = vmatpush1.msra.mxu0 0.0
        %1890 = vmatprep.subr.mxu0 0.0
        %1891 = vmatpush1.msra.mxu0 0.0
        %1892 = vmatprep.subr.mxu0 0.0
        %1893 = vmatpush1.msra.mxu0 0.0
        %1894 = vmatprep.subr.mxu0 0.0
        %1895 = vmatpush1.msra.mxu0 0.0
        %1896 = vmatprep.subr.mxu0 0.0
        %1897 = vmatpush1.msra.mxu0 0.0
        %1898 = vmatprep.subr.mxu0 0.0
        %1899 = vmatpush1.msra.mxu0 0.0
        %1900 = vmatprep.subr.mxu0 0.0
        %1901 = vmatpush1.msra.mxu0 0.0
        %1902 = vmatprep.subr.mxu0 0.0
        %1903 = vmatpush1.msra.mxu0 0.0
        %1904 = vmatprep.subr.mxu0 0.0
        %1905 = vmatpush1.msra.mxu0 0.0
        %1906 = vmatprep.subr.mxu0 0.0
        %1907 = vmatpush1.msra.mxu0 0.0
        %1908 = vmatprep.subr.mxu0 0.0
        %1909 = vmatpush1.msra.mxu0 0.0
        %1910 = vmatprep.subr.mxu0 0.0
        %1911 = vmatpush1.msra.mxu0 0.0
        %1912 = vmatprep.subr.mxu0 0.0
        %1913 = vmatpush1.msra.mxu0 0.0
        %1914 = vmatprep.subr.mxu0 0.0
        %1915 = vmatpush1.msra.mxu0 0.0
        %1916 = vmatprep.mubr.f32.mxu0 0.0
        %1917 = vmatmul.mubr.f32.gmra.mrb[0].mxu0 %v1850
        %v1918 = vpop.f32.mrb[0].mxu0
        %v1919 = vadd.f32 0.0, %v1918
        %v1920 = vpop.f32.mrb[0].mxu0
        %1921 = vdwg.mxu0
        %vm1922 = vcmask 130048
        %v1923 = vsel %vm1922, %v1919, -inf
        %1924 = vmax.xlane.f32.xlu0 %v1923
        %v1925 = vpop.xlane.xlu0 %1924
        %v1926 = vsub.f32 %v1919, %v1925
        %v1927 = vmul.f32 %v1926, 1.442695
        %v1928 = vpow.pop %v1927
        %v1929 = vsel %vm1922, %v1928, 0.0
        %1930 = vadd.xlane.f32.xlu0 %v1929
        %v1931 = vpop.xlane.xlu0 %1930
        %v1932 = vrcp.pop %v1931
        %v1933 = vmul.f32 %v1928, %v1932
        %v1935 = vsel %vm1922, %v1933, 0
        %1937 = vmatprep.subr.mxu0 0.0
        %1938 = vmatpush1.msra.mxu0 %v427
        %1939 = vmatprep.subr.mxu0 0.0
        %1940 = vmatpush1.msra.mxu0 %v428
        %1941 = vmatprep.subr.mxu0 0.0
        %1942 = vmatpush1.msra.mxu0 0.0
        %1943 = vmatprep.subr.mxu0 0.0
        %1944 = vmatpush1.msra.mxu0 0.0
        %1945 = vmatprep.subr.mxu0 0.0
        %1946 = vmatpush1.msra.mxu0 0.0
        %1947 = vmatprep.subr.mxu0 0.0
        %1948 = vmatpush1.msra.mxu0 0.0
        %1949 = vmatprep.subr.mxu0 0.0
        %1950 = vmatpush1.msra.mxu0 0.0
        %1951 = vmatprep.subr.mxu0 0.0
        %1952 = vmatpush1.msra.mxu0 0.0
        %1953 = vmatprep.subr.mxu0 0.0
        %1954 = vmatpush1.msra.mxu0 0.0
        %1955 = vmatprep.subr.mxu0 0.0
        %1956 = vmatpush1.msra.mxu0 0.0
        %1957 = vmatprep.subr.mxu0 0.0
        %1958 = vmatpush1.msra.mxu0 0.0
        %1959 = vmatprep.subr.mxu0 0.0
        %1960 = vmatpush1.msra.mxu0 0.0
        %1961 = vmatprep.subr.mxu0 0.0
        %1962 = vmatpush1.msra.mxu0 0.0
        %1963 = vmatprep.subr.mxu0 0.0
        %1964 = vmatpush1.msra.mxu0 0.0
        %1965 = vmatprep.subr.mxu0 0.0
        %1966 = vmatpush1.msra.mxu0 0.0
        %1967 = vmatprep.subr.mxu0 0.0
        %1968 = vmatpush1.msra.mxu0 0.0
        %1969 = vmatprep.subr.mxu0 0.0
        %1970 = vmatpush1.msra.mxu0 0.0
        %1971 = vmatprep.subr.mxu0 0.0
        %1972 = vmatpush1.msra.mxu0 0.0
        %1973 = vmatprep.subr.mxu0 0.0
        %1974 = vmatpush1.msra.mxu0 0.0
        %1975 = vmatprep.subr.mxu0 0.0
        %1976 = vmatpush1.msra.mxu0 0.0
        %1977 = vmatprep.subr.mxu0 0.0
        %1978 = vmatpush1.msra.mxu0 0.0
        %1979 = vmatprep.subr.mxu0 0.0
        %1980 = vmatpush1.msra.mxu0 0.0
        %1981 = vmatprep.subr.mxu0 0.0
        %1982 = vmatpush1.msra.mxu0 0.0
        %1983 = vmatprep.subr.mxu0 0.0
        %1984 = vmatpush1.msra.mxu0 0.0
        %1985 = vmatprep.subr.mxu0 0.0
        %1986 = vmatpush1.msra.mxu0 0.0
        %1987 = vmatprep.subr.mxu0 0.0
        %1988 = vmatpush1.msra.mxu0 0.0
        %1989 = vmatprep.subr.mxu0 0.0
        %1990 = vmatpush1.msra.mxu0 0.0
        %1991 = vmatprep.subr.mxu0 0.0
        %1992 = vmatpush1.msra.mxu0 0.0
        %1993 = vmatprep.subr.mxu0 0.0
        %1994 = vmatpush1.msra.mxu0 0.0
        %1995 = vmatprep.subr.mxu0 0.0
        %1996 = vmatpush1.msra.mxu0 0.0
        %1997 = vmatprep.subr.mxu0 0.0
        %1998 = vmatpush1.msra.mxu0 0.0
        %1999 = vmatprep.subr.mxu0 0.0
        %2000 = vmatpush1.msra.mxu0 0.0
        %2001 = vmatprep.mubr.f32.mxu0 0.0
        %2002 = vmatmul.mubr.f32.gmra.mrb[0].mxu0 %v1935
        %v2003 = vpop.f32.mrb[0].mxu0
        %v2004 = vadd.f32 0.0, %v2003
        %v2005 = vpop.f32.mrb[0].mxu0
        %2006 = vdwg.mxu0
        %v2007 = vsel %vm591, %v1846, 0.0
        %2008 = vadd.xlane.f32.xlu0 %v2007
        %v2009 = vpop.xlane.xlu0 %2008
        %v2010 = vrcp.pop 32.0
        %v2011 = vmul.f32 %v2009, %v2010
        %v2012 = vsub.f32 %v1846, %v2011
        %v2013 = vmul.f32 %v2012, %v2012
        %v2014 = vsel %vm591, %v2013, 0.0
        %2015 = vadd.xlane.f32.xlu0 %v2014
        %v2016 = vpop.xlane.xlu0 %2015
        %v2017 = vmul.f32 %v2016, %v2010
        %v2018 = vadd.f32 %v2017, 1e-05
        %v2019 = vrsqrt.pop %v2018
        %v2020 = vmul.f32 %v2012, %v2019
        %v2021 = vlaneseq
        %v2022 = vshrl.u32 %v2021, 7
        %v2023 = vsub.s32 4, %v2022
        %v2024 = vrot.slane %v435, %v2023
        %v2025 = vmul.f32 %v2020, %v2024
        %v2026 = vlaneseq
        %v2027 = vshrl.u32 %v2026, 7
        %v2028 = vsub.s32 5, %v2027
        %v2029 = vrot.slane %v435, %v2028
        %v2030 = vadd.f32 %v2025, %v2029
        %v2031 = vmax.f32 %v2030, 0.0
        %v2032 = vmax.f32 %v2004, 0.0
        %v2034 = vsel %vm591, %v2032, 0
        %2036 = vmatprep.subr.mxu0 0.0
        %2037 = vmatpush1.msra.mxu0 %v423
        %2038 = vmatprep.subr.mxu0 0.0
        %2039 = vmatpush1.msra.mxu0 %v424
        %2040 = vmatprep.subr.mxu0 0.0
        %2041 = vmatpush1.msra.mxu0 %v425
        %2042 = vmatprep.subr.mxu0 0.0
        %2043 = vmatpush1.msra.mxu0 %v426
        %2044 = vmatprep.subr.mxu0 0.0
        %2045 = vmatpush1.msra.mxu0 0.0
        %2046 = vmatprep.subr.mxu0 0.0
        %2047 = vmatpush1.msra.mxu0 0.0
        %2048 = vmatprep.subr.mxu0 0.0
        %2049 = vmatpush1.msra.mxu0 0.0
        %2050 = vmatprep.subr.mxu0 0.0
        %2051 = vmatpush1.msra.mxu0 0.0
        %2052 = vmatprep.subr.mxu0 0.0
        %2053 = vmatpush1.msra.mxu0 0.0
        %2054 = vmatprep.subr.mxu0 0.0
        %2055 = vmatpush1.msra.mxu0 0.0
        %2056 = vmatprep.subr.mxu0 0.0
        %2057 = vmatpush1.msra.mxu0 0.0
        %2058 = vmatprep.subr.mxu0 0.0
        %2059 = vmatpush1.msra.mxu0 0.0
        %2060 = vmatprep.subr.mxu0 0.0
        %2061 = vmatpush1.msra.mxu0 0.0
        %2062 = vmatprep.subr.mxu0 0.0
        %2063 = vmatpush1.msra.mxu0 0.0
        %2064 = vmatprep.subr.mxu0 0.0
        %2065 = vmatpush1.msra.mxu0 0.0
        %2066 = vmatprep.subr.mxu0 0.0
        %2067 = vmatpush1.msra.mxu0 0.0
        %2068 = vmatprep.subr.mxu0 0.0
        %2069 = vmatpush1.msra.mxu0 0.0
        %2070 = vmatprep.subr.mxu0 0.0
        %2071 = vmatpush1.msra.mxu0 0.0
        %2072 = vmatprep.subr.mxu0 0.0
        %2073 = vmatpush1.msra.mxu0 0.0
        %2074 = vmatprep.subr.mxu0 0.0
        %2075 = vmatpush1.msra.mxu0 0.0
        %2076 = vmatprep.subr.mxu0 0.0
        %2077 = vmatpush1.msra.mxu0 0.0
        %2078 = vmatprep.subr.mxu0 0.0
        %2079 = vmatpush1.msra.mxu0 0.0
        %2080 = vmatprep.subr.mxu0 0.0
        %2081 = vmatpush1.msra.mxu0 0.0
        %2082 = vmatprep.subr.mxu0 0.0
        %2083 = vmatpush1.msra.mxu0 0.0
        %2084 = vmatprep.subr.mxu0 0.0
        %2085 = vmatpush1.msra.mxu0 0.0
        %2086 = vmatprep.subr.mxu0 0.0
        %2087 = vmatpush1.msra.mxu0 0.0
        %2088 = vmatprep.subr.mxu0 0.0
        %2089 = vmatpush1.msra.mxu0 0.0
        %2090 = vmatprep.subr.mxu0 0.0
        %2091 = vmatpush1.msra.mxu0 0.0
        %2092 = vmatprep.subr.mxu0 0.0
        %2093 = vmatpush1.msra.mxu0 0.0
        %2094 = vmatprep.subr.mxu0 0.0
        %2095 = vmatpush1.msra.mxu0 0.0
        %2096 = vmatprep.subr.mxu0 0.0
        %2097 = vmatpush1.msra.mxu0 0.0
        %2098 = vmatprep.subr.mxu0 0.0
        %2099 = vmatpush1.msra.mxu0 0.0
        %2100 = vmatprep.mubr.f32.mxu0 0.0
        %2101 = vmatmul.mubr.f32.gmra.mrb[0].mxu0 %v2034
        %v2102 = vpop.f32.mrb[0].mxu0
        %v2103 = vadd.f32 0.0, %v2102
        %v2104 = vpop.f32.mrb[0].mxu0
        %2105 = vdwg.mxu0
        %v2107 = vsel %vm591, %v2031, 0
        %2109 = vmatprep.subr.mxu0 0.0
        %2110 = vmatpush1.msra.mxu0 %v419
        %2111 = vmatprep.subr.mxu0 0.0
        %2112 = vmatpush1.msra.mxu0 %v420
        %2113 = vmatprep.subr.mxu0 0.0
        %2114 = vmatpush1.msra.mxu0 %v421
        %2115 = vmatprep.subr.mxu0 0.0
        %2116 = vmatpush1.msra.mxu0 %v422
        %2117 = vmatprep.subr.mxu0 0.0
        %2118 = vmatpush1.msra.mxu0 0.0
        %2119 = vmatprep.subr.mxu0 0.0
        %2120 = vmatpush1.msra.mxu0 0.0
        %2121 = vmatprep.subr.mxu0 0.0
        %2122 = vmatpush1.msra.mxu0 0.0
        %2123 = vmatprep.subr.mxu0 0.0
        %2124 = vmatpush1.msra.mxu0 0.0
        %2125 = vmatprep.subr.mxu0 0.0
        %2126 = vmatpush1.msra.mxu0 0.0
        %2127 = vmatprep.subr.mxu0 0.0
        %2128 = vmatpush1.msra.mxu0 0.0
        %2129 = vmatprep.subr.mxu0 0.0
        %2130 = vmatpush1.msra.mxu0 0.0
        %2131 = vmatprep.subr.mxu0 0.0
        %2132 = vmatpush1.msra.mxu0 0.0
        %2133 = vmatprep.subr.mxu0 0.0
        %2134 = vmatpush1.msra.mxu0 0.0
        %2135 = vmatprep.subr.mxu0 0.0
        %2136 = vmatpush1.msra.mxu0 0.0
        %2137 = vmatprep.subr.mxu0 0.0
        %2138 = vmatpush1.msra.mxu0 0.0
        %2139 = vmatprep.subr.mxu0 0.0
        %2140 = vmatpush1.msra.mxu0 0.0
        %2141 = vmatprep.subr.mxu0 0.0
        %2142 = vmatpush1.msra.mxu0 0.0
        %2143 = vmatprep.subr.mxu0 0.0
        %2144 = vmatpush1.msra.mxu0 0.0
        %2145 = vmatprep.subr.mxu0 0.0
        %2146 = vmatpush1.msra.mxu0 0.0
        %2147 = vmatprep.subr.mxu0 0.0
        %2148 = vmatpush1.msra.mxu0 0.0
        %2149 = vmatprep.subr.mxu0 0.0
        %2150 = vmatpush1.msra.mxu0 0.0
        %2151 = vmatprep.subr.mxu0 0.0
        %2152 = vmatpush1.msra.mxu0 0.0
        %2153 = vmatprep.subr.mxu0 0.0
        %2154 = vmatpush1.msra.mxu0 0.0
        %2155 = vmatprep.subr.mxu0 0.0
        %2156 = vmatpush1.msra.mxu0 0.0
        %2157 = vmatprep.subr.mxu0 0.0
        %2158 = vmatpush1.msra.mxu0 0.0
        %2159 = vmatprep.subr.mxu0 0.0
        %2160 = vmatpush1.msra.mxu0 0.0
        %2161 = vmatprep.subr.mxu0 0.0
        %2162 = vmatpush1.msra.mxu0 0.0
        %2163 = vmatprep.subr.mxu0 0.0
        %2164 = vmatpush1.msra.mxu0 0.0
        %2165 = vmatprep.subr.mxu0 0.0
        %2166 = vmatpush1.msra.mxu0 0.0
        %2167 = vmatprep.subr.mxu0 0.0
        %2168 = vmatpush1.msra.mxu0 0.0
        %2169 = vmatprep.subr.mxu0 0.0
        %2170 = vmatpush1.msra.mxu0 0.0
        %2171 = vmatprep.subr.mxu0 0.0
        %2172 = vmatpush1.msra.mxu0 0.0
        %2173 = vmatprep.mubr.f32.mxu0 0.0
        %2174 = vmatmul.mubr.f32.gmra.mrb[0].mxu0 %v2107
        %v2175 = vpop.f32.mrb[0].mxu0
        %v2176 = vadd.f32 %v2103, %v2175
        %v2177 = vpop.f32.mrb[0].mxu0
        %2178 = vdwg.mxu0
        %v2179 = vlaneseq
        %v2180 = vshrl.u32 %v2179, 7
        %v2181 = vsub.s32 6, %v2180
        %v2182 = vrot.slane %v435, %v2181
        %v2183 = vadd.f32 %v2176, %v2182
        %v2184 = vxor.u32 %v2183, 2147483648
        %v2185 = vmul.f32 %v2184, 1.442695
        %v2186 = vpow.pop %v2185
        %v2187 = vadd.f32 %v2186, 1.0
        %v2188 = vrcp.pop %v2187
        %v2189 = vmul.f32 1.0, %v2188
        %v2191 = vsel %vm1922, %v2189, 0
        %2193 = vmatprep.subr.mxu0 0.0
        %2194 = vmatpush1.msra.mxu0 %v433
        %2195 = vmatprep.subr.mxu0 0.0
        %2196 = vmatpush1.msra.mxu0 %v434
        %2197 = vmatprep.subr.mxu0 0.0
        %2198 = vmatpush1.msra.mxu0 0.0
        %2199 = vmatprep.subr.mxu0 0.0
        %2200 = vmatpush1.msra.mxu0 0.0
        %2201 = vmatprep.subr.mxu0 0.0
        %2202 = vmatpush1.msra.mxu0 0.0
        %2203 = vmatprep.subr.mxu0 0.0
        %2204 = vmatpush1.msra.mxu0 0.0
        %2205 = vmatprep.subr.mxu0 0.0
        %2206 = vmatpush1.msra.mxu0 0.0
        %2207 = vmatprep.subr.mxu0 0.0
        %2208 = vmatpush1.msra.mxu0 0.0
        %2209 = vmatprep.subr.mxu0 0.0
        %2210 = vmatpush1.msra.mxu0 0.0
        %2211 = vmatprep.subr.mxu0 0.0
        %2212 = vmatpush1.msra.mxu0 0.0
        %2213 = vmatprep.subr.mxu0 0.0
        %2214 = vmatpush1.msra.mxu0 0.0
        %2215 = vmatprep.subr.mxu0 0.0
        %2216 = vmatpush1.msra.mxu0 0.0
        %2217 = vmatprep.subr.mxu0 0.0
        %2218 = vmatpush1.msra.mxu0 0.0
        %2219 = vmatprep.subr.mxu0 0.0
        %2220 = vmatpush1.msra.mxu0 0.0
        %2221 = vmatprep.subr.mxu0 0.0
        %2222 = vmatpush1.msra.mxu0 0.0
        %2223 = vmatprep.subr.mxu0 0.0
        %2224 = vmatpush1.msra.mxu0 0.0
        %2225 = vmatprep.subr.mxu0 0.0
        %2226 = vmatpush1.msra.mxu0 0.0
        %2227 = vmatprep.subr.mxu0 0.0
        %2228 = vmatpush1.msra.mxu0 0.0
        %2229 = vmatprep.subr.mxu0 0.0
        %2230 = vmatpush1.msra.mxu0 0.0
        %2231 = vmatprep.subr.mxu0 0.0
        %2232 = vmatpush1.msra.mxu0 0.0
        %2233 = vmatprep.subr.mxu0 0.0
        %2234 = vmatpush1.msra.mxu0 0.0
        %2235 = vmatprep.subr.mxu0 0.0
        %2236 = vmatpush1.msra.mxu0 0.0
        %2237 = vmatprep.subr.mxu0 0.0
        %2238 = vmatpush1.msra.mxu0 0.0
        %2239 = vmatprep.subr.mxu0 0.0
        %2240 = vmatpush1.msra.mxu0 0.0
        %2241 = vmatprep.subr.mxu0 0.0
        %2242 = vmatpush1.msra.mxu0 0.0
        %2243 = vmatprep.subr.mxu0 0.0
        %2244 = vmatpush1.msra.mxu0 0.0
        %2245 = vmatprep.subr.mxu0 0.0
        %2246 = vmatpush1.msra.mxu0 0.0
        %2247 = vmatprep.subr.mxu0 0.0
        %2248 = vmatpush1.msra.mxu0 0.0
        %2249 = vmatprep.subr.mxu0 0.0
        %2250 = vmatpush1.msra.mxu0 0.0
        %2251 = vmatprep.subr.mxu0 0.0
        %2252 = vmatpush1.msra.mxu0 0.0
        %2253 = vmatprep.subr.mxu0 0.0
        %2254 = vmatpush1.msra.mxu0 0.0
        %2255 = vmatprep.subr.mxu0 0.0
        %2256 = vmatpush1.msra.mxu0 0.0
        %2257 = vmatprep.mubr.f32.mxu0 0.0
        %2258 = vmatmul.mubr.f32.gmra.mrb[0].mxu0 %v2191
        %v2259 = vpop.f32.mrb[0].mxu0
        %v2260 = vadd.f32 0.0, %v2259
        %v2261 = vpop.f32.mrb[0].mxu0
        %2262 = vdwg.mxu0
        %v2263 = vmul.f32 %v2260, %v2189
        %v2264 = vsel %vm1922, %v2263, 0.0
        %2265 = vadd.xlane.f32.xlu0 %v2264
        %v2266 = vpop.xlane.xlu0 %2265
        %v2267 = vmul.f32 %v2266, 0.0005
        %v2268 = vsel %vm1922, %v2183, 0.0
        %v2269 = vlaneseq
        %v2270 = vand.u32 %v2269, 127
        %vm2271 = vcmp.eq.s32.totalorder %v2270, 16
        %v2272 = vsel %vm2271, %v2267, 0.0
        %v2273 = vadd.f32 %v2268, %v2272
        %2274 = vst [vmem:[%s352] sm:$0xff] %v2273
        %s2275 = sand.u32 %s152, 1
        %s2276 = scalar_lea.sflag [#allocation5], %s2275
        %s2277 = sand.u32 %s152, 1
        %s2278 = smul.addr %s2277, 8
        %s2279 = scalar_lea.vmem [#allocation4], %s2278
        // Predicated region
        $region117: #{_forward_device.1} parent=107 // pred_check
          %p2280 = pneg %p162
        $region118: #{_forward_device.1} parent=107 // pred_check_branch
          %2282 = sbr.rel (%p2280) target = $region120
        $region119: #{_forward_device.1} parent=107 // pred_region
          %s2284 = ssub.s32 128, 128
          %2285 = vsyncadd %s2276, %s2284
          %s2286 = smul.addr %s19, 128
          %s2287 = scalar_lea.hbm %s5, %s2286
          %s2289 = sshll.u32 %s2279, 4
          %s2290 = int_to_ptr.vmem [resolvable:$true] %s2289
          %2292 = dma.vmem_to_hbm [thread:$0]  %s2290, 128, %s2287, %s2276
        $region120: #{_forward_device.1} parent=107 // pred_fallthru
          _
      $region108: #{_forward_device.1} parent=5 // pred_fallthru
        _
      %p2293 = scmp.le.s32.totalorder 2, %s14
      // Predicated region
      $region121: #{_forward_device.1} parent=5 // pred_check
        %p2294 = pneg %p2293
      $region122: #{_forward_device.1} parent=5 // pred_check_branch
        %2296 = sbr.rel (%p2294) target = $region124
      $region123: #{_forward_device.1} parent=5 // pred_region
        %s2297 = ssub.s32 %s14, 2
        // Predicated region
        $region125: #{_forward_device.1} parent=123 // pred_check
          %p2298 = pneg %p168
        $region126: #{_forward_device.1} parent=123 // pred_check_branch
          %2300 = sbr.rel (%p2298) target = $region128
        $region127: #{_forward_device.1} parent=123 // pred_region
          %s2301 = sand.u32 %s153, 1
          %s2302 = scalar_lea.sflag [#allocation5], %s2301
          %s2303 = sand.u32 %s153, 1
          %s2304 = smul.addr %s2303, 8
          %s2305 = scalar_lea.vmem [#allocation4], %s2304
          %2306 = dma.done %s2302, 128
        $region128: #{_forward_device.1} parent=123 // pred_fallthru
          _
      $region124: #{_forward_device.1} parent=5 // pred_fallthru
        _
    $region6: #{_forward_device.1} parent=1 // loop_footer
      %s18 = sadd.s32 1, %s14
    $region7: #{_forward_device.1} parent=1 // loop_footer_branch
      %13 = sbr.rel target = $region3
    $region8: #{_forward_device.1} parent=1 // loop_exit
      _
    %2307 = vsyncpa [#allocation5], 1
    %s2308 = scalar_lea.sflag [#allocation5], 1
    %2309 = vsyncpa %s2308, 1

</llo_original>
